<compile_context>
chip_gen: v7x
topology: tpu7x:2x2x1
jax: 0.10.0
libtpu: 0.0.40
codegen_flags: <defaults>
</compile_context>

<pallas_src>
import functools
import math

import jax
import jax.numpy as jnp
import numpy as np
from jax.experimental import pallas as pl
from jax.experimental.pallas import tpu as pltpu


def _calc_same_pad(i, k, s, d):
    return max((math.ceil(i / s) - 1) * s + (k - 1) * d + 1 - i, 0)


def _block_choi_kernel(x_ref, w_ref, scale_ref, shift_ref, out_ref, *,
                       KH, KW, Cin, p, Ho, Wo, Cpad, avgpool):
    """One batch element.

    x_ref:    (p*p, Hq, Wq, Cin)  bf16  space-to-depth padded input
              x_ref[a*p+b, i, j, c] == x_pad[i*p + a, j*p + b, c]
    w_ref:    (KH*KW, Cin, Cpad)  bf16  conv weight, Cout padded to 128 lanes
    scale/shift_ref: (1, Cpad)    f32   folded eval-mode BN affine (+ conv bias)
    out_ref:  (Ho*Wo, Cpad)       f32   pooled/normalized/activated output
    """
    R0 = Ho * Wo
    pool_area = p * p

    def conv_phase(di, dj):
        # Conv2dSame(stride=1) output at positions (oh*p+di, ow*p+dj), oh<Ho, ow<Wo,
        # accumulated as KH*KW small bf16 MXU matmuls with f32 accumulation.
        acc = jnp.zeros((R0, Cpad), jnp.float32)
        for kh in range(KH):
            for kw in range(KW):
                a, sh = (di + kh) % p, (di + kh) // p
                b, sw = (dj + kw) % p, (dj + kw) // p
                xs = x_ref[a * p + b, sh:sh + Ho, sw:sw + Wo, :]   # (Ho, Wo, Cin) bf16
                # f32 round-trip keeps the (Ho,Wo)->(Ho*Wo) merge on an (8,128)-tiled
                # layout (layout-preserving when Wo % 8 == 0); dot operands stay bf16.
                xs = xs.astype(jnp.float32).reshape(R0, Cin).astype(jnp.bfloat16)
                acc = acc + jnp.dot(xs, w_ref[kh * KW + kw],
                                    preferred_element_type=jnp.float32)
        return acc

    # Pooling == elementwise combine of the p*p conv phases (avg: sum, max: maximum).
    pooled = conv_phase(0, 0)
    for di in range(p):
        for dj in range(p):
            if di == 0 and dj == 0:
                continue
            y = conv_phase(di, dj)
            pooled = (pooled + y) if avgpool else jnp.maximum(pooled, y)
    if avgpool:
        pooled = pooled * (1.0 / pool_area)

    # Eval-mode BatchNorm folded into per-channel affine (conv bias already folded
    # into shift) + ELU(alpha=1).  exp(z)-1 is within test tolerance; expm1 would be
    # marginally more accurate near 0-.
    z = pooled * scale_ref[...] + shift_ref[...]
    out_ref[...] = jnp.where(z > 0, z, jnp.exp(z) - 1.0).astype(out_ref.dtype)
    # TODO(synk): Dropout(p=0.1) is eval-mode identity here (no training-mode RNG mask).


def block_choi_forward(x, weight, bias, gamma, beta, running_mean, running_var,
                       *, pool_size, avgpool_flag, eps=1e-5):
    """x: NCHW float32 (PyTorch convention). Returns NCHW float32 (eval mode)."""
    N, Cin, H, W = x.shape
    Cout, _, KH, KW = weight.shape
    p = pool_size
    Ho, Wo = H // p, W // p
    R0 = Ho * Wo
    Cpad = ((Cout + 127) // 128) * 128       # lane-dense output channel dim

    # SAME padding (stride=1, dilation=1), split like F.pad in Conv2dSame; also pad
    # the spatial extents up to multiples of p so the phase decomposition is exact.
    ph = _calc_same_pad(H, KH, 1, 1)
    pw = _calc_same_pad(W, KW, 1, 1)
    Hp, Wp = H + ph, W + pw
    Hq, Wq = (Hp + p - 1) // p, (Wp + p - 1) // p

    x_nhwc = jnp.transpose(x, (0, 2, 3, 1))
    x_pad = jnp.pad(
        x_nhwc,
        ((0, 0),
         (ph // 2, ph - ph // 2 + (Hq * p - Hp)),
         (pw // 2, pw - pw // 2 + (Wq * p - Wp)),
         (0, 0)))

    # Space-to-depth "pool phase" layout (pure transpose, NO data expansion):
    #   x_ph[n, a*p+b, i, j, c] = x_pad[n, i*p + a, j*p + b, c]
    x_ph = x_pad.reshape(N, Hq, p, Wq, p, Cin).transpose(0, 2, 4, 1, 3, 5)
    x_ph = x_ph.reshape(N, p * p, Hq, Wq, Cin).astype(jnp.bfloat16)

    # Weights as (KH*KW, Cin, Cpad) bf16, Cout padded to a full 128-lane width.
    w = jnp.transpose(weight, (2, 3, 1, 0)).reshape(KH * KW, Cin, Cout)
    w = jnp.pad(w, ((0, 0), (0, 0), (0, Cpad - Cout))).astype(jnp.bfloat16)

    # Eval-mode BN folded to per-channel affine; conv bias folded into the shift
    # (bias is per-channel constant, so it commutes with avg AND max pooling).
    scale = gamma / jnp.sqrt(running_var + eps)
    shift = beta - running_mean * scale + bias * scale
    scale = jnp.pad(scale, (0, Cpad - Cout)).reshape(1, Cpad).astype(jnp.float32)
    shift = jnp.pad(shift, (0, Cpad - Cout)).reshape(1, Cpad).astype(jnp.float32)

    kernel = functools.partial(
        _block_choi_kernel, KH=KH, KW=KW, Cin=Cin, p=p, Ho=Ho, Wo=Wo,
        Cpad=Cpad, avgpool=avgpool_flag)

    # TODO(synk): for large H*W add a second grid axis tiling Ho into >=512-row output
    # tiles (overlapping x_ph windows) instead of one whole image per grid step.
    out = pl.pallas_call(
        kernel,
        out_shape=jax.ShapeDtypeStruct((N, R0, Cpad), jnp.float32),
        grid=(N,),
        in_specs=[
            pl.BlockSpec((pl.Squeezed(), p * p, Hq, Wq, Cin),
                         lambda n: (n, 0, 0, 0, 0)),
            pl.BlockSpec((KH * KW, Cin, Cpad), lambda n: (0, 0, 0)),
            pl.BlockSpec((1, Cpad), lambda n: (0, 0)),
            pl.BlockSpec((1, Cpad), lambda n: (0, 0)),
        ],
        out_specs=pl.BlockSpec((pl.Squeezed(), R0, Cpad), lambda n: (n, 0, 0)),
        compiler_params=pltpu.CompilerParams(
            dimension_semantics=("parallel",),
            vmem_limit_bytes=32 * 1024 * 1024),
    )(x_ph, w, scale, shift)

    out_nhwc = out[:, :, :Cout].reshape(N, Ho, Wo, Cout)   # drop lane padding
    return jnp.transpose(out_nhwc, (0, 3, 1, 2))            # back to NCHW


def _reference(x, weight, bias, gamma, beta, mean, var,
               *, pool_size, avgpool_flag, eps=1e-5):
    """Pure-JAX f32 reference mirroring the PyTorch forward (eval mode)."""
    N, Cin, H, W = x.shape
    KH, KW = weight.shape[2:]
    ph = _calc_same_pad(H, KH, 1, 1)
    pw = _calc_same_pad(W, KW, 1, 1)
    xp = jnp.pad(x, ((0, 0), (0, 0),
                     (ph // 2, ph - ph // 2), (pw // 2, pw - pw // 2)))
    y = jax.lax.conv_general_dilated(
        xp, weight, window_strides=(1, 1), padding='VALID',
        dimension_numbers=('NCHW', 'OIHW', 'NCHW'))
    y = y + bias.reshape(1, -1, 1, 1)
    p = pool_size
    Ho, Wo = H // p, W // p
    y = y[:, :, :Ho * p, :Wo * p].reshape(N, -1, Ho, p, Wo, p)
    y = y.mean(axis=(3, 5)) if avgpool_flag else y.max(axis=(3, 5))
    scale = gamma / jnp.sqrt(var + eps)
    shift = beta - mean * scale
    z = y * scale.reshape(1, -1, 1, 1) + shift.reshape(1, -1, 1, 1)
    return jnp.where(z > 0, z, jnp.exp(z) - 1.0)


if __name__ == "__main__":
    key = jax.random.PRNGKey(0)
    N, Cin, H, W = 2, 4, 16, 16
    Cout, K, p = 8, 3, 2

    ks = jax.random.split(key, 7)
    x = jax.random.normal(ks[0], (N, Cin, H, W), jnp.float32)

    # Deterministic parameter init (shapes per BlockChoi.__init__).
    fan_in = Cin * K * K
    bound = 1.0 / math.sqrt(fan_in)
    weight = jax.random.uniform(ks[1], (Cout, Cin, K, K), jnp.float32, -bound, bound)
    bias = jax.random.uniform(ks[2], (Cout,), jnp.float32, -bound, bound)
    gamma = 1.0 + 0.1 * jax.random.normal(ks[3], (Cout,), jnp.float32)
    beta = 0.1 * jax.random.normal(ks[4], (Cout,), jnp.float32)
    running_mean = 0.1 * jax.random.normal(ks[5], (Cout,), jnp.float32)
    running_var = 1.0 + 0.1 * jax.random.uniform(ks[6], (Cout,), jnp.float32)

    for avg in (True, False):   # avgpool_flag: True -> AvgPool2d, False -> MaxPool2d
        out = block_choi_forward(x, weight, bias, gamma, beta,
                                 running_mean, running_var,
                                 pool_size=p, avgpool_flag=avg)
        out = jax.block_until_ready(out)
        ref = _reference(x, weight, bias, gamma, beta,
                         running_mean, running_var,
                         pool_size=p, avgpool_flag=avg)
        np.testing.assert_allclose(np.asarray(out), np.asarray(ref),
                                   atol=2e-2, rtol=2e-2)

    print("KERNEL_OK")
</pallas_src>

<mosaic_0001>
module attributes {stable_mosaic.version = 11 : i64} {
  func.func @_block_choi_kernel(%arg0: i32, %arg1: memref<1x4x9x9x4xbf16, #tpu.memory_space<vmem>>, %arg2: memref<9x4x128xbf16, #tpu.memory_space<vmem>>, %arg3: memref<1x128xf32, #tpu.memory_space<vmem>>, %arg4: memref<1x128xf32, #tpu.memory_space<vmem>>, %arg5: memref<1x64x128xf32, #tpu.memory_space<vmem>>) attributes {dimension_semantics = [#tpu.dimension_semantics<parallel>], iteration_bounds = array<i64: 2>, scalar_prefetch = 0 : i64, scratch_operands = 0 : i64, tpu.core_type = #tpu.core_type<tc>, window_params = [{transform_indices = @transform_0, window_bounds = array<i64: 1, 4, 9, 9, 4>}, {pipeline_mode = #tpu.pipeline_mode<synchronous>, transform_indices = @transform_1, window_bounds = array<i64: 9, 4, 128>}, {pipeline_mode = #tpu.pipeline_mode<synchronous>, transform_indices = @transform_2, window_bounds = array<i64: 1, 128>}, {pipeline_mode = #tpu.pipeline_mode<synchronous>, transform_indices = @transform_3, window_bounds = array<i64: 1, 128>}, {transform_indices = @transform_4, window_bounds = array<i64: 1, 64, 128>}]} {
    %cst = arith.constant 0.000000e+00 : f32
    %0 = vector.broadcast %cst : f32 to vector<64x128xf32>
    %c0 = arith.constant 0 : index
    %c0_0 = arith.constant 0 : index
    %c0_1 = arith.constant 0 : index
    %c0_2 = arith.constant 0 : index
    %c0_3 = arith.constant 0 : index
    %1 = vector.load %arg1[%c0, %c0_0, %c0_1, %c0_2, %c0_3] : memref<1x4x9x9x4xbf16, #tpu.memory_space<vmem>>, vector<1x1x8x8x4xbf16>
    %2 = vector.shape_cast %1 : vector<1x1x8x8x4xbf16> to vector<8x8x4xbf16>
    %3 = arith.extf %2 : vector<8x8x4xbf16> to vector<8x8x4xf32>
    %4 = vector.shape_cast %3 : vector<8x8x4xf32> to vector<64x4xf32>
    %5 = arith.truncf %4 : vector<64x4xf32> to vector<64x4xbf16>
    %c0_4 = arith.constant 0 : index
    %c0_5 = arith.constant 0 : index
    %c0_6 = arith.constant 0 : index
    %6 = vector.load %arg2[%c0_4, %c0_5, %c0_6] : memref<9x4x128xbf16, #tpu.memory_space<vmem>>, vector<1x4x128xbf16>
    %7 = vector.shape_cast %6 : vector<1x4x128xbf16> to vector<4x128xbf16>
    %cst_7 = arith.constant dense<0.000000e+00> : vector<64x128xf32>
    %8 = tpu.matmul %5, %7, %cst_7 {dimension_numbers = #tpu.dot_dimension_numbers<[1], [0], [0], [1], [0, 0, 1, 1], [], []>} : vector<64x4xbf16>, vector<4x128xbf16>, vector<64x128xf32> -> vector<64x128xf32>
    %9 = arith.addf %0, %8 : vector<64x128xf32>
    %c0_8 = arith.constant 0 : index
    %c1 = arith.constant 1 : index
    %c0_9 = arith.constant 0 : index
    %c0_10 = arith.constant 0 : index
    %c0_11 = arith.constant 0 : index
    %10 = vector.load %arg1[%c0_8, %c1, %c0_9, %c0_10, %c0_11] : memref<1x4x9x9x4xbf16, #tpu.memory_space<vmem>>, vector<1x1x8x8x4xbf16>
    %11 = vector.shape_cast %10 : vector<1x1x8x8x4xbf16> to vector<8x8x4xbf16>
    %12 = arith.extf %11 : vector<8x8x4xbf16> to vector<8x8x4xf32>
    %13 = vector.shape_cast %12 : vector<8x8x4xf32> to vector<64x4xf32>
    %14 = arith.truncf %13 : vector<64x4xf32> to vector<64x4xbf16>
    %c1_12 = arith.constant 1 : index
    %c0_13 = arith.constant 0 : index
    %c0_14 = arith.constant 0 : index
    %15 = vector.load %arg2[%c1_12, %c0_13, %c0_14] : memref<9x4x128xbf16, #tpu.memory_space<vmem>>, vector<1x4x128xbf16>
    %16 = vector.shape_cast %15 : vector<1x4x128xbf16> to vector<4x128xbf16>
    %cst_15 = arith.constant dense<0.000000e+00> : vector<64x128xf32>
    %17 = tpu.matmul %14, %16, %cst_15 {dimension_numbers = #tpu.dot_dimension_numbers<[1], [0], [0], [1], [0, 0, 1, 1], [], []>} : vector<64x4xbf16>, vector<4x128xbf16>, vector<64x128xf32> -> vector<64x128xf32>
    %18 = arith.addf %9, %17 : vector<64x128xf32>
    %c0_16 = arith.constant 0 : index
    %c0_17 = arith.constant 0 : index
    %c0_18 = arith.constant 0 : index
    %c1_19 = arith.constant 1 : index
    %c0_20 = arith.constant 0 : index
    %19 = vector.load %arg1[%c0_16, %c0_17, %c0_18, %c1_19, %c0_20] : memref<1x4x9x9x4xbf16, #tpu.memory_space<vmem>>, vector<1x1x8x8x4xbf16>
    %20 = vector.shape_cast %19 : vector<1x1x8x8x4xbf16> to vector<8x8x4xbf16>
    %21 = arith.extf %20 : vector<8x8x4xbf16> to vector<8x8x4xf32>
    %22 = vector.shape_cast %21 : vector<8x8x4xf32> to vector<64x4xf32>
    %23 = arith.truncf %22 : vector<64x4xf32> to vector<64x4xbf16>
    %c2 = arith.constant 2 : index
    %c0_21 = arith.constant 0 : index
    %c0_22 = arith.constant 0 : index
    %24 = vector.load %arg2[%c2, %c0_21, %c0_22] : memref<9x4x128xbf16, #tpu.memory_space<vmem>>, vector<1x4x128xbf16>
    %25 = vector.shape_cast %24 : vector<1x4x128xbf16> to vector<4x128xbf16>
    %cst_23 = arith.constant dense<0.000000e+00> : vector<64x128xf32>
    %26 = tpu.matmul %23, %25, %cst_23 {dimension_numbers = #tpu.dot_dimension_numbers<[1], [0], [0], [1], [0, 0, 1, 1], [], []>} : vector<64x4xbf16>, vector<4x128xbf16>, vector<64x128xf32> -> vector<64x128xf32>
    %27 = arith.addf %18, %26 : vector<64x128xf32>
    %c0_24 = arith.constant 0 : index
    %c2_25 = arith.constant 2 : index
    %c0_26 = arith.constant 0 : index
    %c0_27 = arith.constant 0 : index
    %c0_28 = arith.constant 0 : index
    %28 = vector.load %arg1[%c0_24, %c2_25, %c0_26, %c0_27, %c0_28] : memref<1x4x9x9x4xbf16, #tpu.memory_space<vmem>>, vector<1x1x8x8x4xbf16>
    %29 = vector.shape_cast %28 : vector<1x1x8x8x4xbf16> to vector<8x8x4xbf16>
    %30 = arith.extf %29 : vector<8x8x4xbf16> to vector<8x8x4xf32>
    %31 = vector.shape_cast %30 : vector<8x8x4xf32> to vector<64x4xf32>
    %32 = arith.truncf %31 : vector<64x4xf32> to vector<64x4xbf16>
    %c3 = arith.constant 3 : index
    %c0_29 = arith.constant 0 : index
    %c0_30 = arith.constant 0 : index
    %33 = vector.load %arg2[%c3, %c0_29, %c0_30] : memref<9x4x128xbf16, #tpu.memory_space<vmem>>, vector<1x4x128xbf16>
    %34 = vector.shape_cast %33 : vector<1x4x128xbf16> to vector<4x128xbf16>
    %cst_31 = arith.constant dense<0.000000e+00> : vector<64x128xf32>
    %35 = tpu.matmul %32, %34, %cst_31 {dimension_numbers = #tpu.dot_dimension_numbers<[1], [0], [0], [1], [0, 0, 1, 1], [], []>} : vector<64x4xbf16>, vector<4x128xbf16>, vector<64x128xf32> -> vector<64x128xf32>
    %36 = arith.addf %27, %35 : vector<64x128xf32>
    %c0_32 = arith.constant 0 : index
    %c3_33 = arith.constant 3 : index
    %c0_34 = arith.constant 0 : index
    %c0_35 = arith.constant 0 : index
    %c0_36 = arith.constant 0 : index
    %37 = vector.load %arg1[%c0_32, %c3_33, %c0_34, %c0_35, %c0_36] : memref<1x4x9x9x4xbf16, #tpu.memory_space<vmem>>, vector<1x1x8x8x4xbf16>
    %38 = vector.shape_cast %37 : vector<1x1x8x8x4xbf16> to vector<8x8x4xbf16>
    %39 = arith.extf %38 : vector<8x8x4xbf16> to vector<8x8x4xf32>
    %40 = vector.shape_cast %39 : vector<8x8x4xf32> to vector<64x4xf32>
    %41 = arith.truncf %40 : vector<64x4xf32> to vector<64x4xbf16>
    %c4 = arith.constant 4 : index
    %c0_37 = arith.constant 0 : index
    %c0_38 = arith.constant 0 : index
    %42 = vector.load %arg2[%c4, %c0_37, %c0_38] : memref<9x4x128xbf16, #tpu.memory_space<vmem>>, vector<1x4x128xbf16>
    %43 = vector.shape_cast %42 : vector<1x4x128xbf16> to vector<4x128xbf16>
    %cst_39 = arith.constant dense<0.000000e+00> : vector<64x128xf32>
    %44 = tpu.matmul %41, %43, %cst_39 {dimension_numbers = #tpu.dot_dimension_numbers<[1], [0], [0], [1], [0, 0, 1, 1], [], []>} : vector<64x4xbf16>, vector<4x128xbf16>, vector<64x128xf32> -> vector<64x128xf32>
    %45 = arith.addf %36, %44 : vector<64x128xf32>
    %c0_40 = arith.constant 0 : index
    %c2_41 = arith.constant 2 : index
    %c0_42 = arith.constant 0 : index
    %c1_43 = arith.constant 1 : index
    %c0_44 = arith.constant 0 : index
    %46 = vector.load %arg1[%c0_40, %c2_41, %c0_42, %c1_43, %c0_44] : memref<1x4x9x9x4xbf16, #tpu.memory_space<vmem>>, vector<1x1x8x8x4xbf16>
    %47 = vector.shape_cast %46 : vector<1x1x8x8x4xbf16> to vector<8x8x4xbf16>
    %48 = arith.extf %47 : vector<8x8x4xbf16> to vector<8x8x4xf32>
    %49 = vector.shape_cast %48 : vector<8x8x4xf32> to vector<64x4xf32>
    %50 = arith.truncf %49 : vector<64x4xf32> to vector<64x4xbf16>
    %c5 = arith.constant 5 : index
    %c0_45 = arith.constant 0 : index
    %c0_46 = arith.constant 0 : index
    %51 = vector.load %arg2[%c5, %c0_45, %c0_46] : memref<9x4x128xbf16, #tpu.memory_space<vmem>>, vector<1x4x128xbf16>
    %52 = vector.shape_cast %51 : vector<1x4x128xbf16> to vector<4x128xbf16>
    %cst_47 = arith.constant dense<0.000000e+00> : vector<64x128xf32>
    %53 = tpu.matmul %50, %52, %cst_47 {dimension_numbers = #tpu.dot_dimension_numbers<[1], [0], [0], [1], [0, 0, 1, 1], [], []>} : vector<64x4xbf16>, vector<4x128xbf16>, vector<64x128xf32> -> vector<64x128xf32>
    %54 = arith.addf %45, %53 : vector<64x128xf32>
    %c0_48 = arith.constant 0 : index
    %c0_49 = arith.constant 0 : index
    %c1_50 = arith.constant 1 : index
    %c0_51 = arith.constant 0 : index
    %c0_52 = arith.constant 0 : index
    %55 = vector.load %arg1[%c0_48, %c0_49, %c1_50, %c0_51, %c0_52] : memref<1x4x9x9x4xbf16, #tpu.memory_space<vmem>>, vector<1x1x8x8x4xbf16>
    %56 = vector.shape_cast %55 : vector<1x1x8x8x4xbf16> to vector<8x8x4xbf16>
    %57 = arith.extf %56 : vector<8x8x4xbf16> to vector<8x8x4xf32>
    %58 = vector.shape_cast %57 : vector<8x8x4xf32> to vector<64x4xf32>
    %59 = arith.truncf %58 : vector<64x4xf32> to vector<64x4xbf16>
    %c6 = arith.constant 6 : index
    %c0_53 = arith.constant 0 : index
    %c0_54 = arith.constant 0 : index
    %60 = vector.load %arg2[%c6, %c0_53, %c0_54] : memref<9x4x128xbf16, #tpu.memory_space<vmem>>, vector<1x4x128xbf16>
    %61 = vector.shape_cast %60 : vector<1x4x128xbf16> to vector<4x128xbf16>
    %cst_55 = arith.constant dense<0.000000e+00> : vector<64x128xf32>
    %62 = tpu.matmul %59, %61, %cst_55 {dimension_numbers = #tpu.dot_dimension_numbers<[1], [0], [0], [1], [0, 0, 1, 1], [], []>} : vector<64x4xbf16>, vector<4x128xbf16>, vector<64x128xf32> -> vector<64x128xf32>
    %63 = arith.addf %54, %62 : vector<64x128xf32>
    %c0_56 = arith.constant 0 : index
    %c1_57 = arith.constant 1 : index
    %c1_58 = arith.constant 1 : index
    %c0_59 = arith.constant 0 : index
    %c0_60 = arith.constant 0 : index
    %64 = vector.load %arg1[%c0_56, %c1_57, %c1_58, %c0_59, %c0_60] : memref<1x4x9x9x4xbf16, #tpu.memory_space<vmem>>, vector<1x1x8x8x4xbf16>
    %65 = vector.shape_cast %64 : vector<1x1x8x8x4xbf16> to vector<8x8x4xbf16>
    %66 = arith.extf %65 : vector<8x8x4xbf16> to vector<8x8x4xf32>
    %67 = vector.shape_cast %66 : vector<8x8x4xf32> to vector<64x4xf32>
    %68 = arith.truncf %67 : vector<64x4xf32> to vector<64x4xbf16>
    %c7 = arith.constant 7 : index
    %c0_61 = arith.constant 0 : index
    %c0_62 = arith.constant 0 : index
    %69 = vector.load %arg2[%c7, %c0_61, %c0_62] : memref<9x4x128xbf16, #tpu.memory_space<vmem>>, vector<1x4x128xbf16>
    %70 = vector.shape_cast %69 : vector<1x4x128xbf16> to vector<4x128xbf16>
    %cst_63 = arith.constant dense<0.000000e+00> : vector<64x128xf32>
    %71 = tpu.matmul %68, %70, %cst_63 {dimension_numbers = #tpu.dot_dimension_numbers<[1], [0], [0], [1], [0, 0, 1, 1], [], []>} : vector<64x4xbf16>, vector<4x128xbf16>, vector<64x128xf32> -> vector<64x128xf32>
    %72 = arith.addf %63, %71 : vector<64x128xf32>
    %c0_64 = arith.constant 0 : index
    %c0_65 = arith.constant 0 : index
    %c1_66 = arith.constant 1 : index
    %c1_67 = arith.constant 1 : index
    %c0_68 = arith.constant 0 : index
    %73 = vector.load %arg1[%c0_64, %c0_65, %c1_66, %c1_67, %c0_68] : memref<1x4x9x9x4xbf16, #tpu.memory_space<vmem>>, vector<1x1x8x8x4xbf16>
    %74 = vector.shape_cast %73 : vector<1x1x8x8x4xbf16> to vector<8x8x4xbf16>
    %75 = arith.extf %74 : vector<8x8x4xbf16> to vector<8x8x4xf32>
    %76 = vector.shape_cast %75 : vector<8x8x4xf32> to vector<64x4xf32>
    %77 = arith.truncf %76 : vector<64x4xf32> to vector<64x4xbf16>
    %c8 = arith.constant 8 : index
    %c0_69 = arith.constant 0 : index
    %c0_70 = arith.constant 0 : index
    %78 = vector.load %arg2[%c8, %c0_69, %c0_70] : memref<9x4x128xbf16, #tpu.memory_space<vmem>>, vector<1x4x128xbf16>
    %79 = vector.shape_cast %78 : vector<1x4x128xbf16> to vector<4x128xbf16>
    %cst_71 = arith.constant dense<0.000000e+00> : vector<64x128xf32>
    %80 = tpu.matmul %77, %79, %cst_71 {dimension_numbers = #tpu.dot_dimension_numbers<[1], [0], [0], [1], [0, 0, 1, 1], [], []>} : vector<64x4xbf16>, vector<4x128xbf16>, vector<64x128xf32> -> vector<64x128xf32>
    %81 = arith.addf %72, %80 : vector<64x128xf32>
    %cst_72 = arith.constant 0.000000e+00 : f32
    %82 = vector.broadcast %cst_72 : f32 to vector<64x128xf32>
    %c0_73 = arith.constant 0 : index
    %c1_74 = arith.constant 1 : index
    %c0_75 = arith.constant 0 : index
    %c0_76 = arith.constant 0 : index
    %c0_77 = arith.constant 0 : index
    %83 = vector.load %arg1[%c0_73, %c1_74, %c0_75, %c0_76, %c0_77] : memref<1x4x9x9x4xbf16, #tpu.memory_space<vmem>>, vector<1x1x8x8x4xbf16>
    %84 = vector.shape_cast %83 : vector<1x1x8x8x4xbf16> to vector<8x8x4xbf16>
    %85 = arith.extf %84 : vector<8x8x4xbf16> to vector<8x8x4xf32>
    %86 = vector.shape_cast %85 : vector<8x8x4xf32> to vector<64x4xf32>
    %87 = arith.truncf %86 : vector<64x4xf32> to vector<64x4xbf16>
    %c0_78 = arith.constant 0 : index
    %c0_79 = arith.constant 0 : index
    %c0_80 = arith.constant 0 : index
    %88 = vector.load %arg2[%c0_78, %c0_79, %c0_80] : memref<9x4x128xbf16, #tpu.memory_space<vmem>>, vector<1x4x128xbf16>
    %89 = vector.shape_cast %88 : vector<1x4x128xbf16> to vector<4x128xbf16>
    %cst_81 = arith.constant dense<0.000000e+00> : vector<64x128xf32>
    %90 = tpu.matmul %87, %89, %cst_81 {dimension_numbers = #tpu.dot_dimension_numbers<[1], [0], [0], [1], [0, 0, 1, 1], [], []>} : vector<64x4xbf16>, vector<4x128xbf16>, vector<64x128xf32> -> vector<64x128xf32>
    %91 = arith.addf %82, %90 : vector<64x128xf32>
    %c0_82 = arith.constant 0 : index
    %c0_83 = arith.constant 0 : index
    %c0_84 = arith.constant 0 : index
    %c1_85 = arith.constant 1 : index
    %c0_86 = arith.constant 0 : index
    %92 = vector.load %arg1[%c0_82, %c0_83, %c0_84, %c1_85, %c0_86] : memref<1x4x9x9x4xbf16, #tpu.memory_space<vmem>>, vector<1x1x8x8x4xbf16>
    %93 = vector.shape_cast %92 : vector<1x1x8x8x4xbf16> to vector<8x8x4xbf16>
    %94 = arith.extf %93 : vector<8x8x4xbf16> to vector<8x8x4xf32>
    %95 = vector.shape_cast %94 : vector<8x8x4xf32> to vector<64x4xf32>
    %96 = arith.truncf %95 : vector<64x4xf32> to vector<64x4xbf16>
    %c1_87 = arith.constant 1 : index
    %c0_88 = arith.constant 0 : index
    %c0_89 = arith.constant 0 : index
    %97 = vector.load %arg2[%c1_87, %c0_88, %c0_89] : memref<9x4x128xbf16, #tpu.memory_space<vmem>>, vector<1x4x128xbf16>
    %98 = vector.shape_cast %97 : vector<1x4x128xbf16> to vector<4x128xbf16>
    %cst_90 = arith.constant dense<0.000000e+00> : vector<64x128xf32>
    %99 = tpu.matmul %96, %98, %cst_90 {dimension_numbers = #tpu.dot_dimension_numbers<[1], [0], [0], [1], [0, 0, 1, 1], [], []>} : vector<64x4xbf16>, vector<4x128xbf16>, vector<64x128xf32> -> vector<64x128xf32>
    %100 = arith.addf %91, %99 : vector<64x128xf32>
    %c0_91 = arith.constant 0 : index
    %c1_92 = arith.constant 1 : index
    %c0_93 = arith.constant 0 : index
    %c1_94 = arith.constant 1 : index
    %c0_95 = arith.constant 0 : index
    %101 = vector.load %arg1[%c0_91, %c1_92, %c0_93, %c1_94, %c0_95] : memref<1x4x9x9x4xbf16, #tpu.memory_space<vmem>>, vector<1x1x8x8x4xbf16>
    %102 = vector.shape_cast %101 : vector<1x1x8x8x4xbf16> to vector<8x8x4xbf16>
    %103 = arith.extf %102 : vector<8x8x4xbf16> to vector<8x8x4xf32>
    %104 = vector.shape_cast %103 : vector<8x8x4xf32> to vector<64x4xf32>
    %105 = arith.truncf %104 : vector<64x4xf32> to vector<64x4xbf16>
    %c2_96 = arith.constant 2 : index
    %c0_97 = arith.constant 0 : index
    %c0_98 = arith.constant 0 : index
    %106 = vector.load %arg2[%c2_96, %c0_97, %c0_98] : memref<9x4x128xbf16, #tpu.memory_space<vmem>>, vector<1x4x128xbf16>
    %107 = vector.shape_cast %106 : vector<1x4x128xbf16> to vector<4x128xbf16>
    %cst_99 = arith.constant dense<0.000000e+00> : vector<64x128xf32>
    %108 = tpu.matmul %105, %107, %cst_99 {dimension_numbers = #tpu.dot_dimension_numbers<[1], [0], [0], [1], [0, 0, 1, 1], [], []>} : vector<64x4xbf16>, vector<4x128xbf16>, vector<64x128xf32> -> vector<64x128xf32>
    %109 = arith.addf %100, %108 : vector<64x128xf32>
    %c0_100 = arith.constant 0 : index
    %c3_101 = arith.constant 3 : index
    %c0_102 = arith.constant 0 : index
    %c0_103 = arith.constant 0 : index
    %c0_104 = arith.constant 0 : index
    %110 = vector.load %arg1[%c0_100, %c3_101, %c0_102, %c0_103, %c0_104] : memref<1x4x9x9x4xbf16, #tpu.memory_space<vmem>>, vector<1x1x8x8x4xbf16>
    %111 = vector.shape_cast %110 : vector<1x1x8x8x4xbf16> to vector<8x8x4xbf16>
    %112 = arith.extf %111 : vector<8x8x4xbf16> to vector<8x8x4xf32>
    %113 = vector.shape_cast %112 : vector<8x8x4xf32> to vector<64x4xf32>
    %114 = arith.truncf %113 : vector<64x4xf32> to vector<64x4xbf16>
    %c3_105 = arith.constant 3 : index
    %c0_106 = arith.constant 0 : index
    %c0_107 = arith.constant 0 : index
    %115 = vector.load %arg2[%c3_105, %c0_106, %c0_107] : memref<9x4x128xbf16, #tpu.memory_space<vmem>>, vector<1x4x128xbf16>
    %116 = vector.shape_cast %115 : vector<1x4x128xbf16> to vector<4x128xbf16>
    %cst_108 = arith.constant dense<0.000000e+00> : vector<64x128xf32>
    %117 = tpu.matmul %114, %116, %cst_108 {dimension_numbers = #tpu.dot_dimension_numbers<[1], [0], [0], [1], [0, 0, 1, 1], [], []>} : vector<64x4xbf16>, vector<4x128xbf16>, vector<64x128xf32> -> vector<64x128xf32>
    %118 = arith.addf %109, %117 : vector<64x128xf32>
    %c0_109 = arith.constant 0 : index
    %c2_110 = arith.constant 2 : index
    %c0_111 = arith.constant 0 : index
    %c1_112 = arith.constant 1 : index
    %c0_113 = arith.constant 0 : index
    %119 = vector.load %arg1[%c0_109, %c2_110, %c0_111, %c1_112, %c0_113] : memref<1x4x9x9x4xbf16, #tpu.memory_space<vmem>>, vector<1x1x8x8x4xbf16>
    %120 = vector.shape_cast %119 : vector<1x1x8x8x4xbf16> to vector<8x8x4xbf16>
    %121 = arith.extf %120 : vector<8x8x4xbf16> to vector<8x8x4xf32>
    %122 = vector.shape_cast %121 : vector<8x8x4xf32> to vector<64x4xf32>
    %123 = arith.truncf %122 : vector<64x4xf32> to vector<64x4xbf16>
    %c4_114 = arith.constant 4 : index
    %c0_115 = arith.constant 0 : index
    %c0_116 = arith.constant 0 : index
    %124 = vector.load %arg2[%c4_114, %c0_115, %c0_116] : memref<9x4x128xbf16, #tpu.memory_space<vmem>>, vector<1x4x128xbf16>
    %125 = vector.shape_cast %124 : vector<1x4x128xbf16> to vector<4x128xbf16>
    %cst_117 = arith.constant dense<0.000000e+00> : vector<64x128xf32>
    %126 = tpu.matmul %123, %125, %cst_117 {dimension_numbers = #tpu.dot_dimension_numbers<[1], [0], [0], [1], [0, 0, 1, 1], [], []>} : vector<64x4xbf16>, vector<4x128xbf16>, vector<64x128xf32> -> vector<64x128xf32>
    %127 = arith.addf %118, %126 : vector<64x128xf32>
    %c0_118 = arith.constant 0 : index
    %c3_119 = arith.constant 3 : index
    %c0_120 = arith.constant 0 : index
    %c1_121 = arith.constant 1 : index
    %c0_122 = arith.constant 0 : index
    %128 = vector.load %arg1[%c0_118, %c3_119, %c0_120, %c1_121, %c0_122] : memref<1x4x9x9x4xbf16, #tpu.memory_space<vmem>>, vector<1x1x8x8x4xbf16>
    %129 = vector.shape_cast %128 : vector<1x1x8x8x4xbf16> to vector<8x8x4xbf16>
    %130 = arith.extf %129 : vector<8x8x4xbf16> to vector<8x8x4xf32>
    %131 = vector.shape_cast %130 : vector<8x8x4xf32> to vector<64x4xf32>
    %132 = arith.truncf %131 : vector<64x4xf32> to vector<64x4xbf16>
    %c5_123 = arith.constant 5 : index
    %c0_124 = arith.constant 0 : index
    %c0_125 = arith.constant 0 : index
    %133 = vector.load %arg2[%c5_123, %c0_124, %c0_125] : memref<9x4x128xbf16, #tpu.memory_space<vmem>>, vector<1x4x128xbf16>
    %134 = vector.shape_cast %133 : vector<1x4x128xbf16> to vector<4x128xbf16>
    %cst_126 = arith.constant dense<0.000000e+00> : vector<64x128xf32>
    %135 = tpu.matmul %132, %134, %cst_126 {dimension_numbers = #tpu.dot_dimension_numbers<[1], [0], [0], [1], [0, 0, 1, 1], [], []>} : vector<64x4xbf16>, vector<4x128xbf16>, vector<64x128xf32> -> vector<64x128xf32>
    %136 = arith.addf %127, %135 : vector<64x128xf32>
    %c0_127 = arith.constant 0 : index
    %c1_128 = arith.constant 1 : index
    %c1_129 = arith.constant 1 : index
    %c0_130 = arith.constant 0 : index
    %c0_131 = arith.constant 0 : index
    %137 = vector.load %arg1[%c0_127, %c1_128, %c1_129, %c0_130, %c0_131] : memref<1x4x9x9x4xbf16, #tpu.memory_space<vmem>>, vector<1x1x8x8x4xbf16>
    %138 = vector.shape_cast %137 : vector<1x1x8x8x4xbf16> to vector<8x8x4xbf16>
    %139 = arith.extf %138 : vector<8x8x4xbf16> to vector<8x8x4xf32>
    %140 = vector.shape_cast %139 : vector<8x8x4xf32> to vector<64x4xf32>
    %141 = arith.truncf %140 : vector<64x4xf32> to vector<64x4xbf16>
    %c6_132 = arith.constant 6 : index
    %c0_133 = arith.constant 0 : index
    %c0_134 = arith.constant 0 : index
    %142 = vector.load %arg2[%c6_132, %c0_133, %c0_134] : memref<9x4x128xbf16, #tpu.memory_space<vmem>>, vector<1x4x128xbf16>
    %143 = vector.shape_cast %142 : vector<1x4x128xbf16> to vector<4x128xbf16>
    %cst_135 = arith.constant dense<0.000000e+00> : vector<64x128xf32>
    %144 = tpu.matmul %141, %143, %cst_135 {dimension_numbers = #tpu.dot_dimension_numbers<[1], [0], [0], [1], [0, 0, 1, 1], [], []>} : vector<64x4xbf16>, vector<4x128xbf16>, vector<64x128xf32> -> vector<64x128xf32>
    %145 = arith.addf %136, %144 : vector<64x128xf32>
    %c0_136 = arith.constant 0 : index
    %c0_137 = arith.constant 0 : index
    %c1_138 = arith.constant 1 : index
    %c1_139 = arith.constant 1 : index
    %c0_140 = arith.constant 0 : index
    %146 = vector.load %arg1[%c0_136, %c0_137, %c1_138, %c1_139, %c0_140] : memref<1x4x9x9x4xbf16, #tpu.memory_space<vmem>>, vector<1x1x8x8x4xbf16>
    %147 = vector.shape_cast %146 : vector<1x1x8x8x4xbf16> to vector<8x8x4xbf16>
    %148 = arith.extf %147 : vector<8x8x4xbf16> to vector<8x8x4xf32>
    %149 = vector.shape_cast %148 : vector<8x8x4xf32> to vector<64x4xf32>
    %150 = arith.truncf %149 : vector<64x4xf32> to vector<64x4xbf16>
    %c7_141 = arith.constant 7 : index
    %c0_142 = arith.constant 0 : index
    %c0_143 = arith.constant 0 : index
    %151 = vector.load %arg2[%c7_141, %c0_142, %c0_143] : memref<9x4x128xbf16, #tpu.memory_space<vmem>>, vector<1x4x128xbf16>
    %152 = vector.shape_cast %151 : vector<1x4x128xbf16> to vector<4x128xbf16>
    %cst_144 = arith.constant dense<0.000000e+00> : vector<64x128xf32>
    %153 = tpu.matmul %150, %152, %cst_144 {dimension_numbers = #tpu.dot_dimension_numbers<[1], [0], [0], [1], [0, 0, 1, 1], [], []>} : vector<64x4xbf16>, vector<4x128xbf16>, vector<64x128xf32> -> vector<64x128xf32>
    %154 = arith.addf %145, %153 : vector<64x128xf32>
    %c0_145 = arith.constant 0 : index
    %c1_146 = arith.constant 1 : index
    %c1_147 = arith.constant 1 : index
    %c1_148 = arith.constant 1 : index
    %c0_149 = arith.constant 0 : index
    %155 = vector.load %arg1[%c0_145, %c1_146, %c1_147, %c1_148, %c0_149] : memref<1x4x9x9x4xbf16, #tpu.memory_space<vmem>>, vector<1x1x8x8x4xbf16>
    %156 = vector.shape_cast %155 : vector<1x1x8x8x4xbf16> to vector<8x8x4xbf16>
    %157 = arith.extf %156 : vector<8x8x4xbf16> to vector<8x8x4xf32>
    %158 = vector.shape_cast %157 : vector<8x8x4xf32> to vector<64x4xf32>
    %159 = arith.truncf %158 : vector<64x4xf32> to vector<64x4xbf16>
    %c8_150 = arith.constant 8 : index
    %c0_151 = arith.constant 0 : index
    %c0_152 = arith.constant 0 : index
    %160 = vector.load %arg2[%c8_150, %c0_151, %c0_152] : memref<9x4x128xbf16, #tpu.memory_space<vmem>>, vector<1x4x128xbf16>
    %161 = vector.shape_cast %160 : vector<1x4x128xbf16> to vector<4x128xbf16>
    %cst_153 = arith.constant dense<0.000000e+00> : vector<64x128xf32>
    %162 = tpu.matmul %159, %161, %cst_153 {dimension_numbers = #tpu.dot_dimension_numbers<[1], [0], [0], [1], [0, 0, 1, 1], [], []>} : vector<64x4xbf16>, vector<4x128xbf16>, vector<64x128xf32> -> vector<64x128xf32>
    %163 = arith.addf %154, %162 : vector<64x128xf32>
    %164 = arith.addf %81, %163 : vector<64x128xf32>
    %cst_154 = arith.constant 0.000000e+00 : f32
    %165 = vector.broadcast %cst_154 : f32 to vector<64x128xf32>
    %c0_155 = arith.constant 0 : index
    %c2_156 = arith.constant 2 : index
    %c0_157 = arith.constant 0 : index
    %c0_158 = arith.constant 0 : index
    %c0_159 = arith.constant 0 : index
    %166 = vector.load %arg1[%c0_155, %c2_156, %c0_157, %c0_158, %c0_159] : memref<1x4x9x9x4xbf16, #tpu.memory_space<vmem>>, vector<1x1x8x8x4xbf16>
    %167 = vector.shape_cast %166 : vector<1x1x8x8x4xbf16> to vector<8x8x4xbf16>
    %168 = arith.extf %167 : vector<8x8x4xbf16> to vector<8x8x4xf32>
    %169 = vector.shape_cast %168 : vector<8x8x4xf32> to vector<64x4xf32>
    %170 = arith.truncf %169 : vector<64x4xf32> to vector<64x4xbf16>
    %c0_160 = arith.constant 0 : index
    %c0_161 = arith.constant 0 : index
    %c0_162 = arith.constant 0 : index
    %171 = vector.load %arg2[%c0_160, %c0_161, %c0_162] : memref<9x4x128xbf16, #tpu.memory_space<vmem>>, vector<1x4x128xbf16>
    %172 = vector.shape_cast %171 : vector<1x4x128xbf16> to vector<4x128xbf16>
    %cst_163 = arith.constant dense<0.000000e+00> : vector<64x128xf32>
    %173 = tpu.matmul %170, %172, %cst_163 {dimension_numbers = #tpu.dot_dimension_numbers<[1], [0], [0], [1], [0, 0, 1, 1], [], []>} : vector<64x4xbf16>, vector<4x128xbf16>, vector<64x128xf32> -> vector<64x128xf32>
    %174 = arith.addf %165, %173 : vector<64x128xf32>
    %c0_164 = arith.constant 0 : index
    %c3_165 = arith.constant 3 : index
    %c0_166 = arith.constant 0 : index
    %c0_167 = arith.constant 0 : index
    %c0_168 = arith.constant 0 : index
    %175 = vector.load %arg1[%c0_164, %c3_165, %c0_166, %c0_167, %c0_168] : memref<1x4x9x9x4xbf16, #tpu.memory_space<vmem>>, vector<1x1x8x8x4xbf16>
    %176 = vector.shape_cast %175 : vector<1x1x8x8x4xbf16> to vector<8x8x4xbf16>
    %177 = arith.extf %176 : vector<8x8x4xbf16> to vector<8x8x4xf32>
    %178 = vector.shape_cast %177 : vector<8x8x4xf32> to vector<64x4xf32>
    %179 = arith.truncf %178 : vector<64x4xf32> to vector<64x4xbf16>
    %c1_169 = arith.constant 1 : index
    %c0_170 = arith.constant 0 : index
    %c0_171 = arith.constant 0 : index
    %180 = vector.load %arg2[%c1_169, %c0_170, %c0_171] : memref<9x4x128xbf16, #tpu.memory_space<vmem>>, vector<1x4x128xbf16>
    %181 = vector.shape_cast %180 : vector<1x4x128xbf16> to vector<4x128xbf16>
    %cst_172 = arith.constant dense<0.000000e+00> : vector<64x128xf32>
    %182 = tpu.matmul %179, %181, %cst_172 {dimension_numbers = #tpu.dot_dimension_numbers<[1], [0], [0], [1], [0, 0, 1, 1], [], []>} : vector<64x4xbf16>, vector<4x128xbf16>, vector<64x128xf32> -> vector<64x128xf32>
    %183 = arith.addf %174, %182 : vector<64x128xf32>
    %c0_173 = arith.constant 0 : index
    %c2_174 = arith.constant 2 : index
    %c0_175 = arith.constant 0 : index
    %c1_176 = arith.constant 1 : index
    %c0_177 = arith.constant 0 : index
    %184 = vector.load %arg1[%c0_173, %c2_174, %c0_175, %c1_176, %c0_177] : memref<1x4x9x9x4xbf16, #tpu.memory_space<vmem>>, vector<1x1x8x8x4xbf16>
    %185 = vector.shape_cast %184 : vector<1x1x8x8x4xbf16> to vector<8x8x4xbf16>
    %186 = arith.extf %185 : vector<8x8x4xbf16> to vector<8x8x4xf32>
    %187 = vector.shape_cast %186 : vector<8x8x4xf32> to vector<64x4xf32>
    %188 = arith.truncf %187 : vector<64x4xf32> to vector<64x4xbf16>
    %c2_178 = arith.constant 2 : index
    %c0_179 = arith.constant 0 : index
    %c0_180 = arith.constant 0 : index
    %189 = vector.load %arg2[%c2_178, %c0_179, %c0_180] : memref<9x4x128xbf16, #tpu.memory_space<vmem>>, vector<1x4x128xbf16>
    %190 = vector.shape_cast %189 : vector<1x4x128xbf16> to vector<4x128xbf16>
    %cst_181 = arith.constant dense<0.000000e+00> : vector<64x128xf32>
    %191 = tpu.matmul %188, %190, %cst_181 {dimension_numbers = #tpu.dot_dimension_numbers<[1], [0], [0], [1], [0, 0, 1, 1], [], []>} : vector<64x4xbf16>, vector<4x128xbf16>, vector<64x128xf32> -> vector<64x128xf32>
    %192 = arith.addf %183, %191 : vector<64x128xf32>
    %c0_182 = arith.constant 0 : index
    %c0_183 = arith.constant 0 : index
    %c1_184 = arith.constant 1 : index
    %c0_185 = arith.constant 0 : index
    %c0_186 = arith.constant 0 : index
    %193 = vector.load %arg1[%c0_182, %c0_183, %c1_184, %c0_185, %c0_186] : memref<1x4x9x9x4xbf16, #tpu.memory_space<vmem>>, vector<1x1x8x8x4xbf16>
    %194 = vector.shape_cast %193 : vector<1x1x8x8x4xbf16> to vector<8x8x4xbf16>
    %195 = arith.extf %194 : vector<8x8x4xbf16> to vector<8x8x4xf32>
    %196 = vector.shape_cast %195 : vector<8x8x4xf32> to vector<64x4xf32>
    %197 = arith.truncf %196 : vector<64x4xf32> to vector<64x4xbf16>
    %c3_187 = arith.constant 3 : index
    %c0_188 = arith.constant 0 : index
    %c0_189 = arith.constant 0 : index
    %198 = vector.load %arg2[%c3_187, %c0_188, %c0_189] : memref<9x4x128xbf16, #tpu.memory_space<vmem>>, vector<1x4x128xbf16>
    %199 = vector.shape_cast %198 : vector<1x4x128xbf16> to vector<4x128xbf16>
    %cst_190 = arith.constant dense<0.000000e+00> : vector<64x128xf32>
    %200 = tpu.matmul %197, %199, %cst_190 {dimension_numbers = #tpu.dot_dimension_numbers<[1], [0], [0], [1], [0, 0, 1, 1], [], []>} : vector<64x4xbf16>, vector<4x128xbf16>, vector<64x128xf32> -> vector<64x128xf32>
    %201 = arith.addf %192, %200 : vector<64x128xf32>
    %c0_191 = arith.constant 0 : index
    %c1_192 = arith.constant 1 : index
    %c1_193 = arith.constant 1 : index
    %c0_194 = arith.constant 0 : index
    %c0_195 = arith.constant 0 : index
    %202 = vector.load %arg1[%c0_191, %c1_192, %c1_193, %c0_194, %c0_195] : memref<1x4x9x9x4xbf16, #tpu.memory_space<vmem>>, vector<1x1x8x8x4xbf16>
    %203 = vector.shape_cast %202 : vector<1x1x8x8x4xbf16> to vector<8x8x4xbf16>
    %204 = arith.extf %203 : vector<8x8x4xbf16> to vector<8x8x4xf32>
    %205 = vector.shape_cast %204 : vector<8x8x4xf32> to vector<64x4xf32>
    %206 = arith.truncf %205 : vector<64x4xf32> to vector<64x4xbf16>
    %c4_196 = arith.constant 4 : index
    %c0_197 = arith.constant 0 : index
    %c0_198 = arith.constant 0 : index
    %207 = vector.load %arg2[%c4_196, %c0_197, %c0_198] : memref<9x4x128xbf16, #tpu.memory_space<vmem>>, vector<1x4x128xbf16>
    %208 = vector.shape_cast %207 : vector<1x4x128xbf16> to vector<4x128xbf16>
    %cst_199 = arith.constant dense<0.000000e+00> : vector<64x128xf32>
    %209 = tpu.matmul %206, %208, %cst_199 {dimension_numbers = #tpu.dot_dimension_numbers<[1], [0], [0], [1], [0, 0, 1, 1], [], []>} : vector<64x4xbf16>, vector<4x128xbf16>, vector<64x128xf32> -> vector<64x128xf32>
    %210 = arith.addf %201, %209 : vector<64x128xf32>
    %c0_200 = arith.constant 0 : index
    %c0_201 = arith.constant 0 : index
    %c1_202 = arith.constant 1 : index
    %c1_203 = arith.constant 1 : index
    %c0_204 = arith.constant 0 : index
    %211 = vector.load %arg1[%c0_200, %c0_201, %c1_202, %c1_203, %c0_204] : memref<1x4x9x9x4xbf16, #tpu.memory_space<vmem>>, vector<1x1x8x8x4xbf16>
    %212 = vector.shape_cast %211 : vector<1x1x8x8x4xbf16> to vector<8x8x4xbf16>
    %213 = arith.extf %212 : vector<8x8x4xbf16> to vector<8x8x4xf32>
    %214 = vector.shape_cast %213 : vector<8x8x4xf32> to vector<64x4xf32>
    %215 = arith.truncf %214 : vector<64x4xf32> to vector<64x4xbf16>
    %c5_205 = arith.constant 5 : index
    %c0_206 = arith.constant 0 : index
    %c0_207 = arith.constant 0 : index
    %216 = vector.load %arg2[%c5_205, %c0_206, %c0_207] : memref<9x4x128xbf16, #tpu.memory_space<vmem>>, vector<1x4x128xbf16>
    %217 = vector.shape_cast %216 : vector<1x4x128xbf16> to vector<4x128xbf16>
    %cst_208 = arith.constant dense<0.000000e+00> : vector<64x128xf32>
    %218 = tpu.matmul %215, %217, %cst_208 {dimension_numbers = #tpu.dot_dimension_numbers<[1], [0], [0], [1], [0, 0, 1, 1], [], []>} : vector<64x4xbf16>, vector<4x128xbf16>, vector<64x128xf32> -> vector<64x128xf32>
    %219 = arith.addf %210, %218 : vector<64x128xf32>
    %c0_209 = arith.constant 0 : index
    %c2_210 = arith.constant 2 : index
    %c1_211 = arith.constant 1 : index
    %c0_212 = arith.constant 0 : index
    %c0_213 = arith.constant 0 : index
    %220 = vector.load %arg1[%c0_209, %c2_210, %c1_211, %c0_212, %c0_213] : memref<1x4x9x9x4xbf16, #tpu.memory_space<vmem>>, vector<1x1x8x8x4xbf16>
    %221 = vector.shape_cast %220 : vector<1x1x8x8x4xbf16> to vector<8x8x4xbf16>
    %222 = arith.extf %221 : vector<8x8x4xbf16> to vector<8x8x4xf32>
    %223 = vector.shape_cast %222 : vector<8x8x4xf32> to vector<64x4xf32>
    %224 = arith.truncf %223 : vector<64x4xf32> to vector<64x4xbf16>
    %c6_214 = arith.constant 6 : index
    %c0_215 = arith.constant 0 : index
    %c0_216 = arith.constant 0 : index
    %225 = vector.load %arg2[%c6_214, %c0_215, %c0_216] : memref<9x4x128xbf16, #tpu.memory_space<vmem>>, vector<1x4x128xbf16>
    %226 = vector.shape_cast %225 : vector<1x4x128xbf16> to vector<4x128xbf16>
    %cst_217 = arith.constant dense<0.000000e+00> : vector<64x128xf32>
    %227 = tpu.matmul %224, %226, %cst_217 {dimension_numbers = #tpu.dot_dimension_numbers<[1], [0], [0], [1], [0, 0, 1, 1], [], []>} : vector<64x4xbf16>, vector<4x128xbf16>, vector<64x128xf32> -> vector<64x128xf32>
    %228 = arith.addf %219, %227 : vector<64x128xf32>
    %c0_218 = arith.constant 0 : index
    %c3_219 = arith.constant 3 : index
    %c1_220 = arith.constant 1 : index
    %c0_221 = arith.constant 0 : index
    %c0_222 = arith.constant 0 : index
    %229 = vector.load %arg1[%c0_218, %c3_219, %c1_220, %c0_221, %c0_222] : memref<1x4x9x9x4xbf16, #tpu.memory_space<vmem>>, vector<1x1x8x8x4xbf16>
    %230 = vector.shape_cast %229 : vector<1x1x8x8x4xbf16> to vector<8x8x4xbf16>
    %231 = arith.extf %230 : vector<8x8x4xbf16> to vector<8x8x4xf32>
    %232 = vector.shape_cast %231 : vector<8x8x4xf32> to vector<64x4xf32>
    %233 = arith.truncf %232 : vector<64x4xf32> to vector<64x4xbf16>
    %c7_223 = arith.constant 7 : index
    %c0_224 = arith.constant 0 : index
    %c0_225 = arith.constant 0 : index
    %234 = vector.load %arg2[%c7_223, %c0_224, %c0_225] : memref<9x4x128xbf16, #tpu.memory_space<vmem>>, vector<1x4x128xbf16>
    %235 = vector.shape_cast %234 : vector<1x4x128xbf16> to vector<4x128xbf16>
    %cst_226 = arith.constant dense<0.000000e+00> : vector<64x128xf32>
    %236 = tpu.matmul %233, %235, %cst_226 {dimension_numbers = #tpu.dot_dimension_numbers<[1], [0], [0], [1], [0, 0, 1, 1], [], []>} : vector<64x4xbf16>, vector<4x128xbf16>, vector<64x128xf32> -> vector<64x128xf32>
    %237 = arith.addf %228, %236 : vector<64x128xf32>
    %c0_227 = arith.constant 0 : index
    %c2_228 = arith.constant 2 : index
    %c1_229 = arith.constant 1 : index
    %c1_230 = arith.constant 1 : index
    %c0_231 = arith.constant 0 : index
    %238 = vector.load %arg1[%c0_227, %c2_228, %c1_229, %c1_230, %c0_231] : memref<1x4x9x9x4xbf16, #tpu.memory_space<vmem>>, vector<1x1x8x8x4xbf16>
    %239 = vector.shape_cast %238 : vector<1x1x8x8x4xbf16> to vector<8x8x4xbf16>
    %240 = arith.extf %239 : vector<8x8x4xbf16> to vector<8x8x4xf32>
    %241 = vector.shape_cast %240 : vector<8x8x4xf32> to vector<64x4xf32>
    %242 = arith.truncf %241 : vector<64x4xf32> to vector<64x4xbf16>
    %c8_232 = arith.constant 8 : index
    %c0_233 = arith.constant 0 : index
    %c0_234 = arith.constant 0 : index
    %243 = vector.load %arg2[%c8_232, %c0_233, %c0_234] : memref<9x4x128xbf16, #tpu.memory_space<vmem>>, vector<1x4x128xbf16>
    %244 = vector.shape_cast %243 : vector<1x4x128xbf16> to vector<4x128xbf16>
    %cst_235 = arith.constant dense<0.000000e+00> : vector<64x128xf32>
    %245 = tpu.matmul %242, %244, %cst_235 {dimension_numbers = #tpu.dot_dimension_numbers<[1], [0], [0], [1], [0, 0, 1, 1], [], []>} : vector<64x4xbf16>, vector<4x128xbf16>, vector<64x128xf32> -> vector<64x128xf32>
    %246 = arith.addf %237, %245 : vector<64x128xf32>
    %247 = arith.addf %164, %246 : vector<64x128xf32>
    %cst_236 = arith.constant 0.000000e+00 : f32
    %248 = vector.broadcast %cst_236 : f32 to vector<64x128xf32>
    %c0_237 = arith.constant 0 : index
    %c3_238 = arith.constant 3 : index
    %c0_239 = arith.constant 0 : index
    %c0_240 = arith.constant 0 : index
    %c0_241 = arith.constant 0 : index
    %249 = vector.load %arg1[%c0_237, %c3_238, %c0_239, %c0_240, %c0_241] : memref<1x4x9x9x4xbf16, #tpu.memory_space<vmem>>, vector<1x1x8x8x4xbf16>
    %250 = vector.shape_cast %249 : vector<1x1x8x8x4xbf16> to vector<8x8x4xbf16>
    %251 = arith.extf %250 : vector<8x8x4xbf16> to vector<8x8x4xf32>
    %252 = vector.shape_cast %251 : vector<8x8x4xf32> to vector<64x4xf32>
    %253 = arith.truncf %252 : vector<64x4xf32> to vector<64x4xbf16>
    %c0_242 = arith.constant 0 : index
    %c0_243 = arith.constant 0 : index
    %c0_244 = arith.constant 0 : index
    %254 = vector.load %arg2[%c0_242, %c0_243, %c0_244] : memref<9x4x128xbf16, #tpu.memory_space<vmem>>, vector<1x4x128xbf16>
    %255 = vector.shape_cast %254 : vector<1x4x128xbf16> to vector<4x128xbf16>
    %cst_245 = arith.constant dense<0.000000e+00> : vector<64x128xf32>
    %256 = tpu.matmul %253, %255, %cst_245 {dimension_numbers = #tpu.dot_dimension_numbers<[1], [0], [0], [1], [0, 0, 1, 1], [], []>} : vector<64x4xbf16>, vector<4x128xbf16>, vector<64x128xf32> -> vector<64x128xf32>
    %257 = arith.addf %248, %256 : vector<64x128xf32>
    %c0_246 = arith.constant 0 : index
    %c2_247 = arith.constant 2 : index
    %c0_248 = arith.constant 0 : index
    %c1_249 = arith.constant 1 : index
    %c0_250 = arith.constant 0 : index
    %258 = vector.load %arg1[%c0_246, %c2_247, %c0_248, %c1_249, %c0_250] : memref<1x4x9x9x4xbf16, #tpu.memory_space<vmem>>, vector<1x1x8x8x4xbf16>
    %259 = vector.shape_cast %258 : vector<1x1x8x8x4xbf16> to vector<8x8x4xbf16>
    %260 = arith.extf %259 : vector<8x8x4xbf16> to vector<8x8x4xf32>
    %261 = vector.shape_cast %260 : vector<8x8x4xf32> to vector<64x4xf32>
    %262 = arith.truncf %261 : vector<64x4xf32> to vector<64x4xbf16>
    %c1_251 = arith.constant 1 : index
    %c0_252 = arith.constant 0 : index
    %c0_253 = arith.constant 0 : index
    %263 = vector.load %arg2[%c1_251, %c0_252, %c0_253] : memref<9x4x128xbf16, #tpu.memory_space<vmem>>, vector<1x4x128xbf16>
    %264 = vector.shape_cast %263 : vector<1x4x128xbf16> to vector<4x128xbf16>
    %cst_254 = arith.constant dense<0.000000e+00> : vector<64x128xf32>
    %265 = tpu.matmul %262, %264, %cst_254 {dimension_numbers = #tpu.dot_dimension_numbers<[1], [0], [0], [1], [0, 0, 1, 1], [], []>} : vector<64x4xbf16>, vector<4x128xbf16>, vector<64x128xf32> -> vector<64x128xf32>
    %266 = arith.addf %257, %265 : vector<64x128xf32>
    %c0_255 = arith.constant 0 : index
    %c3_256 = arith.constant 3 : index
    %c0_257 = arith.constant 0 : index
    %c1_258 = arith.constant 1 : index
    %c0_259 = arith.constant 0 : index
    %267 = vector.load %arg1[%c0_255, %c3_256, %c0_257, %c1_258, %c0_259] : memref<1x4x9x9x4xbf16, #tpu.memory_space<vmem>>, vector<1x1x8x8x4xbf16>
    %268 = vector.shape_cast %267 : vector<1x1x8x8x4xbf16> to vector<8x8x4xbf16>
    %269 = arith.extf %268 : vector<8x8x4xbf16> to vector<8x8x4xf32>
    %270 = vector.shape_cast %269 : vector<8x8x4xf32> to vector<64x4xf32>
    %271 = arith.truncf %270 : vector<64x4xf32> to vector<64x4xbf16>
    %c2_260 = arith.constant 2 : index
    %c0_261 = arith.constant 0 : index
    %c0_262 = arith.constant 0 : index
    %272 = vector.load %arg2[%c2_260, %c0_261, %c0_262] : memref<9x4x128xbf16, #tpu.memory_space<vmem>>, vector<1x4x128xbf16>
    %273 = vector.shape_cast %272 : vector<1x4x128xbf16> to vector<4x128xbf16>
    %cst_263 = arith.constant dense<0.000000e+00> : vector<64x128xf32>
    %274 = tpu.matmul %271, %273, %cst_263 {dimension_numbers = #tpu.dot_dimension_numbers<[1], [0], [0], [1], [0, 0, 1, 1], [], []>} : vector<64x4xbf16>, vector<4x128xbf16>, vector<64x128xf32> -> vector<64x128xf32>
    %275 = arith.addf %266, %274 : vector<64x128xf32>
    %c0_264 = arith.constant 0 : index
    %c1_265 = arith.constant 1 : index
    %c1_266 = arith.constant 1 : index
    %c0_267 = arith.constant 0 : index
    %c0_268 = arith.constant 0 : index
    %276 = vector.load %arg1[%c0_264, %c1_265, %c1_266, %c0_267, %c0_268] : memref<1x4x9x9x4xbf16, #tpu.memory_space<vmem>>, vector<1x1x8x8x4xbf16>
    %277 = vector.shape_cast %276 : vector<1x1x8x8x4xbf16> to vector<8x8x4xbf16>
    %278 = arith.extf %277 : vector<8x8x4xbf16> to vector<8x8x4xf32>
    %279 = vector.shape_cast %278 : vector<8x8x4xf32> to vector<64x4xf32>
    %280 = arith.truncf %279 : vector<64x4xf32> to vector<64x4xbf16>
    %c3_269 = arith.constant 3 : index
    %c0_270 = arith.constant 0 : index
    %c0_271 = arith.constant 0 : index
    %281 = vector.load %arg2[%c3_269, %c0_270, %c0_271] : memref<9x4x128xbf16, #tpu.memory_space<vmem>>, vector<1x4x128xbf16>
    %282 = vector.shape_cast %281 : vector<1x4x128xbf16> to vector<4x128xbf16>
    %cst_272 = arith.constant dense<0.000000e+00> : vector<64x128xf32>
    %283 = tpu.matmul %280, %282, %cst_272 {dimension_numbers = #tpu.dot_dimension_numbers<[1], [0], [0], [1], [0, 0, 1, 1], [], []>} : vector<64x4xbf16>, vector<4x128xbf16>, vector<64x128xf32> -> vector<64x128xf32>
    %284 = arith.addf %275, %283 : vector<64x128xf32>
    %c0_273 = arith.constant 0 : index
    %c0_274 = arith.constant 0 : index
    %c1_275 = arith.constant 1 : index
    %c1_276 = arith.constant 1 : index
    %c0_277 = arith.constant 0 : index
    %285 = vector.load %arg1[%c0_273, %c0_274, %c1_275, %c1_276, %c0_277] : memref<1x4x9x9x4xbf16, #tpu.memory_space<vmem>>, vector<1x1x8x8x4xbf16>
    %286 = vector.shape_cast %285 : vector<1x1x8x8x4xbf16> to vector<8x8x4xbf16>
    %287 = arith.extf %286 : vector<8x8x4xbf16> to vector<8x8x4xf32>
    %288 = vector.shape_cast %287 : vector<8x8x4xf32> to vector<64x4xf32>
    %289 = arith.truncf %288 : vector<64x4xf32> to vector<64x4xbf16>
    %c4_278 = arith.constant 4 : index
    %c0_279 = arith.constant 0 : index
    %c0_280 = arith.constant 0 : index
    %290 = vector.load %arg2[%c4_278, %c0_279, %c0_280] : memref<9x4x128xbf16, #tpu.memory_space<vmem>>, vector<1x4x128xbf16>
    %291 = vector.shape_cast %290 : vector<1x4x128xbf16> to vector<4x128xbf16>
    %cst_281 = arith.constant dense<0.000000e+00> : vector<64x128xf32>
    %292 = tpu.matmul %289, %291, %cst_281 {dimension_numbers = #tpu.dot_dimension_numbers<[1], [0], [0], [1], [0, 0, 1, 1], [], []>} : vector<64x4xbf16>, vector<4x128xbf16>, vector<64x128xf32> -> vector<64x128xf32>
    %293 = arith.addf %284, %292 : vector<64x128xf32>
    %c0_282 = arith.constant 0 : index
    %c1_283 = arith.constant 1 : index
    %c1_284 = arith.constant 1 : index
    %c1_285 = arith.constant 1 : index
    %c0_286 = arith.constant 0 : index
    %294 = vector.load %arg1[%c0_282, %c1_283, %c1_284, %c1_285, %c0_286] : memref<1x4x9x9x4xbf16, #tpu.memory_space<vmem>>, vector<1x1x8x8x4xbf16>
    %295 = vector.shape_cast %294 : vector<1x1x8x8x4xbf16> to vector<8x8x4xbf16>
    %296 = arith.extf %295 : vector<8x8x4xbf16> to vector<8x8x4xf32>
    %297 = vector.shape_cast %296 : vector<8x8x4xf32> to vector<64x4xf32>
    %298 = arith.truncf %297 : vector<64x4xf32> to vector<64x4xbf16>
    %c5_287 = arith.constant 5 : index
    %c0_288 = arith.constant 0 : index
    %c0_289 = arith.constant 0 : index
    %299 = vector.load %arg2[%c5_287, %c0_288, %c0_289] : memref<9x4x128xbf16, #tpu.memory_space<vmem>>, vector<1x4x128xbf16>
    %300 = vector.shape_cast %299 : vector<1x4x128xbf16> to vector<4x128xbf16>
    %cst_290 = arith.constant dense<0.000000e+00> : vector<64x128xf32>
    %301 = tpu.matmul %298, %300, %cst_290 {dimension_numbers = #tpu.dot_dimension_numbers<[1], [0], [0], [1], [0, 0, 1, 1], [], []>} : vector<64x4xbf16>, vector<4x128xbf16>, vector<64x128xf32> -> vector<64x128xf32>
    %302 = arith.addf %293, %301 : vector<64x128xf32>
    %c0_291 = arith.constant 0 : index
    %c3_292 = arith.constant 3 : index
    %c1_293 = arith.constant 1 : index
    %c0_294 = arith.constant 0 : index
    %c0_295 = arith.constant 0 : index
    %303 = vector.load %arg1[%c0_291, %c3_292, %c1_293, %c0_294, %c0_295] : memref<1x4x9x9x4xbf16, #tpu.memory_space<vmem>>, vector<1x1x8x8x4xbf16>
    %304 = vector.shape_cast %303 : vector<1x1x8x8x4xbf16> to vector<8x8x4xbf16>
    %305 = arith.extf %304 : vector<8x8x4xbf16> to vector<8x8x4xf32>
    %306 = vector.shape_cast %305 : vector<8x8x4xf32> to vector<64x4xf32>
    %307 = arith.truncf %306 : vector<64x4xf32> to vector<64x4xbf16>
    %c6_296 = arith.constant 6 : index
    %c0_297 = arith.constant 0 : index
    %c0_298 = arith.constant 0 : index
    %308 = vector.load %arg2[%c6_296, %c0_297, %c0_298] : memref<9x4x128xbf16, #tpu.memory_space<vmem>>, vector<1x4x128xbf16>
    %309 = vector.shape_cast %308 : vector<1x4x128xbf16> to vector<4x128xbf16>
    %cst_299 = arith.constant dense<0.000000e+00> : vector<64x128xf32>
    %310 = tpu.matmul %307, %309, %cst_299 {dimension_numbers = #tpu.dot_dimension_numbers<[1], [0], [0], [1], [0, 0, 1, 1], [], []>} : vector<64x4xbf16>, vector<4x128xbf16>, vector<64x128xf32> -> vector<64x128xf32>
    %311 = arith.addf %302, %310 : vector<64x128xf32>
    %c0_300 = arith.constant 0 : index
    %c2_301 = arith.constant 2 : index
    %c1_302 = arith.constant 1 : index
    %c1_303 = arith.constant 1 : index
    %c0_304 = arith.constant 0 : index
    %312 = vector.load %arg1[%c0_300, %c2_301, %c1_302, %c1_303, %c0_304] : memref<1x4x9x9x4xbf16, #tpu.memory_space<vmem>>, vector<1x1x8x8x4xbf16>
    %313 = vector.shape_cast %312 : vector<1x1x8x8x4xbf16> to vector<8x8x4xbf16>
    %314 = arith.extf %313 : vector<8x8x4xbf16> to vector<8x8x4xf32>
    %315 = vector.shape_cast %314 : vector<8x8x4xf32> to vector<64x4xf32>
    %316 = arith.truncf %315 : vector<64x4xf32> to vector<64x4xbf16>
    %c7_305 = arith.constant 7 : index
    %c0_306 = arith.constant 0 : index
    %c0_307 = arith.constant 0 : index
    %317 = vector.load %arg2[%c7_305, %c0_306, %c0_307] : memref<9x4x128xbf16, #tpu.memory_space<vmem>>, vector<1x4x128xbf16>
    %318 = vector.shape_cast %317 : vector<1x4x128xbf16> to vector<4x128xbf16>
    %cst_308 = arith.constant dense<0.000000e+00> : vector<64x128xf32>
    %319 = tpu.matmul %316, %318, %cst_308 {dimension_numbers = #tpu.dot_dimension_numbers<[1], [0], [0], [1], [0, 0, 1, 1], [], []>} : vector<64x4xbf16>, vector<4x128xbf16>, vector<64x128xf32> -> vector<64x128xf32>
    %320 = arith.addf %311, %319 : vector<64x128xf32>
    %c0_309 = arith.constant 0 : index
    %c3_310 = arith.constant 3 : index
    %c1_311 = arith.constant 1 : index
    %c1_312 = arith.constant 1 : index
    %c0_313 = arith.constant 0 : index
    %321 = vector.load %arg1[%c0_309, %c3_310, %c1_311, %c1_312, %c0_313] : memref<1x4x9x9x4xbf16, #tpu.memory_space<vmem>>, vector<1x1x8x8x4xbf16>
    %322 = vector.shape_cast %321 : vector<1x1x8x8x4xbf16> to vector<8x8x4xbf16>
    %323 = arith.extf %322 : vector<8x8x4xbf16> to vector<8x8x4xf32>
    %324 = vector.shape_cast %323 : vector<8x8x4xf32> to vector<64x4xf32>
    %325 = arith.truncf %324 : vector<64x4xf32> to vector<64x4xbf16>
    %c8_314 = arith.constant 8 : index
    %c0_315 = arith.constant 0 : index
    %c0_316 = arith.constant 0 : index
    %326 = vector.load %arg2[%c8_314, %c0_315, %c0_316] : memref<9x4x128xbf16, #tpu.memory_space<vmem>>, vector<1x4x128xbf16>
    %327 = vector.shape_cast %326 : vector<1x4x128xbf16> to vector<4x128xbf16>
    %cst_317 = arith.constant dense<0.000000e+00> : vector<64x128xf32>
    %328 = tpu.matmul %325, %327, %cst_317 {dimension_numbers = #tpu.dot_dimension_numbers<[1], [0], [0], [1], [0, 0, 1, 1], [], []>} : vector<64x4xbf16>, vector<4x128xbf16>, vector<64x128xf32> -> vector<64x128xf32>
    %329 = arith.addf %320, %328 : vector<64x128xf32>
    %330 = arith.addf %247, %329 : vector<64x128xf32>
    %cst_318 = arith.constant 2.500000e-01 : f32
    %331 = vector.broadcast %cst_318 : f32 to vector<64x128xf32>
    %332 = arith.mulf %330, %331 : vector<64x128xf32>
    %c0_319 = arith.constant 0 : index
    %c0_320 = arith.constant 0 : index
    %333 = vector.load %arg3[%c0_319, %c0_320] : memref<1x128xf32, #tpu.memory_space<vmem>>, vector<1x128xf32>
    %334 = vector.broadcast %333 : vector<1x128xf32> to vector<64x128xf32>
    %335 = arith.mulf %332, %334 : vector<64x128xf32>
    %c0_321 = arith.constant 0 : index
    %c0_322 = arith.constant 0 : index
    %336 = vector.load %arg4[%c0_321, %c0_322] : memref<1x128xf32, #tpu.memory_space<vmem>>, vector<1x128xf32>
    %337 = vector.broadcast %336 : vector<1x128xf32> to vector<64x128xf32>
    %338 = arith.addf %335, %337 : vector<64x128xf32>
    %cst_323 = arith.constant 0.000000e+00 : f32
    %339 = vector.broadcast %cst_323 : f32 to vector<64x128xf32>
    %340 = arith.cmpf ogt, %338, %339 : vector<64x128xf32>
    %341 = math.exp %338 : vector<64x128xf32>
    %cst_324 = arith.constant 1.000000e+00 : f32
    %342 = vector.broadcast %cst_324 : f32 to vector<64x128xf32>
    %343 = arith.subf %341, %342 : vector<64x128xf32>
    %344 = arith.select %340, %338, %343 : vector<64x128xi1>, vector<64x128xf32>
    %c0_325 = arith.constant 0 : index
    %c0_326 = arith.constant 0 : index
    %c0_327 = arith.constant 0 : index
    %345 = vector.load %arg5[%c0_325, %c0_326, %c0_327] : memref<1x64x128xf32, #tpu.memory_space<vmem>>, vector<1x64x128xf32>
    %346 = vector.shape_cast %345 : vector<1x64x128xf32> to vector<64x128xf32>
    %347 = vector.shape_cast %344 : vector<64x128xf32> to vector<1x64x128xf32>
    tpu.vector_store %arg5[%c0_325, %c0_326, %c0_327], %347 {strides = array<i32>} : memref<1x64x128xf32, #tpu.memory_space<vmem>>, vector<1x64x128xf32>,
    return
  }
  func.func @transform_0(%arg0: i32) -> (i32, i32, i32, i32, i32) {
    %c0_i32 = arith.constant 0 : i32
    %c0_i32_0 = arith.constant 0 : i32
    %c0_i32_1 = arith.constant 0 : i32
    %c0_i32_2 = arith.constant 0 : i32
    %c0_i32_3 = arith.constant 0 : i32
    return %arg0, %c0_i32, %c0_i32_0, %c0_i32_1, %c0_i32_2 : i32, i32, i32, i32, i32
  }
  func.func @transform_1(%arg0: i32) -> (i32, i32, i32) {
    %c0_i32 = arith.constant 0 : i32
    %c0_i32_0 = arith.constant 0 : i32
    %c0_i32_1 = arith.constant 0 : i32
    %c0_i32_2 = arith.constant 0 : i32
    return %c0_i32, %c0_i32_0, %c0_i32_1 : i32, i32, i32
  }
  func.func @transform_2(%arg0: i32) -> (i32, i32) {
    %c0_i32 = arith.constant 0 : i32
    %c0_i32_0 = arith.constant 0 : i32
    %c0_i32_1 = arith.constant 0 : i32
    return %c0_i32, %c0_i32_0 : i32, i32
  }
  func.func @transform_3(%arg0: i32) -> (i32, i32) {
    %c0_i32 = arith.constant 0 : i32
    %c0_i32_0 = arith.constant 0 : i32
    %c0_i32_1 = arith.constant 0 : i32
    return %c0_i32, %c0_i32_0 : i32, i32
  }
  func.func @transform_4(%arg0: i32) -> (i32, i32, i32) {
    %c0_i32 = arith.constant 0 : i32
    %c0_i32_0 = arith.constant 0 : i32
    %c0_i32_1 = arith.constant 0 : i32
    return %arg0, %c0_i32, %c0_i32_0 : i32, i32, i32
  }
}

</mosaic_0001>

<llo_original>
// kernel: tpu_custom_call.1
$region0: #{tpu_custom_call.1}
  #allocation0 [shape = 'u32[]', space=smem, size = 0x4, offset = 0x4, fixed_abs, tag = 'smem constant byte address 0x4 - core index']
  #allocation1 [shape = 'u32[144,128]{1,0:T(1,128)}', space=vmem, size = 0x12000, scoped, tag = 'internal scratch']
  %s0 = inlined_call_operand.vmem [shape: bf16[2,4,9,9,4], index: 0, kind: input, shape index: {}]
  %s1 = inlined_call_operand.vmem [shape: bf16[9,4,128], index: 1, kind: input, shape index: {}]
  %s2 = inlined_call_operand.vmem [shape: f32[1,128], index: 2, kind: input, shape index: {}]
  %s3 = inlined_call_operand.vmem [shape: f32[1,128], index: 3, kind: input, shape index: {}]
  %s4 = inlined_call_operand.hbm [shape: f32[2,64,128], index: 4, kind: output, shape index: {}]
  %s5 = sld [smem:[#allocation0]]
  $region49: #{tpu_custom_call.1} parent=0
    _
  %s7 = ssub.s32 1, %s5
  %s8 = scalar_select 0, %s7, %s5
  $region1: #{tpu_custom_call.1} parent=0
    #allocation2 [shape = 'u8[65536]{0}', space=vmem, size = 0x10000, scoped, tag = 'output window, operand 0']
    #allocation3 [shape = 's32[2]{0}', space=sflag, size = 0x8, scoped, tag = 'scoped memory for tpu_custom_call.1']
    %9 = vsyncpa [#allocation3], 0
    %s10 = scalar_lea.sflag [#allocation3], 1
    %11 = vsyncpa %s10, 0
    loop: start=0, step=1, limit=4
    $region2: #{tpu_custom_call.1} parent=1 // loop_pre_header
      _
    $region3: #{tpu_custom_call.1} parent=1 // loop_header
      %s13 = sphi 0, %s17
      %p14 = scmp.ge.s32.totalorder %s13, 4
      %s23 = sphi 0, %s25
      %s26 = sphi 0, %s23
      %s27 = sphi 0, %s26
      %s43 = sphi 0, %s27
      %s47 = sphi 0, %s47
      %s49 = sphi 0, %s47
      %s50 = sphi 0, %s49
      %s64 = sphi 0, %s50
      %s68 = sphi 0, %s68
      %s70 = sphi 0, %s68
      %s71 = sphi 0, %s70
      %s85 = sphi 0, %s71
      %s89 = sphi 0, %s89
      %s91 = sphi 0, %s89
      %s92 = sphi 0, %s91
      %s106 = sphi 0, %s92
      %s112 = sphi 0, %s114
      %s115 = sphi 0, %s112
      %s116 = sphi 0, %s115
      %s132 = sphi 0, %s116
    $region4: #{tpu_custom_call.1} parent=1 // loop_header_branch
      %16 = sbr.rel (%p14) target = $region8
    $region5: #{tpu_custom_call.1} parent=1 // loop_body
      %s18 = ssub.s32 %s13, 1
      %s19 = ssub.s32 %s13, 2
      %s20 = sadd.s32 %s13, 1
      %s21 = ssub.s32 %s13, %s20
      %p22 = scmp.eq.s32.totalorder %s21, 0
      %s24 = sadd.s32 %s23, 1
      %s25 = scalar_select %p22, %s23, %s24
      %p28 = pneg %p22
      %p29 = scmp.eq.s32.totalorder %s13, 1
      %p30 = por %p28, %p29
      %p31 = scmp.ne.s32.totalorder %s23, %s26
      %p32 = scmp.eq.s32.totalorder %s13, 0
      %p33 = por %p31, %p32
      %p34 = scmp.ne.s32.totalorder %s23, %s26
      %p35 = scmp.eq.s32.totalorder %s18, 1
      %p36 = por %p34, %p35
      %p37 = scmp.ne.s32.totalorder %s26, %s27
      %p38 = scmp.eq.s32.totalorder %s18, 0
      %p39 = por %p37, %p38
      %p40 = scmp.ne.s32.totalorder %s26, %s27
      %p41 = scmp.eq.s32.totalorder %s19, 1
      %p42 = por %p40, %p41
      %p44 = scmp.ne.s32.totalorder %s27, %s43
      %p45 = scmp.eq.s32.totalorder %s19, 0
      %p46 = por %p44, %p45
      %s48 = sadd.s32 %s47, 1
      %p51 = scmp.eq.s32.totalorder %s13, 1
      %p52 = scmp.ne.s32.totalorder %s47, %s49
      %p53 = scmp.eq.s32.totalorder %s13, 0
      %p54 = por %p52, %p53
      %p55 = scmp.ne.s32.totalorder %s47, %s49
      %p56 = scmp.eq.s32.totalorder %s18, 1
      %p57 = por %p55, %p56
      %p58 = scmp.ne.s32.totalorder %s49, %s50
      %p59 = scmp.eq.s32.totalorder %s18, 0
      %p60 = por %p58, %p59
      %p61 = scmp.ne.s32.totalorder %s49, %s50
      %p62 = scmp.eq.s32.totalorder %s19, 1
      %p63 = por %p61, %p62
      %p65 = scmp.ne.s32.totalorder %s50, %s64
      %p66 = scmp.eq.s32.totalorder %s19, 0
      %p67 = por %p65, %p66
      %s69 = sadd.s32 %s68, 1
      %p72 = scmp.eq.s32.totalorder %s13, 1
      %p73 = scmp.ne.s32.totalorder %s68, %s70
      %p74 = scmp.eq.s32.totalorder %s13, 0
      %p75 = por %p73, %p74
      %p76 = scmp.ne.s32.totalorder %s68, %s70
      %p77 = scmp.eq.s32.totalorder %s18, 1
      %p78 = por %p76, %p77
      %p79 = scmp.ne.s32.totalorder %s70, %s71
      %p80 = scmp.eq.s32.totalorder %s18, 0
      %p81 = por %p79, %p80
      %p82 = scmp.ne.s32.totalorder %s70, %s71
      %p83 = scmp.eq.s32.totalorder %s19, 1
      %p84 = por %p82, %p83
      %p86 = scmp.ne.s32.totalorder %s71, %s85
      %p87 = scmp.eq.s32.totalorder %s19, 0
      %p88 = por %p86, %p87
      %s90 = sadd.s32 %s89, 1
      %p93 = scmp.eq.s32.totalorder %s13, 1
      %p94 = scmp.ne.s32.totalorder %s89, %s91
      %p95 = scmp.eq.s32.totalorder %s13, 0
      %p96 = por %p94, %p95
      %p97 = scmp.ne.s32.totalorder %s89, %s91
      %p98 = scmp.eq.s32.totalorder %s18, 1
      %p99 = por %p97, %p98
      %p100 = scmp.ne.s32.totalorder %s91, %s92
      %p101 = scmp.eq.s32.totalorder %s18, 0
      %p102 = por %p100, %p101
      %p103 = scmp.ne.s32.totalorder %s91, %s92
      %p104 = scmp.eq.s32.totalorder %s19, 1
      %p105 = por %p103, %p104
      %p107 = scmp.ne.s32.totalorder %s92, %s106
      %p108 = scmp.eq.s32.totalorder %s19, 0
      %p109 = por %p107, %p108
      %s110 = ssub.s32 %s13, %s20
      %p111 = scmp.eq.s32.totalorder %s110, 0
      %s113 = sadd.s32 %s112, 1
      %s114 = scalar_select %p111, %s112, %s113
      %p117 = pneg %p111
      %p118 = scmp.eq.s32.totalorder %s13, 1
      %p119 = por %p117, %p118
      %p120 = scmp.ne.s32.totalorder %s112, %s115
      %p121 = scmp.eq.s32.totalorder %s13, 0
      %p122 = por %p120, %p121
      %p123 = scmp.ne.s32.totalorder %s112, %s115
      %p124 = scmp.eq.s32.totalorder %s18, 1
      %p125 = por %p123, %p124
      %p126 = scmp.ne.s32.totalorder %s115, %s116
      %p127 = scmp.eq.s32.totalorder %s18, 0
      %p128 = por %p126, %p127
      %p129 = scmp.ne.s32.totalorder %s115, %s116
      %p130 = scmp.eq.s32.totalorder %s19, 1
      %p131 = por %p129, %p130
      %p133 = scmp.ne.s32.totalorder %s116, %s132
      %p134 = scmp.eq.s32.totalorder %s19, 0
      %p135 = por %p133, %p134
      %p136 = scmp.le.s32.totalorder 1, %s13
      %p137 = scmp.lt.s32.totalorder %s13, 3
      %p138 = pnand %p136, %p137
      %p139 = pneg %p138
      // Predicated region
      $region9: #{tpu_custom_call.1} parent=5 // pred_check
        _
      $region10: #{tpu_custom_call.1} parent=5 // pred_check_branch
        %141 = sbr.rel (%p138) target = $region12
      $region11: #{tpu_custom_call.1} parent=5 // pred_region
        %s142 = ssub.s32 %s13, 1
        // Predicated region
        $region13: #{tpu_custom_call.1} parent=11 // pred_check
          %p143 = pneg %p60
        $region14: #{tpu_custom_call.1} parent=11 // pred_check_branch
          %145 = sbr.rel (%p143) target = $region16
        $region15: #{tpu_custom_call.1} parent=11 // pred_region
          _
        $region16: #{tpu_custom_call.1} parent=11 // pred_fallthru
          _
        // Predicated region
        $region17: #{tpu_custom_call.1} parent=11 // pred_check
          %p146 = pneg %p81
        $region18: #{tpu_custom_call.1} parent=11 // pred_check_branch
          %148 = sbr.rel (%p146) target = $region20
        $region19: #{tpu_custom_call.1} parent=11 // pred_region
          _
        $region20: #{tpu_custom_call.1} parent=11 // pred_fallthru
          _
        // Predicated region
        $region21: #{tpu_custom_call.1} parent=11 // pred_check
          %p149 = pneg %p102
        $region22: #{tpu_custom_call.1} parent=11 // pred_check_branch
          %151 = sbr.rel (%p149) target = $region24
        $region23: #{tpu_custom_call.1} parent=11 // pred_region
          _
        $region24: #{tpu_custom_call.1} parent=11 // pred_fallthru
          _
      $region12: #{tpu_custom_call.1} parent=5 // pred_fallthru
        _
      %p152 = scmp.lt.s32.totalorder %s13, 2
      // Predicated region
      $region25: #{tpu_custom_call.1} parent=5 // pred_check
        %p153 = pneg %p152
      $region26: #{tpu_custom_call.1} parent=5 // pred_check_branch
        %155 = sbr.rel (%p153) target = $region28
      $region27: #{tpu_custom_call.1} parent=5 // pred_region
        // Predicated region
        $region29: #{tpu_custom_call.1} parent=27 // pred_check
          %p156 = pneg %p33
        $region30: #{tpu_custom_call.1} parent=27 // pred_check_branch
          %158 = sbr.rel (%p156) target = $region32
        $region31: #{tpu_custom_call.1} parent=27 // pred_region
          %p159 = scmp.lt.s32.totalorder %s13, 1
          %s160 = scalar_select %p159, %s13, 1
          %s161 = smul.addr %s160, 72
          %s162 = smul.addr %s161, 4
          %s163 = scalar_lea.vmem %s0, %s162
        $region32: #{tpu_custom_call.1} parent=27 // pred_fallthru
          _
      $region28: #{tpu_custom_call.1} parent=5 // pred_fallthru
        _
      %p164 = scmp.le.s32.totalorder 1, %s13
      %p165 = scmp.lt.s32.totalorder %s13, 3
      %p166 = pnand %p164, %p165
      %p167 = pneg %p166
      // Predicated region
      $region33: #{tpu_custom_call.1} parent=5 // pred_check
        _
      $region34: #{tpu_custom_call.1} parent=5 // pred_check_branch
        %169 = sbr.rel (%p166) target = $region36
      $region35: #{tpu_custom_call.1} parent=5 // pred_region
        %s170 = ssub.s32 %s13, 1
        %p171 = scmp.lt.s32.totalorder %s18, 1
        %s172 = scalar_select %p171, %s18, 1
        %s173 = smul.addr %s172, 72
        %s174 = smul.addr %s173, 4
        %s175 = scalar_lea.vmem %s0, %s174
        %p176 = pneg %p39
        %p177 = pneg %p36
        %p178 = pneg %p60
        %p179 = pneg %p57
        %p180 = pneg %p81
        %p181 = pneg %p78
        %p182 = pneg %p102
        %p183 = pneg %p99
        %p184 = pneg %p128
        %p185 = pneg %p125
        %s186 = sand.u32 %s115, 1
        %s187 = scalar_lea.sflag [#allocation3], %s186
        %s188 = sand.u32 %s115, 1
        %s189 = smul.addr %s188, 64
        %s190 = scalar_lea.vmem [#allocation2], %s189
        %p191 = scmp.lt.s32.totalorder %s18, 1
        %s192 = scalar_select %p191, %s18, 1
        %s193 = smul.addr %s192, 72
        %s194 = smul.addr %s193, 4
        %s195 = scalar_lea.vmem %s0, %s194
        %v197 = vld [vmem:[%s195] sm:$0xf]
        %v198 = vld [vmem:[%s195 + $0x8] sm:$0xf]
        %v199 = vld [vmem:[%s195 + $0x10] sm:$0xf]
        %v200 = vld [vmem:[%s195 + $0x18] sm:$0xf]
        %v201 = vld [vmem:[%s195 + $0x20] sm:$0xf]
        %v202 = vld [vmem:[%s195 + $0x28] sm:$0xf]
        %v203 = vld [vmem:[%s195 + $0x30] sm:$0xf]
        %v204 = vld [vmem:[%s195 + $0x38] sm:$0xf]
        %v205 = vunpack.c.l.bf16 %v197
        %v206 = vunpack.c.l.bf16 %v198
        %v207 = vunpack.c.l.bf16 %v199
        %v208 = vunpack.c.l.bf16 %v200
        %v209 = vunpack.c.l.bf16 %v201
        %v210 = vunpack.c.l.bf16 %v202
        %v211 = vunpack.c.l.bf16 %v203
        %v212 = vunpack.c.l.bf16 %v204
        %v213 = vpack.c.bf16 %v206, %v205
        %v214 = vpack.c.bf16 %v208, %v207
        %v215 = vpack.c.bf16 %v210, %v209
        %v216 = vpack.c.bf16 %v212, %v211
        %v217 = vld [vmem:[%s1] sm:$0x3]
        %s218 = scalar_lea.vmem %s195, 72
        %v219 = vld [vmem:[%s218] sm:$0xf]
        %v220 = vld [vmem:[%s218 + $0x8] sm:$0xf]
        %v221 = vld [vmem:[%s218 + $0x10] sm:$0xf]
        %v222 = vld [vmem:[%s218 + $0x18] sm:$0xf]
        %v223 = vld [vmem:[%s218 + $0x20] sm:$0xf]
        %v224 = vld [vmem:[%s218 + $0x28] sm:$0xf]
        %v225 = vld [vmem:[%s218 + $0x30] sm:$0xf]
        %v226 = vld [vmem:[%s218 + $0x38] sm:$0xf]
        %v227 = vunpack.c.l.bf16 %v219
        %v228 = vunpack.c.l.bf16 %v220
        %v229 = vunpack.c.l.bf16 %v221
        %v230 = vunpack.c.l.bf16 %v222
        %v231 = vunpack.c.l.bf16 %v223
        %v232 = vunpack.c.l.bf16 %v224
        %v233 = vunpack.c.l.bf16 %v225
        %v234 = vunpack.c.l.bf16 %v226
        %v235 = vpack.c.bf16 %v228, %v227
        %v236 = vpack.c.bf16 %v230, %v229
        %v237 = vpack.c.bf16 %v232, %v231
        %v238 = vpack.c.bf16 %v234, %v233
        %s239 = scalar_lea.vmem %s1, 2
        %v240 = vld [vmem:[%s239] sm:$0x3]
        %vm241 = vcmask 31744
        %v243 = vsel %vm241, %v235, 0
        %v246 = vsel %vm241, %v236, 0
        %v249 = vsel %vm241, %v237, 0
        %v252 = vsel %vm241, %v238, 0
        %vm254 = vcmask 1041408
        %v256 = vsel %vm254, %v240, 0
        %258 = vmatprep.subr.bf16.mxu0 0
        %259 = vmatpush1.bf16.msra.mxu0 %v256
        %260 = vmatprep.subr.bf16.mxu0 0
        %261 = vmatpush1.bf16.msra.mxu0 0
        %262 = vmatprep.subr.bf16.mxu0 0
        %263 = vmatpush1.bf16.msra.mxu0 0
        %264 = vmatprep.subr.bf16.mxu0 0
        %265 = vmatpush1.bf16.msra.mxu0 0
        %266 = vmatprep.subr.bf16.mxu0 0
        %267 = vmatpush1.bf16.msra.mxu0 0
        %268 = vmatprep.subr.bf16.mxu0 0
        %269 = vmatpush1.bf16.msra.mxu0 0
        %270 = vmatprep.subr.bf16.mxu0 0
        %271 = vmatpush1.bf16.msra.mxu0 0
        %272 = vmatprep.subr.bf16.mxu0 0
        %273 = vmatpush1.bf16.msra.mxu0 0
        %274 = vmatprep.subr.bf16.mxu0 0
        %275 = vmatpush1.bf16.msra.mxu0 0
        %276 = vmatprep.subr.bf16.mxu0 0
        %277 = vmatpush1.bf16.msra.mxu0 0
        %278 = vmatprep.subr.bf16.mxu0 0
        %279 = vmatpush1.bf16.msra.mxu0 0
        %280 = vmatprep.subr.bf16.mxu0 0
        %281 = vmatpush1.bf16.msra.mxu0 0
        %282 = vmatprep.subr.bf16.mxu0 0
        %283 = vmatpush1.bf16.msra.mxu0 0
        %284 = vmatprep.subr.bf16.mxu0 0
        %285 = vmatpush1.bf16.msra.mxu0 0
        %286 = vmatprep.subr.bf16.mxu0 0
        %287 = vmatpush1.bf16.msra.mxu0 0
        %288 = vmatprep.subr.bf16.mxu0 0
        %289 = vmatpush1.bf16.msra.mxu0 0
        %290 = vmatprep.mubr.bf16.mxu0 0
        %291 = vmatmul.mubr.bf16.gmra.mrb[0].mxu0 %v243
        %v292 = vpop.f32.mrb[0].mxu0
        %v293 = vadd.f32 0.0, %v292
        %v294 = vpop.f32.mrb[0].mxu0
        %v295 = vpop.f32.mrb[0].mxu0
        %v296 = vadd.f32 0.0, %v295
        %v297 = vpop.f32.mrb[0].mxu0
        %298 = vmatprep.mubr.bf16.mxu0 0
        %299 = vmatmul.mubr.bf16.gmra.mrb[0].mxu0 %v246
        %v300 = vpop.f32.mrb[0].mxu0
        %v301 = vadd.f32 0.0, %v300
        %v302 = vpop.f32.mrb[0].mxu0
        %v303 = vpop.f32.mrb[0].mxu0
        %v304 = vadd.f32 0.0, %v303
        %v305 = vpop.f32.mrb[0].mxu0
        %306 = vmatprep.mubr.bf16.mxu0 0
        %307 = vmatmul.mubr.bf16.gmra.mrb[0].mxu0 %v249
        %v308 = vpop.f32.mrb[0].mxu0
        %v309 = vadd.f32 0.0, %v308
        %v310 = vpop.f32.mrb[0].mxu0
        %v311 = vpop.f32.mrb[0].mxu0
        %v312 = vadd.f32 0.0, %v311
        %v313 = vpop.f32.mrb[0].mxu0
        %314 = vmatprep.mubr.bf16.mxu0 0
        %315 = vmatmul.mubr.bf16.gmra.mrb[0].mxu0 %v252
        %v316 = vpop.f32.mrb[0].mxu0
        %v317 = vadd.f32 0.0, %v316
        %v318 = vpop.f32.mrb[0].mxu0
        %v319 = vpop.f32.mrb[0].mxu0
        %v320 = vadd.f32 0.0, %v319
        %v321 = vpop.f32.mrb[0].mxu0
        %322 = vdwg.mxu0
        %v324 = vsel %vm241, %v213, 0
        %v327 = vsel %vm241, %v214, 0
        %v330 = vsel %vm241, %v215, 0
        %v333 = vsel %vm241, %v216, 0
        %v336 = vsel %vm254, %v217, 0
        %338 = vmatprep.subr.bf16.mxu0 0
        %339 = vmatpush1.bf16.msra.mxu0 %v336
        %340 = vmatprep.subr.bf16.mxu0 0
        %341 = vmatpush1.bf16.msra.mxu0 0
        %342 = vmatprep.subr.bf16.mxu0 0
        %343 = vmatpush1.bf16.msra.mxu0 0
        %344 = vmatprep.subr.bf16.mxu0 0
        %345 = vmatpush1.bf16.msra.mxu0 0
        %346 = vmatprep.subr.bf16.mxu0 0
        %347 = vmatpush1.bf16.msra.mxu0 0
        %348 = vmatprep.subr.bf16.mxu0 0
        %349 = vmatpush1.bf16.msra.mxu0 0
        %350 = vmatprep.subr.bf16.mxu0 0
        %351 = vmatpush1.bf16.msra.mxu0 0
        %352 = vmatprep.subr.bf16.mxu0 0
        %353 = vmatpush1.bf16.msra.mxu0 0
        %354 = vmatprep.subr.bf16.mxu0 0
        %355 = vmatpush1.bf16.msra.mxu0 0
        %356 = vmatprep.subr.bf16.mxu0 0
        %357 = vmatpush1.bf16.msra.mxu0 0
        %358 = vmatprep.subr.bf16.mxu0 0
        %359 = vmatpush1.bf16.msra.mxu0 0
        %360 = vmatprep.subr.bf16.mxu0 0
        %361 = vmatpush1.bf16.msra.mxu0 0
        %362 = vmatprep.subr.bf16.mxu0 0
        %363 = vmatpush1.bf16.msra.mxu0 0
        %364 = vmatprep.subr.bf16.mxu0 0
        %365 = vmatpush1.bf16.msra.mxu0 0
        %366 = vmatprep.subr.bf16.mxu0 0
        %367 = vmatpush1.bf16.msra.mxu0 0
        %368 = vmatprep.subr.bf16.mxu0 0
        %369 = vmatpush1.bf16.msra.mxu0 0
        %370 = vmatprep.mubr.bf16.mxu0 0
        %371 = vmatmul.mubr.bf16.gmra.mrb[0].mxu0 %v324
        %v372 = vpop.f32.mrb[0].mxu0
        %v373 = vadd.f32 %v293, %v372
        %v374 = vpop.f32.mrb[0].mxu0
        %v375 = vpop.f32.mrb[0].mxu0
        %v376 = vadd.f32 %v296, %v375
        %v377 = vpop.f32.mrb[0].mxu0
        %378 = vmatprep.mubr.bf16.mxu0 0
        %379 = vmatmul.mubr.bf16.gmra.mrb[0].mxu0 %v327
        %v380 = vpop.f32.mrb[0].mxu0
        %v381 = vadd.f32 %v301, %v380
        %v382 = vpop.f32.mrb[0].mxu0
        %v383 = vpop.f32.mrb[0].mxu0
        %v384 = vadd.f32 %v304, %v383
        %v385 = vpop.f32.mrb[0].mxu0
        %386 = vmatprep.mubr.bf16.mxu0 0
        %387 = vmatmul.mubr.bf16.gmra.mrb[0].mxu0 %v330
        %v388 = vpop.f32.mrb[0].mxu0
        %v389 = vadd.f32 %v309, %v388
        %v390 = vpop.f32.mrb[0].mxu0
        %v391 = vpop.f32.mrb[0].mxu0
        %v392 = vadd.f32 %v312, %v391
        %v393 = vpop.f32.mrb[0].mxu0
        %394 = vmatprep.mubr.bf16.mxu0 0
        %395 = vmatmul.mubr.bf16.gmra.mrb[0].mxu0 %v333
        %v396 = vpop.f32.mrb[0].mxu0
        %v397 = vadd.f32 %v317, %v396
        %v398 = vpop.f32.mrb[0].mxu0
        %v399 = vpop.f32.mrb[0].mxu0
        %v400 = vadd.f32 %v320, %v399
        %v401 = vpop.f32.mrb[0].mxu0
        %402 = vdwg.mxu0
        %v403 = vld [vmem:[%s195] sm:$0xf]
        %v404 = vld [vmem:[%s195 + $0x4] sm:$0x1]
        %v405 = vld [vmem:[%s195 + $0x8] sm:$0xf]
        %v406 = vld [vmem:[%s195 + $0xc] sm:$0x1]
        %v407 = vld [vmem:[%s195 + $0x10] sm:$0xf]
        %v408 = vld [vmem:[%s195 + $0x14] sm:$0x1]
        %v409 = vld [vmem:[%s195 + $0x18] sm:$0xf]
        %v410 = vld [vmem:[%s195 + $0x1c] sm:$0x1]
        %v411 = vld [vmem:[%s195 + $0x20] sm:$0xf]
        %v412 = vld [vmem:[%s195 + $0x24] sm:$0x1]
        %v413 = vld [vmem:[%s195 + $0x28] sm:$0xf]
        %v414 = vld [vmem:[%s195 + $0x2c] sm:$0x1]
        %v415 = vld [vmem:[%s195 + $0x30] sm:$0xf]
        %v416 = vld [vmem:[%s195 + $0x34] sm:$0x1]
        %v417 = vld [vmem:[%s195 + $0x38] sm:$0xf]
        %v418 = vld [vmem:[%s195 + $0x3c] sm:$0x1]
        %v419 = vunpack.c.l.bf16 %v403
        %v420 = vunpack.c.l.bf16 %v404
        %v421 = vunpack.c.l.bf16 %v405
        %v422 = vunpack.c.l.bf16 %v406
        %v423 = vunpack.c.l.bf16 %v407
        %v424 = vunpack.c.l.bf16 %v408
        %v425 = vunpack.c.l.bf16 %v409
        %v426 = vunpack.c.l.bf16 %v410
        %v427 = vunpack.c.l.bf16 %v411
        %v428 = vunpack.c.l.bf16 %v412
        %v429 = vunpack.c.l.bf16 %v413
        %v430 = vunpack.c.l.bf16 %v414
        %v431 = vunpack.c.l.bf16 %v415
        %v432 = vunpack.c.l.bf16 %v416
        %v433 = vunpack.c.l.bf16 %v417
        %v434 = vunpack.c.l.bf16 %v418
        %vm451 = vcmask 1046528
        %v452 = vrot.slane %v419, 1
        %v453 = vrot.slane %v420, 1
        %v454 = vsel %vm451, %v452, %v453
        %v455 = vrot.slane %v421, 1
        %v456 = vrot.slane %v422, 1
        %v457 = vsel %vm451, %v455, %v456
        %v458 = vrot.slane %v423, 1
        %v459 = vrot.slane %v424, 1
        %v460 = vsel %vm451, %v458, %v459
        %v461 = vrot.slane %v425, 1
        %v462 = vrot.slane %v426, 1
        %v463 = vsel %vm451, %v461, %v462
        %v464 = vrot.slane %v427, 1
        %v465 = vrot.slane %v428, 1
        %v466 = vsel %vm451, %v464, %v465
        %v467 = vrot.slane %v429, 1
        %v468 = vrot.slane %v430, 1
        %v469 = vsel %vm451, %v467, %v468
        %v470 = vrot.slane %v431, 1
        %v471 = vrot.slane %v432, 1
        %v472 = vsel %vm451, %v470, %v471
        %v473 = vrot.slane %v433, 1
        %v474 = vrot.slane %v434, 1
        %v475 = vsel %vm451, %v473, %v474
        %v484 = vpack.c.bf16 %v457, %v454
        %v485 = vpack.c.bf16 %v463, %v460
        %v486 = vpack.c.bf16 %v469, %v466
        %v487 = vpack.c.bf16 %v475, %v472
        %s488 = scalar_lea.vmem %s1, 4
        %v489 = vld [vmem:[%s488] sm:$0x3]
        %v491 = vsel %vm241, %v484, 0
        %v494 = vsel %vm241, %v485, 0
        %v497 = vsel %vm241, %v486, 0
        %v500 = vsel %vm241, %v487, 0
        %v503 = vsel %vm254, %v489, 0
        %505 = vmatprep.subr.bf16.mxu0 0
        %506 = vmatpush1.bf16.msra.mxu0 %v503
        %507 = vmatprep.subr.bf16.mxu0 0
        %508 = vmatpush1.bf16.msra.mxu0 0
        %509 = vmatprep.subr.bf16.mxu0 0
        %510 = vmatpush1.bf16.msra.mxu0 0
        %511 = vmatprep.subr.bf16.mxu0 0
        %512 = vmatpush1.bf16.msra.mxu0 0
        %513 = vmatprep.subr.bf16.mxu0 0
        %514 = vmatpush1.bf16.msra.mxu0 0
        %515 = vmatprep.subr.bf16.mxu0 0
        %516 = vmatpush1.bf16.msra.mxu0 0
        %517 = vmatprep.subr.bf16.mxu0 0
        %518 = vmatpush1.bf16.msra.mxu0 0
        %519 = vmatprep.subr.bf16.mxu0 0
        %520 = vmatpush1.bf16.msra.mxu0 0
        %521 = vmatprep.subr.bf16.mxu0 0
        %522 = vmatpush1.bf16.msra.mxu0 0
        %523 = vmatprep.subr.bf16.mxu0 0
        %524 = vmatpush1.bf16.msra.mxu0 0
        %525 = vmatprep.subr.bf16.mxu0 0
        %526 = vmatpush1.bf16.msra.mxu0 0
        %527 = vmatprep.subr.bf16.mxu0 0
        %528 = vmatpush1.bf16.msra.mxu0 0
        %529 = vmatprep.subr.bf16.mxu0 0
        %530 = vmatpush1.bf16.msra.mxu0 0
        %531 = vmatprep.subr.bf16.mxu0 0
        %532 = vmatpush1.bf16.msra.mxu0 0
        %533 = vmatprep.subr.bf16.mxu0 0
        %534 = vmatpush1.bf16.msra.mxu0 0
        %535 = vmatprep.subr.bf16.mxu0 0
        %536 = vmatpush1.bf16.msra.mxu0 0
        %537 = vmatprep.mubr.bf16.mxu0 0
        %538 = vmatmul.mubr.bf16.gmra.mrb[0].mxu0 %v491
        %v539 = vpop.f32.mrb[0].mxu0
        %v540 = vadd.f32 0.0, %v539
        %v541 = vpop.f32.mrb[0].mxu0
        %v542 = vpop.f32.mrb[0].mxu0
        %v543 = vadd.f32 0.0, %v542
        %v544 = vpop.f32.mrb[0].mxu0
        %545 = vmatprep.mubr.bf16.mxu0 0
        %546 = vmatmul.mubr.bf16.gmra.mrb[0].mxu0 %v494
        %v547 = vpop.f32.mrb[0].mxu0
        %v548 = vadd.f32 0.0, %v547
        %v549 = vpop.f32.mrb[0].mxu0
        %v550 = vpop.f32.mrb[0].mxu0
        %v551 = vadd.f32 0.0, %v550
        %v552 = vpop.f32.mrb[0].mxu0
        %553 = vmatprep.mubr.bf16.mxu0 0
        %554 = vmatmul.mubr.bf16.gmra.mrb[0].mxu0 %v497
        %v555 = vpop.f32.mrb[0].mxu0
        %v556 = vadd.f32 0.0, %v555
        %v557 = vpop.f32.mrb[0].mxu0
        %v558 = vpop.f32.mrb[0].mxu0
        %v559 = vadd.f32 0.0, %v558
        %v560 = vpop.f32.mrb[0].mxu0
        %561 = vmatprep.mubr.bf16.mxu0 0
        %562 = vmatmul.mubr.bf16.gmra.mrb[0].mxu0 %v500
        %v563 = vpop.f32.mrb[0].mxu0
        %v564 = vadd.f32 0.0, %v563
        %v565 = vpop.f32.mrb[0].mxu0
        %v566 = vpop.f32.mrb[0].mxu0
        %v567 = vadd.f32 0.0, %v566
        %v568 = vpop.f32.mrb[0].mxu0
        %569 = vdwg.mxu0
        %v570 = vadd.f32 %v373, %v540
        %v571 = vadd.f32 %v376, %v543
        %v572 = vadd.f32 %v381, %v548
        %v573 = vadd.f32 %v384, %v551
        %v574 = vadd.f32 %v389, %v556
        %v575 = vadd.f32 %v392, %v559
        %v576 = vadd.f32 %v397, %v564
        %v577 = vadd.f32 %v400, %v567
        %s578 = scalar_lea.vmem %s195, 144
        %v579 = vld [vmem:[%s578] sm:$0xf]
        %v580 = vld [vmem:[%s578 + $0x8] sm:$0xf]
        %v581 = vld [vmem:[%s578 + $0x10] sm:$0xf]
        %v582 = vld [vmem:[%s578 + $0x18] sm:$0xf]
        %v583 = vld [vmem:[%s578 + $0x20] sm:$0xf]
        %v584 = vld [vmem:[%s578 + $0x28] sm:$0xf]
        %v585 = vld [vmem:[%s578 + $0x30] sm:$0xf]
        %v586 = vld [vmem:[%s578 + $0x38] sm:$0xf]
        %v587 = vunpack.c.l.bf16 %v579
        %v588 = vunpack.c.l.bf16 %v580
        %v589 = vunpack.c.l.bf16 %v581
        %v590 = vunpack.c.l.bf16 %v582
        %v591 = vunpack.c.l.bf16 %v583
        %v592 = vunpack.c.l.bf16 %v584
        %v593 = vunpack.c.l.bf16 %v585
        %v594 = vunpack.c.l.bf16 %v586
        %v595 = vpack.c.bf16 %v588, %v587
        %v596 = vpack.c.bf16 %v590, %v589
        %v597 = vpack.c.bf16 %v592, %v591
        %v598 = vpack.c.bf16 %v594, %v593
        %s599 = scalar_lea.vmem %s1, 6
        %v600 = vld [vmem:[%s599] sm:$0x3]
        %v602 = vsel %vm241, %v595, 0
        %v605 = vsel %vm241, %v596, 0
        %v608 = vsel %vm241, %v597, 0
        %v611 = vsel %vm241, %v598, 0
        %v614 = vsel %vm254, %v600, 0
        %616 = vmatprep.subr.bf16.mxu0 0
        %617 = vmatpush1.bf16.msra.mxu0 %v614
        %618 = vmatprep.subr.bf16.mxu0 0
        %619 = vmatpush1.bf16.msra.mxu0 0
        %620 = vmatprep.subr.bf16.mxu0 0
        %621 = vmatpush1.bf16.msra.mxu0 0
        %622 = vmatprep.subr.bf16.mxu0 0
        %623 = vmatpush1.bf16.msra.mxu0 0
        %624 = vmatprep.subr.bf16.mxu0 0
        %625 = vmatpush1.bf16.msra.mxu0 0
        %626 = vmatprep.subr.bf16.mxu0 0
        %627 = vmatpush1.bf16.msra.mxu0 0
        %628 = vmatprep.subr.bf16.mxu0 0
        %629 = vmatpush1.bf16.msra.mxu0 0
        %630 = vmatprep.subr.bf16.mxu0 0
        %631 = vmatpush1.bf16.msra.mxu0 0
        %632 = vmatprep.subr.bf16.mxu0 0
        %633 = vmatpush1.bf16.msra.mxu0 0
        %634 = vmatprep.subr.bf16.mxu0 0
        %635 = vmatpush1.bf16.msra.mxu0 0
        %636 = vmatprep.subr.bf16.mxu0 0
        %637 = vmatpush1.bf16.msra.mxu0 0
        %638 = vmatprep.subr.bf16.mxu0 0
        %639 = vmatpush1.bf16.msra.mxu0 0
        %640 = vmatprep.subr.bf16.mxu0 0
        %641 = vmatpush1.bf16.msra.mxu0 0
        %642 = vmatprep.subr.bf16.mxu0 0
        %643 = vmatpush1.bf16.msra.mxu0 0
        %644 = vmatprep.subr.bf16.mxu0 0
        %645 = vmatpush1.bf16.msra.mxu0 0
        %646 = vmatprep.subr.bf16.mxu0 0
        %647 = vmatpush1.bf16.msra.mxu0 0
        %648 = vmatprep.mubr.bf16.mxu0 0
        %649 = vmatmul.mubr.bf16.gmra.mrb[0].mxu0 %v602
        %v650 = vpop.f32.mrb[0].mxu0
        %v651 = vadd.f32 0.0, %v650
        %v652 = vpop.f32.mrb[0].mxu0
        %v653 = vpop.f32.mrb[0].mxu0
        %v654 = vadd.f32 0.0, %v653
        %v655 = vpop.f32.mrb[0].mxu0
        %656 = vmatprep.mubr.bf16.mxu0 0
        %657 = vmatmul.mubr.bf16.gmra.mrb[0].mxu0 %v605
        %v658 = vpop.f32.mrb[0].mxu0
        %v659 = vadd.f32 0.0, %v658
        %v660 = vpop.f32.mrb[0].mxu0
        %v661 = vpop.f32.mrb[0].mxu0
        %v662 = vadd.f32 0.0, %v661
        %v663 = vpop.f32.mrb[0].mxu0
        %664 = vmatprep.mubr.bf16.mxu0 0
        %665 = vmatmul.mubr.bf16.gmra.mrb[0].mxu0 %v608
        %v666 = vpop.f32.mrb[0].mxu0
        %v667 = vadd.f32 0.0, %v666
        %v668 = vpop.f32.mrb[0].mxu0
        %v669 = vpop.f32.mrb[0].mxu0
        %v670 = vadd.f32 0.0, %v669
        %v671 = vpop.f32.mrb[0].mxu0
        %672 = vmatprep.mubr.bf16.mxu0 0
        %673 = vmatmul.mubr.bf16.gmra.mrb[0].mxu0 %v611
        %v674 = vpop.f32.mrb[0].mxu0
        %v675 = vadd.f32 0.0, %v674
        %v676 = vpop.f32.mrb[0].mxu0
        %v677 = vpop.f32.mrb[0].mxu0
        %v678 = vadd.f32 0.0, %v677
        %v679 = vpop.f32.mrb[0].mxu0
        %680 = vdwg.mxu0
        %v681 = vadd.f32 %v570, %v651
        %v682 = vadd.f32 %v571, %v654
        %v683 = vadd.f32 %v572, %v659
        %v684 = vadd.f32 %v573, %v662
        %v685 = vadd.f32 %v574, %v667
        %v686 = vadd.f32 %v575, %v670
        %v687 = vadd.f32 %v576, %v675
        %v688 = vadd.f32 %v577, %v678
        %s689 = scalar_lea.vmem %s195, 216
        %v690 = vld [vmem:[%s689] sm:$0xf]
        %v691 = vld [vmem:[%s689 + $0x8] sm:$0xf]
        %v692 = vld [vmem:[%s689 + $0x10] sm:$0xf]
        %v693 = vld [vmem:[%s689 + $0x18] sm:$0xf]
        %v694 = vld [vmem:[%s689 + $0x20] sm:$0xf]
        %v695 = vld [vmem:[%s689 + $0x28] sm:$0xf]
        %v696 = vld [vmem:[%s689 + $0x30] sm:$0xf]
        %v697 = vld [vmem:[%s689 + $0x38] sm:$0xf]
        %v698 = vunpack.c.l.bf16 %v690
        %v699 = vunpack.c.l.bf16 %v691
        %v700 = vunpack.c.l.bf16 %v692
        %v701 = vunpack.c.l.bf16 %v693
        %v702 = vunpack.c.l.bf16 %v694
        %v703 = vunpack.c.l.bf16 %v695
        %v704 = vunpack.c.l.bf16 %v696
        %v705 = vunpack.c.l.bf16 %v697
        %v706 = vpack.c.bf16 %v699, %v698
        %v707 = vpack.c.bf16 %v701, %v700
        %v708 = vpack.c.bf16 %v703, %v702
        %v709 = vpack.c.bf16 %v705, %v704
        %s710 = scalar_lea.vmem %s1, 8
        %v711 = vld [vmem:[%s710] sm:$0x3]
        %v713 = vsel %vm241, %v706, 0
        %v716 = vsel %vm241, %v707, 0
        %v719 = vsel %vm241, %v708, 0
        %v722 = vsel %vm241, %v709, 0
        %v725 = vsel %vm254, %v711, 0
        %727 = vmatprep.subr.bf16.mxu0 0
        %728 = vmatpush1.bf16.msra.mxu0 %v725
        %729 = vmatprep.subr.bf16.mxu0 0
        %730 = vmatpush1.bf16.msra.mxu0 0
        %731 = vmatprep.subr.bf16.mxu0 0
        %732 = vmatpush1.bf16.msra.mxu0 0
        %733 = vmatprep.subr.bf16.mxu0 0
        %734 = vmatpush1.bf16.msra.mxu0 0
        %735 = vmatprep.subr.bf16.mxu0 0
        %736 = vmatpush1.bf16.msra.mxu0 0
        %737 = vmatprep.subr.bf16.mxu0 0
        %738 = vmatpush1.bf16.msra.mxu0 0
        %739 = vmatprep.subr.bf16.mxu0 0
        %740 = vmatpush1.bf16.msra.mxu0 0
        %741 = vmatprep.subr.bf16.mxu0 0
        %742 = vmatpush1.bf16.msra.mxu0 0
        %743 = vmatprep.subr.bf16.mxu0 0
        %744 = vmatpush1.bf16.msra.mxu0 0
        %745 = vmatprep.subr.bf16.mxu0 0
        %746 = vmatpush1.bf16.msra.mxu0 0
        %747 = vmatprep.subr.bf16.mxu0 0
        %748 = vmatpush1.bf16.msra.mxu0 0
        %749 = vmatprep.subr.bf16.mxu0 0
        %750 = vmatpush1.bf16.msra.mxu0 0
        %751 = vmatprep.subr.bf16.mxu0 0
        %752 = vmatpush1.bf16.msra.mxu0 0
        %753 = vmatprep.subr.bf16.mxu0 0
        %754 = vmatpush1.bf16.msra.mxu0 0
        %755 = vmatprep.subr.bf16.mxu0 0
        %756 = vmatpush1.bf16.msra.mxu0 0
        %757 = vmatprep.subr.bf16.mxu0 0
        %758 = vmatpush1.bf16.msra.mxu0 0
        %759 = vmatprep.mubr.bf16.mxu0 0
        %760 = vmatmul.mubr.bf16.gmra.mrb[0].mxu0 %v713
        %v761 = vpop.f32.mrb[0].mxu0
        %v762 = vadd.f32 0.0, %v761
        %v763 = vpop.f32.mrb[0].mxu0
        %v764 = vpop.f32.mrb[0].mxu0
        %v765 = vadd.f32 0.0, %v764
        %v766 = vpop.f32.mrb[0].mxu0
        %767 = vmatprep.mubr.bf16.mxu0 0
        %768 = vmatmul.mubr.bf16.gmra.mrb[0].mxu0 %v716
        %v769 = vpop.f32.mrb[0].mxu0
        %v770 = vadd.f32 0.0, %v769
        %v771 = vpop.f32.mrb[0].mxu0
        %v772 = vpop.f32.mrb[0].mxu0
        %v773 = vadd.f32 0.0, %v772
        %v774 = vpop.f32.mrb[0].mxu0
        %775 = vmatprep.mubr.bf16.mxu0 0
        %776 = vmatmul.mubr.bf16.gmra.mrb[0].mxu0 %v719
        %v777 = vpop.f32.mrb[0].mxu0
        %v778 = vadd.f32 0.0, %v777
        %v779 = vpop.f32.mrb[0].mxu0
        %v780 = vpop.f32.mrb[0].mxu0
        %v781 = vadd.f32 0.0, %v780
        %v782 = vpop.f32.mrb[0].mxu0
        %783 = vmatprep.mubr.bf16.mxu0 0
        %784 = vmatmul.mubr.bf16.gmra.mrb[0].mxu0 %v722
        %v785 = vpop.f32.mrb[0].mxu0
        %v786 = vadd.f32 0.0, %v785
        %v787 = vpop.f32.mrb[0].mxu0
        %v788 = vpop.f32.mrb[0].mxu0
        %v789 = vadd.f32 0.0, %v788
        %v790 = vpop.f32.mrb[0].mxu0
        %791 = vdwg.mxu0
        %v792 = vadd.f32 %v681, %v762
        %v793 = vadd.f32 %v682, %v765
        %v794 = vadd.f32 %v683, %v770
        %v795 = vadd.f32 %v684, %v773
        %v796 = vadd.f32 %v685, %v778
        %v797 = vadd.f32 %v686, %v781
        %v798 = vadd.f32 %v687, %v786
        %v799 = vadd.f32 %v688, %v789
        %v800 = vld [vmem:[%s578] sm:$0xf]
        %v801 = vld [vmem:[%s578 + $0x4] sm:$0x1]
        %v802 = vld [vmem:[%s578 + $0x8] sm:$0xf]
        %v803 = vld [vmem:[%s578 + $0xc] sm:$0x1]
        %v804 = vld [vmem:[%s578 + $0x10] sm:$0xf]
        %v805 = vld [vmem:[%s578 + $0x14] sm:$0x1]
        %v806 = vld [vmem:[%s578 + $0x18] sm:$0xf]
        %v807 = vld [vmem:[%s578 + $0x1c] sm:$0x1]
        %v808 = vld [vmem:[%s578 + $0x20] sm:$0xf]
        %v809 = vld [vmem:[%s578 + $0x24] sm:$0x1]
        %v810 = vld [vmem:[%s578 + $0x28] sm:$0xf]
        %v811 = vld [vmem:[%s578 + $0x2c] sm:$0x1]
        %v812 = vld [vmem:[%s578 + $0x30] sm:$0xf]
        %v813 = vld [vmem:[%s578 + $0x34] sm:$0x1]
        %v814 = vld [vmem:[%s578 + $0x38] sm:$0xf]
        %v815 = vld [vmem:[%s578 + $0x3c] sm:$0x1]
        %v816 = vunpack.c.l.bf16 %v800
        %v817 = vunpack.c.l.bf16 %v801
        %v818 = vunpack.c.l.bf16 %v802
        %v819 = vunpack.c.l.bf16 %v803
        %v820 = vunpack.c.l.bf16 %v804
        %v821 = vunpack.c.l.bf16 %v805
        %v822 = vunpack.c.l.bf16 %v806
        %v823 = vunpack.c.l.bf16 %v807
        %v824 = vunpack.c.l.bf16 %v808
        %v825 = vunpack.c.l.bf16 %v809
        %v826 = vunpack.c.l.bf16 %v810
        %v827 = vunpack.c.l.bf16 %v811
        %v828 = vunpack.c.l.bf16 %v812
        %v829 = vunpack.c.l.bf16 %v813
        %v830 = vunpack.c.l.bf16 %v814
        %v831 = vunpack.c.l.bf16 %v815
        %v848 = vrot.slane %v816, 1
        %v849 = vrot.slane %v817, 1
        %v850 = vsel %vm451, %v848, %v849
        %v851 = vrot.slane %v818, 1
        %v852 = vrot.slane %v819, 1
        %v853 = vsel %vm451, %v851, %v852
        %v854 = vrot.slane %v820, 1
        %v855 = vrot.slane %v821, 1
        %v856 = vsel %vm451, %v854, %v855
        %v857 = vrot.slane %v822, 1
        %v858 = vrot.slane %v823, 1
        %v859 = vsel %vm451, %v857, %v858
        %v860 = vrot.slane %v824, 1
        %v861 = vrot.slane %v825, 1
        %v862 = vsel %vm451, %v860, %v861
        %v863 = vrot.slane %v826, 1
        %v864 = vrot.slane %v827, 1
        %v865 = vsel %vm451, %v863, %v864
        %v866 = vrot.slane %v828, 1
        %v867 = vrot.slane %v829, 1
        %v868 = vsel %vm451, %v866, %v867
        %v869 = vrot.slane %v830, 1
        %v870 = vrot.slane %v831, 1
        %v871 = vsel %vm451, %v869, %v870
        %v880 = vpack.c.bf16 %v853, %v850
        %v881 = vpack.c.bf16 %v859, %v856
        %v882 = vpack.c.bf16 %v865, %v862
        %v883 = vpack.c.bf16 %v871, %v868
        %s884 = scalar_lea.vmem %s1, 10
        %v885 = vld [vmem:[%s884] sm:$0x3]
        %v887 = vsel %vm241, %v880, 0
        %v890 = vsel %vm241, %v881, 0
        %v893 = vsel %vm241, %v882, 0
        %v896 = vsel %vm241, %v883, 0
        %v899 = vsel %vm254, %v885, 0
        %901 = vmatprep.subr.bf16.mxu0 0
        %902 = vmatpush1.bf16.msra.mxu0 %v899
        %903 = vmatprep.subr.bf16.mxu0 0
        %904 = vmatpush1.bf16.msra.mxu0 0
        %905 = vmatprep.subr.bf16.mxu0 0
        %906 = vmatpush1.bf16.msra.mxu0 0
        %907 = vmatprep.subr.bf16.mxu0 0
        %908 = vmatpush1.bf16.msra.mxu0 0
        %909 = vmatprep.subr.bf16.mxu0 0
        %910 = vmatpush1.bf16.msra.mxu0 0
        %911 = vmatprep.subr.bf16.mxu0 0
        %912 = vmatpush1.bf16.msra.mxu0 0
        %913 = vmatprep.subr.bf16.mxu0 0
        %914 = vmatpush1.bf16.msra.mxu0 0
        %915 = vmatprep.subr.bf16.mxu0 0
        %916 = vmatpush1.bf16.msra.mxu0 0
        %917 = vmatprep.subr.bf16.mxu0 0
        %918 = vmatpush1.bf16.msra.mxu0 0
        %919 = vmatprep.subr.bf16.mxu0 0
        %920 = vmatpush1.bf16.msra.mxu0 0
        %921 = vmatprep.subr.bf16.mxu0 0
        %922 = vmatpush1.bf16.msra.mxu0 0
        %923 = vmatprep.subr.bf16.mxu0 0
        %924 = vmatpush1.bf16.msra.mxu0 0
        %925 = vmatprep.subr.bf16.mxu0 0
        %926 = vmatpush1.bf16.msra.mxu0 0
        %927 = vmatprep.subr.bf16.mxu0 0
        %928 = vmatpush1.bf16.msra.mxu0 0
        %929 = vmatprep.subr.bf16.mxu0 0
        %930 = vmatpush1.bf16.msra.mxu0 0
        %931 = vmatprep.subr.bf16.mxu0 0
        %932 = vmatpush1.bf16.msra.mxu0 0
        %933 = vmatprep.mubr.bf16.mxu0 0
        %934 = vmatmul.mubr.bf16.gmra.mrb[0].mxu0 %v887
        %v935 = vpop.f32.mrb[0].mxu0
        %v936 = vadd.f32 0.0, %v935
        %v937 = vpop.f32.mrb[0].mxu0
        %v938 = vpop.f32.mrb[0].mxu0
        %v939 = vadd.f32 0.0, %v938
        %v940 = vpop.f32.mrb[0].mxu0
        %941 = vmatprep.mubr.bf16.mxu0 0
        %942 = vmatmul.mubr.bf16.gmra.mrb[0].mxu0 %v890
        %v943 = vpop.f32.mrb[0].mxu0
        %v944 = vadd.f32 0.0, %v943
        %v945 = vpop.f32.mrb[0].mxu0
        %v946 = vpop.f32.mrb[0].mxu0
        %v947 = vadd.f32 0.0, %v946
        %v948 = vpop.f32.mrb[0].mxu0
        %949 = vmatprep.mubr.bf16.mxu0 0
        %950 = vmatmul.mubr.bf16.gmra.mrb[0].mxu0 %v893
        %v951 = vpop.f32.mrb[0].mxu0
        %v952 = vadd.f32 0.0, %v951
        %v953 = vpop.f32.mrb[0].mxu0
        %v954 = vpop.f32.mrb[0].mxu0
        %v955 = vadd.f32 0.0, %v954
        %v956 = vpop.f32.mrb[0].mxu0
        %957 = vmatprep.mubr.bf16.mxu0 0
        %958 = vmatmul.mubr.bf16.gmra.mrb[0].mxu0 %v896
        %v959 = vpop.f32.mrb[0].mxu0
        %v960 = vadd.f32 0.0, %v959
        %v961 = vpop.f32.mrb[0].mxu0
        %v962 = vpop.f32.mrb[0].mxu0
        %v963 = vadd.f32 0.0, %v962
        %v964 = vpop.f32.mrb[0].mxu0
        %965 = vdwg.mxu0
        %v966 = vadd.f32 %v792, %v936
        %v967 = vadd.f32 %v793, %v939
        %v968 = vadd.f32 %v794, %v944
        %v969 = vadd.f32 %v795, %v947
        %v970 = vadd.f32 %v796, %v952
        %v971 = vadd.f32 %v797, %v955
        %v972 = vadd.f32 %v798, %v960
        %v973 = vadd.f32 %v799, %v963
        %s974 = scalar_lea.vmem %s195, 8
        %v975 = vld [vmem:[%s974] sm:$0xf]
        %v976 = vld [vmem:[%s974 + $0x8] sm:$0xf]
        %v977 = vld [vmem:[%s974 + $0x10] sm:$0xf]
        %v978 = vld [vmem:[%s974 + $0x18] sm:$0xf]
        %v979 = vld [vmem:[%s974 + $0x20] sm:$0xf]
        %v980 = vld [vmem:[%s974 + $0x28] sm:$0xf]
        %v981 = vld [vmem:[%s974 + $0x30] sm:$0xf]
        %v982 = vld [vmem:[%s974 + $0x38] sm:$0xf]
        %v983 = vunpack.c.l.bf16 %v975
        %v984 = vunpack.c.l.bf16 %v976
        %v985 = vunpack.c.l.bf16 %v977
        %v986 = vunpack.c.l.bf16 %v978
        %v987 = vunpack.c.l.bf16 %v979
        %v988 = vunpack.c.l.bf16 %v980
        %v989 = vunpack.c.l.bf16 %v981
        %v990 = vunpack.c.l.bf16 %v982
        %v991 = vpack.c.bf16 %v984, %v983
        %v992 = vpack.c.bf16 %v986, %v985
        %v993 = vpack.c.bf16 %v988, %v987
        %v994 = vpack.c.bf16 %v990, %v989
        %s995 = scalar_lea.vmem %s1, 12
        %v996 = vld [vmem:[%s995] sm:$0x3]
        %v998 = vsel %vm241, %v991, 0
        %v1001 = vsel %vm241, %v992, 0
        %v1004 = vsel %vm241, %v993, 0
        %v1007 = vsel %vm241, %v994, 0
        %v1010 = vsel %vm254, %v996, 0
        %1012 = vmatprep.subr.bf16.mxu0 0
        %1013 = vmatpush1.bf16.msra.mxu0 %v1010
        %1014 = vmatprep.subr.bf16.mxu0 0
        %1015 = vmatpush1.bf16.msra.mxu0 0
        %1016 = vmatprep.subr.bf16.mxu0 0
        %1017 = vmatpush1.bf16.msra.mxu0 0
        %1018 = vmatprep.subr.bf16.mxu0 0
        %1019 = vmatpush1.bf16.msra.mxu0 0
        %1020 = vmatprep.subr.bf16.mxu0 0
        %1021 = vmatpush1.bf16.msra.mxu0 0
        %1022 = vmatprep.subr.bf16.mxu0 0
        %1023 = vmatpush1.bf16.msra.mxu0 0
        %1024 = vmatprep.subr.bf16.mxu0 0
        %1025 = vmatpush1.bf16.msra.mxu0 0
        %1026 = vmatprep.subr.bf16.mxu0 0
        %1027 = vmatpush1.bf16.msra.mxu0 0
        %1028 = vmatprep.subr.bf16.mxu0 0
        %1029 = vmatpush1.bf16.msra.mxu0 0
        %1030 = vmatprep.subr.bf16.mxu0 0
        %1031 = vmatpush1.bf16.msra.mxu0 0
        %1032 = vmatprep.subr.bf16.mxu0 0
        %1033 = vmatpush1.bf16.msra.mxu0 0
        %1034 = vmatprep.subr.bf16.mxu0 0
        %1035 = vmatpush1.bf16.msra.mxu0 0
        %1036 = vmatprep.subr.bf16.mxu0 0
        %1037 = vmatpush1.bf16.msra.mxu0 0
        %1038 = vmatprep.subr.bf16.mxu0 0
        %1039 = vmatpush1.bf16.msra.mxu0 0
        %1040 = vmatprep.subr.bf16.mxu0 0
        %1041 = vmatpush1.bf16.msra.mxu0 0
        %1042 = vmatprep.subr.bf16.mxu0 0
        %1043 = vmatpush1.bf16.msra.mxu0 0
        %1044 = vmatprep.mubr.bf16.mxu0 0
        %1045 = vmatmul.mubr.bf16.gmra.mrb[0].mxu0 %v998
        %v1046 = vpop.f32.mrb[0].mxu0
        %v1047 = vadd.f32 0.0, %v1046
        %v1048 = vpop.f32.mrb[0].mxu0
        %v1049 = vpop.f32.mrb[0].mxu0
        %v1050 = vadd.f32 0.0, %v1049
        %v1051 = vpop.f32.mrb[0].mxu0
        %1052 = vmatprep.mubr.bf16.mxu0 0
        %1053 = vmatmul.mubr.bf16.gmra.mrb[0].mxu0 %v1001
        %v1054 = vpop.f32.mrb[0].mxu0
        %v1055 = vadd.f32 0.0, %v1054
        %v1056 = vpop.f32.mrb[0].mxu0
        %v1057 = vpop.f32.mrb[0].mxu0
        %v1058 = vadd.f32 0.0, %v1057
        %v1059 = vpop.f32.mrb[0].mxu0
        %1060 = vmatprep.mubr.bf16.mxu0 0
        %1061 = vmatmul.mubr.bf16.gmra.mrb[0].mxu0 %v1004
        %v1062 = vpop.f32.mrb[0].mxu0
        %v1063 = vadd.f32 0.0, %v1062
        %v1064 = vpop.f32.mrb[0].mxu0
        %v1065 = vpop.f32.mrb[0].mxu0
        %v1066 = vadd.f32 0.0, %v1065
        %v1067 = vpop.f32.mrb[0].mxu0
        %1068 = vmatprep.mubr.bf16.mxu0 0
        %1069 = vmatmul.mubr.bf16.gmra.mrb[0].mxu0 %v1007
        %v1070 = vpop.f32.mrb[0].mxu0
        %v1071 = vadd.f32 0.0, %v1070
        %v1072 = vpop.f32.mrb[0].mxu0
        %v1073 = vpop.f32.mrb[0].mxu0
        %v1074 = vadd.f32 0.0, %v1073
        %v1075 = vpop.f32.mrb[0].mxu0
        %1076 = vdwg.mxu0
        %v1077 = vadd.f32 %v966, %v1047
        %v1078 = vadd.f32 %v967, %v1050
        %v1079 = vadd.f32 %v968, %v1055
        %v1080 = vadd.f32 %v969, %v1058
        %v1081 = vadd.f32 %v970, %v1063
        %v1082 = vadd.f32 %v971, %v1066
        %v1083 = vadd.f32 %v972, %v1071
        %v1084 = vadd.f32 %v973, %v1074
        %s1085 = scalar_lea.vmem %s195, 80
        %v1086 = vld [vmem:[%s1085] sm:$0xf]
        %v1087 = vld [vmem:[%s1085 + $0x8] sm:$0xf]
        %v1088 = vld [vmem:[%s1085 + $0x10] sm:$0xf]
        %v1089 = vld [vmem:[%s1085 + $0x18] sm:$0xf]
        %v1090 = vld [vmem:[%s1085 + $0x20] sm:$0xf]
        %v1091 = vld [vmem:[%s1085 + $0x28] sm:$0xf]
        %v1092 = vld [vmem:[%s1085 + $0x30] sm:$0xf]
        %v1093 = vld [vmem:[%s1085 + $0x38] sm:$0xf]
        %v1094 = vunpack.c.l.bf16 %v1086
        %v1095 = vunpack.c.l.bf16 %v1087
        %v1096 = vunpack.c.l.bf16 %v1088
        %v1097 = vunpack.c.l.bf16 %v1089
        %v1098 = vunpack.c.l.bf16 %v1090
        %v1099 = vunpack.c.l.bf16 %v1091
        %v1100 = vunpack.c.l.bf16 %v1092
        %v1101 = vunpack.c.l.bf16 %v1093
        %v1102 = vpack.c.bf16 %v1095, %v1094
        %v1103 = vpack.c.bf16 %v1097, %v1096
        %v1104 = vpack.c.bf16 %v1099, %v1098
        %v1105 = vpack.c.bf16 %v1101, %v1100
        %s1106 = scalar_lea.vmem %s1, 14
        %v1107 = vld [vmem:[%s1106] sm:$0x3]
        %v1109 = vsel %vm241, %v1102, 0
        %v1112 = vsel %vm241, %v1103, 0
        %v1115 = vsel %vm241, %v1104, 0
        %v1118 = vsel %vm241, %v1105, 0
        %v1121 = vsel %vm254, %v1107, 0
        %1123 = vmatprep.subr.bf16.mxu0 0
        %1124 = vmatpush1.bf16.msra.mxu0 %v1121
        %1125 = vmatprep.subr.bf16.mxu0 0
        %1126 = vmatpush1.bf16.msra.mxu0 0
        %1127 = vmatprep.subr.bf16.mxu0 0
        %1128 = vmatpush1.bf16.msra.mxu0 0
        %1129 = vmatprep.subr.bf16.mxu0 0
        %1130 = vmatpush1.bf16.msra.mxu0 0
        %1131 = vmatprep.subr.bf16.mxu0 0
        %1132 = vmatpush1.bf16.msra.mxu0 0
        %1133 = vmatprep.subr.bf16.mxu0 0
        %1134 = vmatpush1.bf16.msra.mxu0 0
        %1135 = vmatprep.subr.bf16.mxu0 0
        %1136 = vmatpush1.bf16.msra.mxu0 0
        %1137 = vmatprep.subr.bf16.mxu0 0
        %1138 = vmatpush1.bf16.msra.mxu0 0
        %1139 = vmatprep.subr.bf16.mxu0 0
        %1140 = vmatpush1.bf16.msra.mxu0 0
        %1141 = vmatprep.subr.bf16.mxu0 0
        %1142 = vmatpush1.bf16.msra.mxu0 0
        %1143 = vmatprep.subr.bf16.mxu0 0
        %1144 = vmatpush1.bf16.msra.mxu0 0
        %1145 = vmatprep.subr.bf16.mxu0 0
        %1146 = vmatpush1.bf16.msra.mxu0 0
        %1147 = vmatprep.subr.bf16.mxu0 0
        %1148 = vmatpush1.bf16.msra.mxu0 0
        %1149 = vmatprep.subr.bf16.mxu0 0
        %1150 = vmatpush1.bf16.msra.mxu0 0
        %1151 = vmatprep.subr.bf16.mxu0 0
        %1152 = vmatpush1.bf16.msra.mxu0 0
        %1153 = vmatprep.subr.bf16.mxu0 0
        %1154 = vmatpush1.bf16.msra.mxu0 0
        %1155 = vmatprep.mubr.bf16.mxu0 0
        %1156 = vmatmul.mubr.bf16.gmra.mrb[0].mxu0 %v1109
        %v1157 = vpop.f32.mrb[0].mxu0
        %v1158 = vadd.f32 0.0, %v1157
        %v1159 = vpop.f32.mrb[0].mxu0
        %v1160 = vpop.f32.mrb[0].mxu0
        %v1161 = vadd.f32 0.0, %v1160
        %v1162 = vpop.f32.mrb[0].mxu0
        %1163 = vmatprep.mubr.bf16.mxu0 0
        %1164 = vmatmul.mubr.bf16.gmra.mrb[0].mxu0 %v1112
        %v1165 = vpop.f32.mrb[0].mxu0
        %v1166 = vadd.f32 0.0, %v1165
        %v1167 = vpop.f32.mrb[0].mxu0
        %v1168 = vpop.f32.mrb[0].mxu0
        %v1169 = vadd.f32 0.0, %v1168
        %v1170 = vpop.f32.mrb[0].mxu0
        %1171 = vmatprep.mubr.bf16.mxu0 0
        %1172 = vmatmul.mubr.bf16.gmra.mrb[0].mxu0 %v1115
        %v1173 = vpop.f32.mrb[0].mxu0
        %v1174 = vadd.f32 0.0, %v1173
        %v1175 = vpop.f32.mrb[0].mxu0
        %v1176 = vpop.f32.mrb[0].mxu0
        %v1177 = vadd.f32 0.0, %v1176
        %v1178 = vpop.f32.mrb[0].mxu0
        %1179 = vmatprep.mubr.bf16.mxu0 0
        %1180 = vmatmul.mubr.bf16.gmra.mrb[0].mxu0 %v1118
        %v1181 = vpop.f32.mrb[0].mxu0
        %v1182 = vadd.f32 0.0, %v1181
        %v1183 = vpop.f32.mrb[0].mxu0
        %v1184 = vpop.f32.mrb[0].mxu0
        %v1185 = vadd.f32 0.0, %v1184
        %v1186 = vpop.f32.mrb[0].mxu0
        %1187 = vdwg.mxu0
        %v1188 = vadd.f32 %v1077, %v1158
        %v1189 = vadd.f32 %v1078, %v1161
        %v1190 = vadd.f32 %v1079, %v1166
        %v1191 = vadd.f32 %v1080, %v1169
        %v1192 = vadd.f32 %v1081, %v1174
        %v1193 = vadd.f32 %v1082, %v1177
        %v1194 = vadd.f32 %v1083, %v1182
        %v1195 = vadd.f32 %v1084, %v1185
        %v1196 = vld [vmem:[%s974] sm:$0xf]
        %v1197 = vld [vmem:[%s974 + $0x4] sm:$0x1]
        %v1198 = vld [vmem:[%s974 + $0x8] sm:$0xf]
        %v1199 = vld [vmem:[%s974 + $0xc] sm:$0x1]
        %v1200 = vld [vmem:[%s974 + $0x10] sm:$0xf]
        %v1201 = vld [vmem:[%s974 + $0x14] sm:$0x1]
        %v1202 = vld [vmem:[%s974 + $0x18] sm:$0xf]
        %v1203 = vld [vmem:[%s974 + $0x1c] sm:$0x1]
        %v1204 = vld [vmem:[%s974 + $0x20] sm:$0xf]
        %v1205 = vld [vmem:[%s974 + $0x24] sm:$0x1]
        %v1206 = vld [vmem:[%s974 + $0x28] sm:$0xf]
        %v1207 = vld [vmem:[%s974 + $0x2c] sm:$0x1]
        %v1208 = vld [vmem:[%s974 + $0x30] sm:$0xf]
        %v1209 = vld [vmem:[%s974 + $0x34] sm:$0x1]
        %v1210 = vld [vmem:[%s974 + $0x38] sm:$0xf]
        %v1211 = vld [vmem:[%s974 + $0x3c] sm:$0x1]
        %v1212 = vunpack.c.l.bf16 %v1196
        %v1213 = vunpack.c.l.bf16 %v1197
        %v1214 = vunpack.c.l.bf16 %v1198
        %v1215 = vunpack.c.l.bf16 %v1199
        %v1216 = vunpack.c.l.bf16 %v1200
        %v1217 = vunpack.c.l.bf16 %v1201
        %v1218 = vunpack.c.l.bf16 %v1202
        %v1219 = vunpack.c.l.bf16 %v1203
        %v1220 = vunpack.c.l.bf16 %v1204
        %v1221 = vunpack.c.l.bf16 %v1205
        %v1222 = vunpack.c.l.bf16 %v1206
        %v1223 = vunpack.c.l.bf16 %v1207
        %v1224 = vunpack.c.l.bf16 %v1208
        %v1225 = vunpack.c.l.bf16 %v1209
        %v1226 = vunpack.c.l.bf16 %v1210
        %v1227 = vunpack.c.l.bf16 %v1211
        %v1244 = vrot.slane %v1212, 1
        %v1245 = vrot.slane %v1213, 1
        %v1246 = vsel %vm451, %v1244, %v1245
        %v1247 = vrot.slane %v1214, 1
        %v1248 = vrot.slane %v1215, 1
        %v1249 = vsel %vm451, %v1247, %v1248
        %v1250 = vrot.slane %v1216, 1
        %v1251 = vrot.slane %v1217, 1
        %v1252 = vsel %vm451, %v1250, %v1251
        %v1253 = vrot.slane %v1218, 1
        %v1254 = vrot.slane %v1219, 1
        %v1255 = vsel %vm451, %v1253, %v1254
        %v1256 = vrot.slane %v1220, 1
        %v1257 = vrot.slane %v1221, 1
        %v1258 = vsel %vm451, %v1256, %v1257
        %v1259 = vrot.slane %v1222, 1
        %v1260 = vrot.slane %v1223, 1
        %v1261 = vsel %vm451, %v1259, %v1260
        %v1262 = vrot.slane %v1224, 1
        %v1263 = vrot.slane %v1225, 1
        %v1264 = vsel %vm451, %v1262, %v1263
        %v1265 = vrot.slane %v1226, 1
        %v1266 = vrot.slane %v1227, 1
        %v1267 = vsel %vm451, %v1265, %v1266
        %v1276 = vpack.c.bf16 %v1249, %v1246
        %v1277 = vpack.c.bf16 %v1255, %v1252
        %v1278 = vpack.c.bf16 %v1261, %v1258
        %v1279 = vpack.c.bf16 %v1267, %v1264
        %s1280 = scalar_lea.vmem %s1, 16
        %v1281 = vld [vmem:[%s1280] sm:$0x3]
        %v1283 = vsel %vm241, %v1276, 0
        %v1286 = vsel %vm241, %v1277, 0
        %v1289 = vsel %vm241, %v1278, 0
        %v1292 = vsel %vm241, %v1279, 0
        %v1295 = vsel %vm254, %v1281, 0
        %1297 = vmatprep.subr.bf16.mxu0 0
        %1298 = vmatpush1.bf16.msra.mxu0 %v1295
        %1299 = vmatprep.subr.bf16.mxu0 0
        %1300 = vmatpush1.bf16.msra.mxu0 0
        %1301 = vmatprep.subr.bf16.mxu0 0
        %1302 = vmatpush1.bf16.msra.mxu0 0
        %1303 = vmatprep.subr.bf16.mxu0 0
        %1304 = vmatpush1.bf16.msra.mxu0 0
        %1305 = vmatprep.subr.bf16.mxu0 0
        %1306 = vmatpush1.bf16.msra.mxu0 0
        %1307 = vmatprep.subr.bf16.mxu0 0
        %1308 = vmatpush1.bf16.msra.mxu0 0
        %1309 = vmatprep.subr.bf16.mxu0 0
        %1310 = vmatpush1.bf16.msra.mxu0 0
        %1311 = vmatprep.subr.bf16.mxu0 0
        %1312 = vmatpush1.bf16.msra.mxu0 0
        %1313 = vmatprep.subr.bf16.mxu0 0
        %1314 = vmatpush1.bf16.msra.mxu0 0
        %1315 = vmatprep.subr.bf16.mxu0 0
        %1316 = vmatpush1.bf16.msra.mxu0 0
        %1317 = vmatprep.subr.bf16.mxu0 0
        %1318 = vmatpush1.bf16.msra.mxu0 0
        %1319 = vmatprep.subr.bf16.mxu0 0
        %1320 = vmatpush1.bf16.msra.mxu0 0
        %1321 = vmatprep.subr.bf16.mxu0 0
        %1322 = vmatpush1.bf16.msra.mxu0 0
        %1323 = vmatprep.subr.bf16.mxu0 0
        %1324 = vmatpush1.bf16.msra.mxu0 0
        %1325 = vmatprep.subr.bf16.mxu0 0
        %1326 = vmatpush1.bf16.msra.mxu0 0
        %1327 = vmatprep.subr.bf16.mxu0 0
        %1328 = vmatpush1.bf16.msra.mxu0 0
        %1329 = vmatprep.mubr.bf16.mxu0 0
        %1330 = vmatmul.mubr.bf16.gmra.mrb[0].mxu0 %v1283
        %v1331 = vpop.f32.mrb[0].mxu0
        %v1332 = vadd.f32 0.0, %v1331
        %v1333 = vpop.f32.mrb[0].mxu0
        %v1334 = vpop.f32.mrb[0].mxu0
        %v1335 = vadd.f32 0.0, %v1334
        %v1336 = vpop.f32.mrb[0].mxu0
        %1337 = vmatprep.mubr.bf16.mxu0 0
        %1338 = vmatmul.mubr.bf16.gmra.mrb[0].mxu0 %v1286
        %v1339 = vpop.f32.mrb[0].mxu0
        %v1340 = vadd.f32 0.0, %v1339
        %v1341 = vpop.f32.mrb[0].mxu0
        %v1342 = vpop.f32.mrb[0].mxu0
        %v1343 = vadd.f32 0.0, %v1342
        %v1344 = vpop.f32.mrb[0].mxu0
        %1345 = vmatprep.mubr.bf16.mxu0 0
        %1346 = vmatmul.mubr.bf16.gmra.mrb[0].mxu0 %v1289
        %v1347 = vpop.f32.mrb[0].mxu0
        %v1348 = vadd.f32 0.0, %v1347
        %v1349 = vpop.f32.mrb[0].mxu0
        %v1350 = vpop.f32.mrb[0].mxu0
        %v1351 = vadd.f32 0.0, %v1350
        %v1352 = vpop.f32.mrb[0].mxu0
        %1353 = vmatprep.mubr.bf16.mxu0 0
        %1354 = vmatmul.mubr.bf16.gmra.mrb[0].mxu0 %v1292
        %v1355 = vpop.f32.mrb[0].mxu0
        %v1356 = vadd.f32 0.0, %v1355
        %v1357 = vpop.f32.mrb[0].mxu0
        %v1358 = vpop.f32.mrb[0].mxu0
        %v1359 = vadd.f32 0.0, %v1358
        %v1360 = vpop.f32.mrb[0].mxu0
        %1361 = vdwg.mxu0
        %v1362 = vadd.f32 %v1188, %v1332
        %v1363 = vadd.f32 %v1189, %v1335
        %v1364 = vadd.f32 %v1190, %v1340
        %v1365 = vadd.f32 %v1191, %v1343
        %v1366 = vadd.f32 %v1192, %v1348
        %v1367 = vadd.f32 %v1193, %v1351
        %v1368 = vadd.f32 %v1194, %v1356
        %v1369 = vadd.f32 %v1195, %v1359
        %1370 = vmatprep.subr.bf16.mxu0 0
        %1371 = vmatpush1.bf16.msra.mxu0 %v256
        %1372 = vmatprep.subr.bf16.mxu0 0
        %1373 = vmatpush1.bf16.msra.mxu0 0
        %1374 = vmatprep.subr.bf16.mxu0 0
        %1375 = vmatpush1.bf16.msra.mxu0 0
        %1376 = vmatprep.subr.bf16.mxu0 0
        %1377 = vmatpush1.bf16.msra.mxu0 0
        %1378 = vmatprep.subr.bf16.mxu0 0
        %1379 = vmatpush1.bf16.msra.mxu0 0
        %1380 = vmatprep.subr.bf16.mxu0 0
        %1381 = vmatpush1.bf16.msra.mxu0 0
        %1382 = vmatprep.subr.bf16.mxu0 0
        %1383 = vmatpush1.bf16.msra.mxu0 0
        %1384 = vmatprep.subr.bf16.mxu0 0
        %1385 = vmatpush1.bf16.msra.mxu0 0
        %1386 = vmatprep.subr.bf16.mxu0 0
        %1387 = vmatpush1.bf16.msra.mxu0 0
        %1388 = vmatprep.subr.bf16.mxu0 0
        %1389 = vmatpush1.bf16.msra.mxu0 0
        %1390 = vmatprep.subr.bf16.mxu0 0
        %1391 = vmatpush1.bf16.msra.mxu0 0
        %1392 = vmatprep.subr.bf16.mxu0 0
        %1393 = vmatpush1.bf16.msra.mxu0 0
        %1394 = vmatprep.subr.bf16.mxu0 0
        %1395 = vmatpush1.bf16.msra.mxu0 0
        %1396 = vmatprep.subr.bf16.mxu0 0
        %1397 = vmatpush1.bf16.msra.mxu0 0
        %1398 = vmatprep.subr.bf16.mxu0 0
        %1399 = vmatpush1.bf16.msra.mxu0 0
        %1400 = vmatprep.subr.bf16.mxu0 0
        %1401 = vmatpush1.bf16.msra.mxu0 0
        %1402 = vmatprep.mubr.bf16.mxu0 0
        %1403 = vmatmul.mubr.bf16.gmra.mrb[0].mxu0 %v491
        %v1404 = vpop.f32.mrb[0].mxu0
        %v1405 = vadd.f32 0.0, %v1404
        %v1406 = vpop.f32.mrb[0].mxu0
        %v1407 = vpop.f32.mrb[0].mxu0
        %v1408 = vadd.f32 0.0, %v1407
        %v1409 = vpop.f32.mrb[0].mxu0
        %1410 = vmatprep.mubr.bf16.mxu0 0
        %1411 = vmatmul.mubr.bf16.gmra.mrb[0].mxu0 %v494
        %v1412 = vpop.f32.mrb[0].mxu0
        %v1413 = vadd.f32 0.0, %v1412
        %v1414 = vpop.f32.mrb[0].mxu0
        %v1415 = vpop.f32.mrb[0].mxu0
        %v1416 = vadd.f32 0.0, %v1415
        %v1417 = vpop.f32.mrb[0].mxu0
        %1418 = vmatprep.mubr.bf16.mxu0 0
        %1419 = vmatmul.mubr.bf16.gmra.mrb[0].mxu0 %v497
        %v1420 = vpop.f32.mrb[0].mxu0
        %v1421 = vadd.f32 0.0, %v1420
        %v1422 = vpop.f32.mrb[0].mxu0
        %v1423 = vpop.f32.mrb[0].mxu0
        %v1424 = vadd.f32 0.0, %v1423
        %v1425 = vpop.f32.mrb[0].mxu0
        %1426 = vmatprep.mubr.bf16.mxu0 0
        %1427 = vmatmul.mubr.bf16.gmra.mrb[0].mxu0 %v500
        %v1428 = vpop.f32.mrb[0].mxu0
        %v1429 = vadd.f32 0.0, %v1428
        %v1430 = vpop.f32.mrb[0].mxu0
        %v1431 = vpop.f32.mrb[0].mxu0
        %v1432 = vadd.f32 0.0, %v1431
        %v1433 = vpop.f32.mrb[0].mxu0
        %1434 = vdwg.mxu0
        %1435 = vmatprep.subr.bf16.mxu0 0
        %1436 = vmatpush1.bf16.msra.mxu0 %v336
        %1437 = vmatprep.subr.bf16.mxu0 0
        %1438 = vmatpush1.bf16.msra.mxu0 0
        %1439 = vmatprep.subr.bf16.mxu0 0
        %1440 = vmatpush1.bf16.msra.mxu0 0
        %1441 = vmatprep.subr.bf16.mxu0 0
        %1442 = vmatpush1.bf16.msra.mxu0 0
        %1443 = vmatprep.subr.bf16.mxu0 0
        %1444 = vmatpush1.bf16.msra.mxu0 0
        %1445 = vmatprep.subr.bf16.mxu0 0
        %1446 = vmatpush1.bf16.msra.mxu0 0
        %1447 = vmatprep.subr.bf16.mxu0 0
        %1448 = vmatpush1.bf16.msra.mxu0 0
        %1449 = vmatprep.subr.bf16.mxu0 0
        %1450 = vmatpush1.bf16.msra.mxu0 0
        %1451 = vmatprep.subr.bf16.mxu0 0
        %1452 = vmatpush1.bf16.msra.mxu0 0
        %1453 = vmatprep.subr.bf16.mxu0 0
        %1454 = vmatpush1.bf16.msra.mxu0 0
        %1455 = vmatprep.subr.bf16.mxu0 0
        %1456 = vmatpush1.bf16.msra.mxu0 0
        %1457 = vmatprep.subr.bf16.mxu0 0
        %1458 = vmatpush1.bf16.msra.mxu0 0
        %1459 = vmatprep.subr.bf16.mxu0 0
        %1460 = vmatpush1.bf16.msra.mxu0 0
        %1461 = vmatprep.subr.bf16.mxu0 0
        %1462 = vmatpush1.bf16.msra.mxu0 0
        %1463 = vmatprep.subr.bf16.mxu0 0
        %1464 = vmatpush1.bf16.msra.mxu0 0
        %1465 = vmatprep.subr.bf16.mxu0 0
        %1466 = vmatpush1.bf16.msra.mxu0 0
        %1467 = vmatprep.mubr.bf16.mxu0 0
        %1468 = vmatmul.mubr.bf16.gmra.mrb[0].mxu0 %v243
        %v1469 = vpop.f32.mrb[0].mxu0
        %v1470 = vadd.f32 %v1405, %v1469
        %v1471 = vpop.f32.mrb[0].mxu0
        %v1472 = vpop.f32.mrb[0].mxu0
        %v1473 = vadd.f32 %v1408, %v1472
        %v1474 = vpop.f32.mrb[0].mxu0
        %1475 = vmatprep.mubr.bf16.mxu0 0
        %1476 = vmatmul.mubr.bf16.gmra.mrb[0].mxu0 %v246
        %v1477 = vpop.f32.mrb[0].mxu0
        %v1478 = vadd.f32 %v1413, %v1477
        %v1479 = vpop.f32.mrb[0].mxu0
        %v1480 = vpop.f32.mrb[0].mxu0
        %v1481 = vadd.f32 %v1416, %v1480
        %v1482 = vpop.f32.mrb[0].mxu0
        %1483 = vmatprep.mubr.bf16.mxu0 0
        %1484 = vmatmul.mubr.bf16.gmra.mrb[0].mxu0 %v249
        %v1485 = vpop.f32.mrb[0].mxu0
        %v1486 = vadd.f32 %v1421, %v1485
        %v1487 = vpop.f32.mrb[0].mxu0
        %v1488 = vpop.f32.mrb[0].mxu0
        %v1489 = vadd.f32 %v1424, %v1488
        %v1490 = vpop.f32.mrb[0].mxu0
        %1491 = vmatprep.mubr.bf16.mxu0 0
        %1492 = vmatmul.mubr.bf16.gmra.mrb[0].mxu0 %v252
        %v1493 = vpop.f32.mrb[0].mxu0
        %v1494 = vadd.f32 %v1429, %v1493
        %v1495 = vpop.f32.mrb[0].mxu0
        %v1496 = vpop.f32.mrb[0].mxu0
        %v1497 = vadd.f32 %v1432, %v1496
        %v1498 = vpop.f32.mrb[0].mxu0
        %1499 = vdwg.mxu0
        %v1500 = vld [vmem:[%s218] sm:$0xf]
        %v1501 = vld [vmem:[%s218 + $0x4] sm:$0x1]
        %v1502 = vld [vmem:[%s218 + $0x8] sm:$0xf]
        %v1503 = vld [vmem:[%s218 + $0xc] sm:$0x1]
        %v1504 = vld [vmem:[%s218 + $0x10] sm:$0xf]
        %v1505 = vld [vmem:[%s218 + $0x14] sm:$0x1]
        %v1506 = vld [vmem:[%s218 + $0x18] sm:$0xf]
        %v1507 = vld [vmem:[%s218 + $0x1c] sm:$0x1]
        %v1508 = vld [vmem:[%s218 + $0x20] sm:$0xf]
        %v1509 = vld [vmem:[%s218 + $0x24] sm:$0x1]
        %v1510 = vld [vmem:[%s218 + $0x28] sm:$0xf]
        %v1511 = vld [vmem:[%s218 + $0x2c] sm:$0x1]
        %v1512 = vld [vmem:[%s218 + $0x30] sm:$0xf]
        %v1513 = vld [vmem:[%s218 + $0x34] sm:$0x1]
        %v1514 = vld [vmem:[%s218 + $0x38] sm:$0xf]
        %v1515 = vld [vmem:[%s218 + $0x3c] sm:$0x1]
        %v1516 = vunpack.c.l.bf16 %v1500
        %v1517 = vunpack.c.l.bf16 %v1501
        %v1518 = vunpack.c.l.bf16 %v1502
        %v1519 = vunpack.c.l.bf16 %v1503
        %v1520 = vunpack.c.l.bf16 %v1504
        %v1521 = vunpack.c.l.bf16 %v1505
        %v1522 = vunpack.c.l.bf16 %v1506
        %v1523 = vunpack.c.l.bf16 %v1507
        %v1524 = vunpack.c.l.bf16 %v1508
        %v1525 = vunpack.c.l.bf16 %v1509
        %v1526 = vunpack.c.l.bf16 %v1510
        %v1527 = vunpack.c.l.bf16 %v1511
        %v1528 = vunpack.c.l.bf16 %v1512
        %v1529 = vunpack.c.l.bf16 %v1513
        %v1530 = vunpack.c.l.bf16 %v1514
        %v1531 = vunpack.c.l.bf16 %v1515
        %v1548 = vrot.slane %v1516, 1
        %v1549 = vrot.slane %v1517, 1
        %v1550 = vsel %vm451, %v1548, %v1549
        %v1551 = vrot.slane %v1518, 1
        %v1552 = vrot.slane %v1519, 1
        %v1553 = vsel %vm451, %v1551, %v1552
        %v1554 = vrot.slane %v1520, 1
        %v1555 = vrot.slane %v1521, 1
        %v1556 = vsel %vm451, %v1554, %v1555
        %v1557 = vrot.slane %v1522, 1
        %v1558 = vrot.slane %v1523, 1
        %v1559 = vsel %vm451, %v1557, %v1558
        %v1560 = vrot.slane %v1524, 1
        %v1561 = vrot.slane %v1525, 1
        %v1562 = vsel %vm451, %v1560, %v1561
        %v1563 = vrot.slane %v1526, 1
        %v1564 = vrot.slane %v1527, 1
        %v1565 = vsel %vm451, %v1563, %v1564
        %v1566 = vrot.slane %v1528, 1
        %v1567 = vrot.slane %v1529, 1
        %v1568 = vsel %vm451, %v1566, %v1567
        %v1569 = vrot.slane %v1530, 1
        %v1570 = vrot.slane %v1531, 1
        %v1571 = vsel %vm451, %v1569, %v1570
        %v1580 = vpack.c.bf16 %v1553, %v1550
        %v1581 = vpack.c.bf16 %v1559, %v1556
        %v1582 = vpack.c.bf16 %v1565, %v1562
        %v1583 = vpack.c.bf16 %v1571, %v1568
        %v1585 = vsel %vm241, %v1580, 0
        %v1588 = vsel %vm241, %v1581, 0
        %v1591 = vsel %vm241, %v1582, 0
        %v1594 = vsel %vm241, %v1583, 0
        %1596 = vmatprep.subr.bf16.mxu0 0
        %1597 = vmatpush1.bf16.msra.mxu0 %v503
        %1598 = vmatprep.subr.bf16.mxu0 0
        %1599 = vmatpush1.bf16.msra.mxu0 0
        %1600 = vmatprep.subr.bf16.mxu0 0
        %1601 = vmatpush1.bf16.msra.mxu0 0
        %1602 = vmatprep.subr.bf16.mxu0 0
        %1603 = vmatpush1.bf16.msra.mxu0 0
        %1604 = vmatprep.subr.bf16.mxu0 0
        %1605 = vmatpush1.bf16.msra.mxu0 0
        %1606 = vmatprep.subr.bf16.mxu0 0
        %1607 = vmatpush1.bf16.msra.mxu0 0
        %1608 = vmatprep.subr.bf16.mxu0 0
        %1609 = vmatpush1.bf16.msra.mxu0 0
        %1610 = vmatprep.subr.bf16.mxu0 0
        %1611 = vmatpush1.bf16.msra.mxu0 0
        %1612 = vmatprep.subr.bf16.mxu0 0
        %1613 = vmatpush1.bf16.msra.mxu0 0
        %1614 = vmatprep.subr.bf16.mxu0 0
        %1615 = vmatpush1.bf16.msra.mxu0 0
        %1616 = vmatprep.subr.bf16.mxu0 0
        %1617 = vmatpush1.bf16.msra.mxu0 0
        %1618 = vmatprep.subr.bf16.mxu0 0
        %1619 = vmatpush1.bf16.msra.mxu0 0
        %1620 = vmatprep.subr.bf16.mxu0 0
        %1621 = vmatpush1.bf16.msra.mxu0 0
        %1622 = vmatprep.subr.bf16.mxu0 0
        %1623 = vmatpush1.bf16.msra.mxu0 0
        %1624 = vmatprep.subr.bf16.mxu0 0
        %1625 = vmatpush1.bf16.msra.mxu0 0
        %1626 = vmatprep.subr.bf16.mxu0 0
        %1627 = vmatpush1.bf16.msra.mxu0 0
        %1628 = vmatprep.mubr.bf16.mxu0 0
        %1629 = vmatmul.mubr.bf16.gmra.mrb[0].mxu0 %v1585
        %v1630 = vpop.f32.mrb[0].mxu0
        %v1631 = vadd.f32 0.0, %v1630
        %v1632 = vpop.f32.mrb[0].mxu0
        %v1633 = vpop.f32.mrb[0].mxu0
        %v1634 = vadd.f32 0.0, %v1633
        %v1635 = vpop.f32.mrb[0].mxu0
        %1636 = vmatprep.mubr.bf16.mxu0 0
        %1637 = vmatmul.mubr.bf16.gmra.mrb[0].mxu0 %v1588
        %v1638 = vpop.f32.mrb[0].mxu0
        %v1639 = vadd.f32 0.0, %v1638
        %v1640 = vpop.f32.mrb[0].mxu0
        %v1641 = vpop.f32.mrb[0].mxu0
        %v1642 = vadd.f32 0.0, %v1641
        %v1643 = vpop.f32.mrb[0].mxu0
        %1644 = vmatprep.mubr.bf16.mxu0 0
        %1645 = vmatmul.mubr.bf16.gmra.mrb[0].mxu0 %v1591
        %v1646 = vpop.f32.mrb[0].mxu0
        %v1647 = vadd.f32 0.0, %v1646
        %v1648 = vpop.f32.mrb[0].mxu0
        %v1649 = vpop.f32.mrb[0].mxu0
        %v1650 = vadd.f32 0.0, %v1649
        %v1651 = vpop.f32.mrb[0].mxu0
        %1652 = vmatprep.mubr.bf16.mxu0 0
        %1653 = vmatmul.mubr.bf16.gmra.mrb[0].mxu0 %v1594
        %v1654 = vpop.f32.mrb[0].mxu0
        %v1655 = vadd.f32 0.0, %v1654
        %v1656 = vpop.f32.mrb[0].mxu0
        %v1657 = vpop.f32.mrb[0].mxu0
        %v1658 = vadd.f32 0.0, %v1657
        %v1659 = vpop.f32.mrb[0].mxu0
        %1660 = vdwg.mxu0
        %v1661 = vadd.f32 %v1470, %v1631
        %v1662 = vadd.f32 %v1473, %v1634
        %v1663 = vadd.f32 %v1478, %v1639
        %v1664 = vadd.f32 %v1481, %v1642
        %v1665 = vadd.f32 %v1486, %v1647
        %v1666 = vadd.f32 %v1489, %v1650
        %v1667 = vadd.f32 %v1494, %v1655
        %v1668 = vadd.f32 %v1497, %v1658
        %1669 = vmatprep.subr.bf16.mxu0 0
        %1670 = vmatpush1.bf16.msra.mxu0 %v614
        %1671 = vmatprep.subr.bf16.mxu0 0
        %1672 = vmatpush1.bf16.msra.mxu0 0
        %1673 = vmatprep.subr.bf16.mxu0 0
        %1674 = vmatpush1.bf16.msra.mxu0 0
        %1675 = vmatprep.subr.bf16.mxu0 0
        %1676 = vmatpush1.bf16.msra.mxu0 0
        %1677 = vmatprep.subr.bf16.mxu0 0
        %1678 = vmatpush1.bf16.msra.mxu0 0
        %1679 = vmatprep.subr.bf16.mxu0 0
        %1680 = vmatpush1.bf16.msra.mxu0 0
        %1681 = vmatprep.subr.bf16.mxu0 0
        %1682 = vmatpush1.bf16.msra.mxu0 0
        %1683 = vmatprep.subr.bf16.mxu0 0
        %1684 = vmatpush1.bf16.msra.mxu0 0
        %1685 = vmatprep.subr.bf16.mxu0 0
        %1686 = vmatpush1.bf16.msra.mxu0 0
        %1687 = vmatprep.subr.bf16.mxu0 0
        %1688 = vmatpush1.bf16.msra.mxu0 0
        %1689 = vmatprep.subr.bf16.mxu0 0
        %1690 = vmatpush1.bf16.msra.mxu0 0
        %1691 = vmatprep.subr.bf16.mxu0 0
        %1692 = vmatpush1.bf16.msra.mxu0 0
        %1693 = vmatprep.subr.bf16.mxu0 0
        %1694 = vmatpush1.bf16.msra.mxu0 0
        %1695 = vmatprep.subr.bf16.mxu0 0
        %1696 = vmatpush1.bf16.msra.mxu0 0
        %1697 = vmatprep.subr.bf16.mxu0 0
        %1698 = vmatpush1.bf16.msra.mxu0 0
        %1699 = vmatprep.subr.bf16.mxu0 0
        %1700 = vmatpush1.bf16.msra.mxu0 0
        %1701 = vmatprep.mubr.bf16.mxu0 0
        %1702 = vmatmul.mubr.bf16.gmra.mrb[0].mxu0 %v713
        %v1703 = vpop.f32.mrb[0].mxu0
        %v1704 = vadd.f32 0.0, %v1703
        %v1705 = vpop.f32.mrb[0].mxu0
        %v1706 = vpop.f32.mrb[0].mxu0
        %v1707 = vadd.f32 0.0, %v1706
        %v1708 = vpop.f32.mrb[0].mxu0
        %1709 = vmatprep.mubr.bf16.mxu0 0
        %1710 = vmatmul.mubr.bf16.gmra.mrb[0].mxu0 %v716
        %v1711 = vpop.f32.mrb[0].mxu0
        %v1712 = vadd.f32 0.0, %v1711
        %v1713 = vpop.f32.mrb[0].mxu0
        %v1714 = vpop.f32.mrb[0].mxu0
        %v1715 = vadd.f32 0.0, %v1714
        %v1716 = vpop.f32.mrb[0].mxu0
        %1717 = vmatprep.mubr.bf16.mxu0 0
        %1718 = vmatmul.mubr.bf16.gmra.mrb[0].mxu0 %v719
        %v1719 = vpop.f32.mrb[0].mxu0
        %v1720 = vadd.f32 0.0, %v1719
        %v1721 = vpop.f32.mrb[0].mxu0
        %v1722 = vpop.f32.mrb[0].mxu0
        %v1723 = vadd.f32 0.0, %v1722
        %v1724 = vpop.f32.mrb[0].mxu0
        %1725 = vmatprep.mubr.bf16.mxu0 0
        %1726 = vmatmul.mubr.bf16.gmra.mrb[0].mxu0 %v722
        %v1727 = vpop.f32.mrb[0].mxu0
        %v1728 = vadd.f32 0.0, %v1727
        %v1729 = vpop.f32.mrb[0].mxu0
        %v1730 = vpop.f32.mrb[0].mxu0
        %v1731 = vadd.f32 0.0, %v1730
        %v1732 = vpop.f32.mrb[0].mxu0
        %1733 = vdwg.mxu0
        %v1734 = vadd.f32 %v1661, %v1704
        %v1735 = vadd.f32 %v1662, %v1707
        %v1736 = vadd.f32 %v1663, %v1712
        %v1737 = vadd.f32 %v1664, %v1715
        %v1738 = vadd.f32 %v1665, %v1720
        %v1739 = vadd.f32 %v1666, %v1723
        %v1740 = vadd.f32 %v1667, %v1728
        %v1741 = vadd.f32 %v1668, %v1731
        %1742 = vmatprep.subr.bf16.mxu0 0
        %1743 = vmatpush1.bf16.msra.mxu0 %v725
        %1744 = vmatprep.subr.bf16.mxu0 0
        %1745 = vmatpush1.bf16.msra.mxu0 0
        %1746 = vmatprep.subr.bf16.mxu0 0
        %1747 = vmatpush1.bf16.msra.mxu0 0
        %1748 = vmatprep.subr.bf16.mxu0 0
        %1749 = vmatpush1.bf16.msra.mxu0 0
        %1750 = vmatprep.subr.bf16.mxu0 0
        %1751 = vmatpush1.bf16.msra.mxu0 0
        %1752 = vmatprep.subr.bf16.mxu0 0
        %1753 = vmatpush1.bf16.msra.mxu0 0
        %1754 = vmatprep.subr.bf16.mxu0 0
        %1755 = vmatpush1.bf16.msra.mxu0 0
        %1756 = vmatprep.subr.bf16.mxu0 0
        %1757 = vmatpush1.bf16.msra.mxu0 0
        %1758 = vmatprep.subr.bf16.mxu0 0
        %1759 = vmatpush1.bf16.msra.mxu0 0
        %1760 = vmatprep.subr.bf16.mxu0 0
        %1761 = vmatpush1.bf16.msra.mxu0 0
        %1762 = vmatprep.subr.bf16.mxu0 0
        %1763 = vmatpush1.bf16.msra.mxu0 0
        %1764 = vmatprep.subr.bf16.mxu0 0
        %1765 = vmatpush1.bf16.msra.mxu0 0
        %1766 = vmatprep.subr.bf16.mxu0 0
        %1767 = vmatpush1.bf16.msra.mxu0 0
        %1768 = vmatprep.subr.bf16.mxu0 0
        %1769 = vmatpush1.bf16.msra.mxu0 0
        %1770 = vmatprep.subr.bf16.mxu0 0
        %1771 = vmatpush1.bf16.msra.mxu0 0
        %1772 = vmatprep.subr.bf16.mxu0 0
        %1773 = vmatpush1.bf16.msra.mxu0 0
        %1774 = vmatprep.mubr.bf16.mxu0 0
        %1775 = vmatmul.mubr.bf16.gmra.mrb[0].mxu0 %v887
        %v1776 = vpop.f32.mrb[0].mxu0
        %v1777 = vadd.f32 0.0, %v1776
        %v1778 = vpop.f32.mrb[0].mxu0
        %v1779 = vpop.f32.mrb[0].mxu0
        %v1780 = vadd.f32 0.0, %v1779
        %v1781 = vpop.f32.mrb[0].mxu0
        %1782 = vmatprep.mubr.bf16.mxu0 0
        %1783 = vmatmul.mubr.bf16.gmra.mrb[0].mxu0 %v890
        %v1784 = vpop.f32.mrb[0].mxu0
        %v1785 = vadd.f32 0.0, %v1784
        %v1786 = vpop.f32.mrb[0].mxu0
        %v1787 = vpop.f32.mrb[0].mxu0
        %v1788 = vadd.f32 0.0, %v1787
        %v1789 = vpop.f32.mrb[0].mxu0
        %1790 = vmatprep.mubr.bf16.mxu0 0
        %1791 = vmatmul.mubr.bf16.gmra.mrb[0].mxu0 %v893
        %v1792 = vpop.f32.mrb[0].mxu0
        %v1793 = vadd.f32 0.0, %v1792
        %v1794 = vpop.f32.mrb[0].mxu0
        %v1795 = vpop.f32.mrb[0].mxu0
        %v1796 = vadd.f32 0.0, %v1795
        %v1797 = vpop.f32.mrb[0].mxu0
        %1798 = vmatprep.mubr.bf16.mxu0 0
        %1799 = vmatmul.mubr.bf16.gmra.mrb[0].mxu0 %v896
        %v1800 = vpop.f32.mrb[0].mxu0
        %v1801 = vadd.f32 0.0, %v1800
        %v1802 = vpop.f32.mrb[0].mxu0
        %v1803 = vpop.f32.mrb[0].mxu0
        %v1804 = vadd.f32 0.0, %v1803
        %v1805 = vpop.f32.mrb[0].mxu0
        %1806 = vdwg.mxu0
        %v1807 = vadd.f32 %v1734, %v1777
        %v1808 = vadd.f32 %v1735, %v1780
        %v1809 = vadd.f32 %v1736, %v1785
        %v1810 = vadd.f32 %v1737, %v1788
        %v1811 = vadd.f32 %v1738, %v1793
        %v1812 = vadd.f32 %v1739, %v1796
        %v1813 = vadd.f32 %v1740, %v1801
        %v1814 = vadd.f32 %v1741, %v1804
        %v1815 = vld [vmem:[%s689] sm:$0xf]
        %v1816 = vld [vmem:[%s689 + $0x4] sm:$0x1]
        %v1817 = vld [vmem:[%s689 + $0x8] sm:$0xf]
        %v1818 = vld [vmem:[%s689 + $0xc] sm:$0x1]
        %v1819 = vld [vmem:[%s689 + $0x10] sm:$0xf]
        %v1820 = vld [vmem:[%s689 + $0x14] sm:$0x1]
        %v1821 = vld [vmem:[%s689 + $0x18] sm:$0xf]
        %v1822 = vld [vmem:[%s689 + $0x1c] sm:$0x1]
        %v1823 = vld [vmem:[%s689 + $0x20] sm:$0xf]
        %v1824 = vld [vmem:[%s689 + $0x24] sm:$0x1]
        %v1825 = vld [vmem:[%s689 + $0x28] sm:$0xf]
        %v1826 = vld [vmem:[%s689 + $0x2c] sm:$0x1]
        %v1827 = vld [vmem:[%s689 + $0x30] sm:$0xf]
        %v1828 = vld [vmem:[%s689 + $0x34] sm:$0x1]
        %v1829 = vld [vmem:[%s689 + $0x38] sm:$0xf]
        %v1830 = vld [vmem:[%s689 + $0x3c] sm:$0x1]
        %v1831 = vunpack.c.l.bf16 %v1815
        %v1832 = vunpack.c.l.bf16 %v1816
        %v1833 = vunpack.c.l.bf16 %v1817
        %v1834 = vunpack.c.l.bf16 %v1818
        %v1835 = vunpack.c.l.bf16 %v1819
        %v1836 = vunpack.c.l.bf16 %v1820
        %v1837 = vunpack.c.l.bf16 %v1821
        %v1838 = vunpack.c.l.bf16 %v1822
        %v1839 = vunpack.c.l.bf16 %v1823
        %v1840 = vunpack.c.l.bf16 %v1824
        %v1841 = vunpack.c.l.bf16 %v1825
        %v1842 = vunpack.c.l.bf16 %v1826
        %v1843 = vunpack.c.l.bf16 %v1827
        %v1844 = vunpack.c.l.bf16 %v1828
        %v1845 = vunpack.c.l.bf16 %v1829
        %v1846 = vunpack.c.l.bf16 %v1830
        %v1863 = vrot.slane %v1831, 1
        %v1864 = vrot.slane %v1832, 1
        %v1865 = vsel %vm451, %v1863, %v1864
        %v1866 = vrot.slane %v1833, 1
        %v1867 = vrot.slane %v1834, 1
        %v1868 = vsel %vm451, %v1866, %v1867
        %v1869 = vrot.slane %v1835, 1
        %v1870 = vrot.slane %v1836, 1
        %v1871 = vsel %vm451, %v1869, %v1870
        %v1872 = vrot.slane %v1837, 1
        %v1873 = vrot.slane %v1838, 1
        %v1874 = vsel %vm451, %v1872, %v1873
        %v1875 = vrot.slane %v1839, 1
        %v1876 = vrot.slane %v1840, 1
        %v1877 = vsel %vm451, %v1875, %v1876
        %v1878 = vrot.slane %v1841, 1
        %v1879 = vrot.slane %v1842, 1
        %v1880 = vsel %vm451, %v1878, %v1879
        %v1881 = vrot.slane %v1843, 1
        %v1882 = vrot.slane %v1844, 1
        %v1883 = vsel %vm451, %v1881, %v1882
        %v1884 = vrot.slane %v1845, 1
        %v1885 = vrot.slane %v1846, 1
        %v1886 = vsel %vm451, %v1884, %v1885
        %v1895 = vpack.c.bf16 %v1868, %v1865
        %v1896 = vpack.c.bf16 %v1874, %v1871
        %v1897 = vpack.c.bf16 %v1880, %v1877
        %v1898 = vpack.c.bf16 %v1886, %v1883
        %v1900 = vsel %vm241, %v1895, 0
        %v1903 = vsel %vm241, %v1896, 0
        %v1906 = vsel %vm241, %v1897, 0
        %v1909 = vsel %vm241, %v1898, 0
        %1911 = vmatprep.subr.bf16.mxu0 0
        %1912 = vmatpush1.bf16.msra.mxu0 %v899
        %1913 = vmatprep.subr.bf16.mxu0 0
        %1914 = vmatpush1.bf16.msra.mxu0 0
        %1915 = vmatprep.subr.bf16.mxu0 0
        %1916 = vmatpush1.bf16.msra.mxu0 0
        %1917 = vmatprep.subr.bf16.mxu0 0
        %1918 = vmatpush1.bf16.msra.mxu0 0
        %1919 = vmatprep.subr.bf16.mxu0 0
        %1920 = vmatpush1.bf16.msra.mxu0 0
        %1921 = vmatprep.subr.bf16.mxu0 0
        %1922 = vmatpush1.bf16.msra.mxu0 0
        %1923 = vmatprep.subr.bf16.mxu0 0
        %1924 = vmatpush1.bf16.msra.mxu0 0
        %1925 = vmatprep.subr.bf16.mxu0 0
        %1926 = vmatpush1.bf16.msra.mxu0 0
        %1927 = vmatprep.subr.bf16.mxu0 0
        %1928 = vmatpush1.bf16.msra.mxu0 0
        %1929 = vmatprep.subr.bf16.mxu0 0
        %1930 = vmatpush1.bf16.msra.mxu0 0
        %1931 = vmatprep.subr.bf16.mxu0 0
        %1932 = vmatpush1.bf16.msra.mxu0 0
        %1933 = vmatprep.subr.bf16.mxu0 0
        %1934 = vmatpush1.bf16.msra.mxu0 0
        %1935 = vmatprep.subr.bf16.mxu0 0
        %1936 = vmatpush1.bf16.msra.mxu0 0
        %1937 = vmatprep.subr.bf16.mxu0 0
        %1938 = vmatpush1.bf16.msra.mxu0 0
        %1939 = vmatprep.subr.bf16.mxu0 0
        %1940 = vmatpush1.bf16.msra.mxu0 0
        %1941 = vmatprep.subr.bf16.mxu0 0
        %1942 = vmatpush1.bf16.msra.mxu0 0
        %1943 = vmatprep.mubr.bf16.mxu0 0
        %1944 = vmatmul.mubr.bf16.gmra.mrb[0].mxu0 %v1900
        %v1945 = vpop.f32.mrb[0].mxu0
        %v1946 = vadd.f32 0.0, %v1945
        %v1947 = vpop.f32.mrb[0].mxu0
        %v1948 = vpop.f32.mrb[0].mxu0
        %v1949 = vadd.f32 0.0, %v1948
        %v1950 = vpop.f32.mrb[0].mxu0
        %1951 = vmatprep.mubr.bf16.mxu0 0
        %1952 = vmatmul.mubr.bf16.gmra.mrb[0].mxu0 %v1903
        %v1953 = vpop.f32.mrb[0].mxu0
        %v1954 = vadd.f32 0.0, %v1953
        %v1955 = vpop.f32.mrb[0].mxu0
        %v1956 = vpop.f32.mrb[0].mxu0
        %v1957 = vadd.f32 0.0, %v1956
        %v1958 = vpop.f32.mrb[0].mxu0
        %1959 = vmatprep.mubr.bf16.mxu0 0
        %1960 = vmatmul.mubr.bf16.gmra.mrb[0].mxu0 %v1906
        %v1961 = vpop.f32.mrb[0].mxu0
        %v1962 = vadd.f32 0.0, %v1961
        %v1963 = vpop.f32.mrb[0].mxu0
        %v1964 = vpop.f32.mrb[0].mxu0
        %v1965 = vadd.f32 0.0, %v1964
        %v1966 = vpop.f32.mrb[0].mxu0
        %1967 = vmatprep.mubr.bf16.mxu0 0
        %1968 = vmatmul.mubr.bf16.gmra.mrb[0].mxu0 %v1909
        %v1969 = vpop.f32.mrb[0].mxu0
        %v1970 = vadd.f32 0.0, %v1969
        %v1971 = vpop.f32.mrb[0].mxu0
        %v1972 = vpop.f32.mrb[0].mxu0
        %v1973 = vadd.f32 0.0, %v1972
        %v1974 = vpop.f32.mrb[0].mxu0
        %1975 = vdwg.mxu0
        %v1976 = vadd.f32 %v1807, %v1946
        %v1977 = vadd.f32 %v1808, %v1949
        %v1978 = vadd.f32 %v1809, %v1954
        %v1979 = vadd.f32 %v1810, %v1957
        %v1980 = vadd.f32 %v1811, %v1962
        %v1981 = vadd.f32 %v1812, %v1965
        %v1982 = vadd.f32 %v1813, %v1970
        %v1983 = vadd.f32 %v1814, %v1973
        %1984 = vmatprep.subr.bf16.mxu0 0
        %1985 = vmatpush1.bf16.msra.mxu0 %v1010
        %1986 = vmatprep.subr.bf16.mxu0 0
        %1987 = vmatpush1.bf16.msra.mxu0 0
        %1988 = vmatprep.subr.bf16.mxu0 0
        %1989 = vmatpush1.bf16.msra.mxu0 0
        %1990 = vmatprep.subr.bf16.mxu0 0
        %1991 = vmatpush1.bf16.msra.mxu0 0
        %1992 = vmatprep.subr.bf16.mxu0 0
        %1993 = vmatpush1.bf16.msra.mxu0 0
        %1994 = vmatprep.subr.bf16.mxu0 0
        %1995 = vmatpush1.bf16.msra.mxu0 0
        %1996 = vmatprep.subr.bf16.mxu0 0
        %1997 = vmatpush1.bf16.msra.mxu0 0
        %1998 = vmatprep.subr.bf16.mxu0 0
        %1999 = vmatpush1.bf16.msra.mxu0 0
        %2000 = vmatprep.subr.bf16.mxu0 0
        %2001 = vmatpush1.bf16.msra.mxu0 0
        %2002 = vmatprep.subr.bf16.mxu0 0
        %2003 = vmatpush1.bf16.msra.mxu0 0
        %2004 = vmatprep.subr.bf16.mxu0 0
        %2005 = vmatpush1.bf16.msra.mxu0 0
        %2006 = vmatprep.subr.bf16.mxu0 0
        %2007 = vmatpush1.bf16.msra.mxu0 0
        %2008 = vmatprep.subr.bf16.mxu0 0
        %2009 = vmatpush1.bf16.msra.mxu0 0
        %2010 = vmatprep.subr.bf16.mxu0 0
        %2011 = vmatpush1.bf16.msra.mxu0 0
        %2012 = vmatprep.subr.bf16.mxu0 0
        %2013 = vmatpush1.bf16.msra.mxu0 0
        %2014 = vmatprep.subr.bf16.mxu0 0
        %2015 = vmatpush1.bf16.msra.mxu0 0
        %2016 = vmatprep.mubr.bf16.mxu0 0
        %2017 = vmatmul.mubr.bf16.gmra.mrb[0].mxu0 %v1109
        %v2018 = vpop.f32.mrb[0].mxu0
        %v2019 = vadd.f32 0.0, %v2018
        %v2020 = vpop.f32.mrb[0].mxu0
        %v2021 = vpop.f32.mrb[0].mxu0
        %v2022 = vadd.f32 0.0, %v2021
        %v2023 = vpop.f32.mrb[0].mxu0
        %2024 = vmatprep.mubr.bf16.mxu0 0
        %2025 = vmatmul.mubr.bf16.gmra.mrb[0].mxu0 %v1112
        %v2026 = vpop.f32.mrb[0].mxu0
        %v2027 = vadd.f32 0.0, %v2026
        %v2028 = vpop.f32.mrb[0].mxu0
        %v2029 = vpop.f32.mrb[0].mxu0
        %v2030 = vadd.f32 0.0, %v2029
        %v2031 = vpop.f32.mrb[0].mxu0
        %2032 = vmatprep.mubr.bf16.mxu0 0
        %2033 = vmatmul.mubr.bf16.gmra.mrb[0].mxu0 %v1115
        %v2034 = vpop.f32.mrb[0].mxu0
        %v2035 = vadd.f32 0.0, %v2034
        %v2036 = vpop.f32.mrb[0].mxu0
        %v2037 = vpop.f32.mrb[0].mxu0
        %v2038 = vadd.f32 0.0, %v2037
        %v2039 = vpop.f32.mrb[0].mxu0
        %2040 = vmatprep.mubr.bf16.mxu0 0
        %2041 = vmatmul.mubr.bf16.gmra.mrb[0].mxu0 %v1118
        %v2042 = vpop.f32.mrb[0].mxu0
        %v2043 = vadd.f32 0.0, %v2042
        %v2044 = vpop.f32.mrb[0].mxu0
        %v2045 = vpop.f32.mrb[0].mxu0
        %v2046 = vadd.f32 0.0, %v2045
        %v2047 = vpop.f32.mrb[0].mxu0
        %2048 = vdwg.mxu0
        %v2049 = vadd.f32 %v1976, %v2019
        %v2050 = vadd.f32 %v1977, %v2022
        %v2051 = vadd.f32 %v1978, %v2027
        %v2052 = vadd.f32 %v1979, %v2030
        %v2053 = vadd.f32 %v1980, %v2035
        %v2054 = vadd.f32 %v1981, %v2038
        %v2055 = vadd.f32 %v1982, %v2043
        %v2056 = vadd.f32 %v1983, %v2046
        %2057 = vmatprep.subr.bf16.mxu0 0
        %2058 = vmatpush1.bf16.msra.mxu0 %v1121
        %2059 = vmatprep.subr.bf16.mxu0 0
        %2060 = vmatpush1.bf16.msra.mxu0 0
        %2061 = vmatprep.subr.bf16.mxu0 0
        %2062 = vmatpush1.bf16.msra.mxu0 0
        %2063 = vmatprep.subr.bf16.mxu0 0
        %2064 = vmatpush1.bf16.msra.mxu0 0
        %2065 = vmatprep.subr.bf16.mxu0 0
        %2066 = vmatpush1.bf16.msra.mxu0 0
        %2067 = vmatprep.subr.bf16.mxu0 0
        %2068 = vmatpush1.bf16.msra.mxu0 0
        %2069 = vmatprep.subr.bf16.mxu0 0
        %2070 = vmatpush1.bf16.msra.mxu0 0
        %2071 = vmatprep.subr.bf16.mxu0 0
        %2072 = vmatpush1.bf16.msra.mxu0 0
        %2073 = vmatprep.subr.bf16.mxu0 0
        %2074 = vmatpush1.bf16.msra.mxu0 0
        %2075 = vmatprep.subr.bf16.mxu0 0
        %2076 = vmatpush1.bf16.msra.mxu0 0
        %2077 = vmatprep.subr.bf16.mxu0 0
        %2078 = vmatpush1.bf16.msra.mxu0 0
        %2079 = vmatprep.subr.bf16.mxu0 0
        %2080 = vmatpush1.bf16.msra.mxu0 0
        %2081 = vmatprep.subr.bf16.mxu0 0
        %2082 = vmatpush1.bf16.msra.mxu0 0
        %2083 = vmatprep.subr.bf16.mxu0 0
        %2084 = vmatpush1.bf16.msra.mxu0 0
        %2085 = vmatprep.subr.bf16.mxu0 0
        %2086 = vmatpush1.bf16.msra.mxu0 0
        %2087 = vmatprep.subr.bf16.mxu0 0
        %2088 = vmatpush1.bf16.msra.mxu0 0
        %2089 = vmatprep.mubr.bf16.mxu0 0
        %2090 = vmatmul.mubr.bf16.gmra.mrb[0].mxu0 %v1283
        %v2091 = vpop.f32.mrb[0].mxu0
        %v2092 = vadd.f32 0.0, %v2091
        %v2093 = vpop.f32.mrb[0].mxu0
        %v2094 = vpop.f32.mrb[0].mxu0
        %v2095 = vadd.f32 0.0, %v2094
        %v2096 = vpop.f32.mrb[0].mxu0
        %2097 = vmatprep.mubr.bf16.mxu0 0
        %2098 = vmatmul.mubr.bf16.gmra.mrb[0].mxu0 %v1286
        %v2099 = vpop.f32.mrb[0].mxu0
        %v2100 = vadd.f32 0.0, %v2099
        %v2101 = vpop.f32.mrb[0].mxu0
        %v2102 = vpop.f32.mrb[0].mxu0
        %v2103 = vadd.f32 0.0, %v2102
        %v2104 = vpop.f32.mrb[0].mxu0
        %2105 = vmatprep.mubr.bf16.mxu0 0
        %2106 = vmatmul.mubr.bf16.gmra.mrb[0].mxu0 %v1289
        %v2107 = vpop.f32.mrb[0].mxu0
        %v2108 = vadd.f32 0.0, %v2107
        %v2109 = vpop.f32.mrb[0].mxu0
        %v2110 = vpop.f32.mrb[0].mxu0
        %v2111 = vadd.f32 0.0, %v2110
        %v2112 = vpop.f32.mrb[0].mxu0
        %2113 = vmatprep.mubr.bf16.mxu0 0
        %2114 = vmatmul.mubr.bf16.gmra.mrb[0].mxu0 %v1292
        %v2115 = vpop.f32.mrb[0].mxu0
        %v2116 = vadd.f32 0.0, %v2115
        %v2117 = vpop.f32.mrb[0].mxu0
        %v2118 = vpop.f32.mrb[0].mxu0
        %v2119 = vadd.f32 0.0, %v2118
        %v2120 = vpop.f32.mrb[0].mxu0
        %2121 = vdwg.mxu0
        %v2122 = vadd.f32 %v2049, %v2092
        %v2123 = vadd.f32 %v2050, %v2095
        %v2124 = vadd.f32 %v2051, %v2100
        %v2125 = vadd.f32 %v2052, %v2103
        %v2126 = vadd.f32 %v2053, %v2108
        %v2127 = vadd.f32 %v2054, %v2111
        %v2128 = vadd.f32 %v2055, %v2116
        %v2129 = vadd.f32 %v2056, %v2119
        %v2130 = vld [vmem:[%s1085] sm:$0xf]
        %v2131 = vld [vmem:[%s1085 + $0x4] sm:$0x1]
        %v2132 = vld [vmem:[%s1085 + $0x8] sm:$0xf]
        %v2133 = vld [vmem:[%s1085 + $0xc] sm:$0x1]
        %v2134 = vld [vmem:[%s1085 + $0x10] sm:$0xf]
        %v2135 = vld [vmem:[%s1085 + $0x14] sm:$0x1]
        %v2136 = vld [vmem:[%s1085 + $0x18] sm:$0xf]
        %v2137 = vld [vmem:[%s1085 + $0x1c] sm:$0x1]
        %v2138 = vld [vmem:[%s1085 + $0x20] sm:$0xf]
        %v2139 = vld [vmem:[%s1085 + $0x24] sm:$0x1]
        %v2140 = vld [vmem:[%s1085 + $0x28] sm:$0xf]
        %v2141 = vld [vmem:[%s1085 + $0x2c] sm:$0x1]
        %v2142 = vld [vmem:[%s1085 + $0x30] sm:$0xf]
        %v2143 = vld [vmem:[%s1085 + $0x34] sm:$0x1]
        %v2144 = vld [vmem:[%s1085 + $0x38] sm:$0xf]
        %v2145 = vld [vmem:[%s1085 + $0x3c] sm:$0x1]
        %v2146 = vunpack.c.l.bf16 %v2130
        %v2147 = vunpack.c.l.bf16 %v2131
        %v2148 = vunpack.c.l.bf16 %v2132
        %v2149 = vunpack.c.l.bf16 %v2133
        %v2150 = vunpack.c.l.bf16 %v2134
        %v2151 = vunpack.c.l.bf16 %v2135
        %v2152 = vunpack.c.l.bf16 %v2136
        %v2153 = vunpack.c.l.bf16 %v2137
        %v2154 = vunpack.c.l.bf16 %v2138
        %v2155 = vunpack.c.l.bf16 %v2139
        %v2156 = vunpack.c.l.bf16 %v2140
        %v2157 = vunpack.c.l.bf16 %v2141
        %v2158 = vunpack.c.l.bf16 %v2142
        %v2159 = vunpack.c.l.bf16 %v2143
        %v2160 = vunpack.c.l.bf16 %v2144
        %v2161 = vunpack.c.l.bf16 %v2145
        %v2178 = vrot.slane %v2146, 1
        %v2179 = vrot.slane %v2147, 1
        %v2180 = vsel %vm451, %v2178, %v2179
        %v2181 = vrot.slane %v2148, 1
        %v2182 = vrot.slane %v2149, 1
        %v2183 = vsel %vm451, %v2181, %v2182
        %v2184 = vrot.slane %v2150, 1
        %v2185 = vrot.slane %v2151, 1
        %v2186 = vsel %vm451, %v2184, %v2185
        %v2187 = vrot.slane %v2152, 1
        %v2188 = vrot.slane %v2153, 1
        %v2189 = vsel %vm451, %v2187, %v2188
        %v2190 = vrot.slane %v2154, 1
        %v2191 = vrot.slane %v2155, 1
        %v2192 = vsel %vm451, %v2190, %v2191
        %v2193 = vrot.slane %v2156, 1
        %v2194 = vrot.slane %v2157, 1
        %v2195 = vsel %vm451, %v2193, %v2194
        %v2196 = vrot.slane %v2158, 1
        %v2197 = vrot.slane %v2159, 1
        %v2198 = vsel %vm451, %v2196, %v2197
        %v2199 = vrot.slane %v2160, 1
        %v2200 = vrot.slane %v2161, 1
        %v2201 = vsel %vm451, %v2199, %v2200
        %v2210 = vpack.c.bf16 %v2183, %v2180
        %v2211 = vpack.c.bf16 %v2189, %v2186
        %v2212 = vpack.c.bf16 %v2195, %v2192
        %v2213 = vpack.c.bf16 %v2201, %v2198
        %v2215 = vsel %vm241, %v2210, 0
        %v2218 = vsel %vm241, %v2211, 0
        %v2221 = vsel %vm241, %v2212, 0
        %v2224 = vsel %vm241, %v2213, 0
        %2226 = vmatprep.subr.bf16.mxu0 0
        %2227 = vmatpush1.bf16.msra.mxu0 %v1295
        %2228 = vmatprep.subr.bf16.mxu0 0
        %2229 = vmatpush1.bf16.msra.mxu0 0
        %2230 = vmatprep.subr.bf16.mxu0 0
        %2231 = vmatpush1.bf16.msra.mxu0 0
        %2232 = vmatprep.subr.bf16.mxu0 0
        %2233 = vmatpush1.bf16.msra.mxu0 0
        %2234 = vmatprep.subr.bf16.mxu0 0
        %2235 = vmatpush1.bf16.msra.mxu0 0
        %2236 = vmatprep.subr.bf16.mxu0 0
        %2237 = vmatpush1.bf16.msra.mxu0 0
        %2238 = vmatprep.subr.bf16.mxu0 0
        %2239 = vmatpush1.bf16.msra.mxu0 0
        %2240 = vmatprep.subr.bf16.mxu0 0
        %2241 = vmatpush1.bf16.msra.mxu0 0
        %2242 = vmatprep.subr.bf16.mxu0 0
        %2243 = vmatpush1.bf16.msra.mxu0 0
        %2244 = vmatprep.subr.bf16.mxu0 0
        %2245 = vmatpush1.bf16.msra.mxu0 0
        %2246 = vmatprep.subr.bf16.mxu0 0
        %2247 = vmatpush1.bf16.msra.mxu0 0
        %2248 = vmatprep.subr.bf16.mxu0 0
        %2249 = vmatpush1.bf16.msra.mxu0 0
        %2250 = vmatprep.subr.bf16.mxu0 0
        %2251 = vmatpush1.bf16.msra.mxu0 0
        %2252 = vmatprep.subr.bf16.mxu0 0
        %2253 = vmatpush1.bf16.msra.mxu0 0
        %2254 = vmatprep.subr.bf16.mxu0 0
        %2255 = vmatpush1.bf16.msra.mxu0 0
        %2256 = vmatprep.subr.bf16.mxu0 0
        %2257 = vmatpush1.bf16.msra.mxu0 0
        %2258 = vmatprep.mubr.bf16.mxu0 0
        %2259 = vmatmul.mubr.bf16.gmra.mrb[0].mxu0 %v2215
        %v2260 = vpop.f32.mrb[0].mxu0
        %v2261 = vadd.f32 0.0, %v2260
        %v2262 = vpop.f32.mrb[0].mxu0
        %v2263 = vpop.f32.mrb[0].mxu0
        %v2264 = vadd.f32 0.0, %v2263
        %v2265 = vpop.f32.mrb[0].mxu0
        %2266 = vmatprep.mubr.bf16.mxu0 0
        %2267 = vmatmul.mubr.bf16.gmra.mrb[0].mxu0 %v2218
        %v2268 = vpop.f32.mrb[0].mxu0
        %v2269 = vadd.f32 0.0, %v2268
        %v2270 = vpop.f32.mrb[0].mxu0
        %v2271 = vpop.f32.mrb[0].mxu0
        %v2272 = vadd.f32 0.0, %v2271
        %v2273 = vpop.f32.mrb[0].mxu0
        %2274 = vmatprep.mubr.bf16.mxu0 0
        %2275 = vmatmul.mubr.bf16.gmra.mrb[0].mxu0 %v2221
        %v2276 = vpop.f32.mrb[0].mxu0
        %v2277 = vadd.f32 0.0, %v2276
        %v2278 = vpop.f32.mrb[0].mxu0
        %v2279 = vpop.f32.mrb[0].mxu0
        %v2280 = vadd.f32 0.0, %v2279
        %v2281 = vpop.f32.mrb[0].mxu0
        %2282 = vmatprep.mubr.bf16.mxu0 0
        %2283 = vmatmul.mubr.bf16.gmra.mrb[0].mxu0 %v2224
        %v2284 = vpop.f32.mrb[0].mxu0
        %v2285 = vadd.f32 0.0, %v2284
        %v2286 = vpop.f32.mrb[0].mxu0
        %v2287 = vpop.f32.mrb[0].mxu0
        %v2288 = vadd.f32 0.0, %v2287
        %v2289 = vpop.f32.mrb[0].mxu0
        %2290 = vdwg.mxu0
        %v2291 = vadd.f32 %v2122, %v2261
        %v2292 = vadd.f32 %v2123, %v2264
        %v2293 = vadd.f32 %v2124, %v2269
        %v2294 = vadd.f32 %v2125, %v2272
        %v2295 = vadd.f32 %v2126, %v2277
        %v2296 = vadd.f32 %v2127, %v2280
        %v2297 = vadd.f32 %v2128, %v2285
        %v2298 = vadd.f32 %v2129, %v2288
        %v2299 = vadd.f32 %v1362, %v2291
        %v2300 = vadd.f32 %v1363, %v2292
        %v2301 = vadd.f32 %v1364, %v2293
        %v2302 = vadd.f32 %v1365, %v2294
        %v2303 = vadd.f32 %v1366, %v2295
        %v2304 = vadd.f32 %v1367, %v2296
        %v2305 = vadd.f32 %v1368, %v2297
        %v2306 = vadd.f32 %v1369, %v2298
        %2307 = vmatprep.subr.bf16.mxu0 0
        %2308 = vmatpush1.bf16.msra.mxu0 %v256
        %2309 = vmatprep.subr.bf16.mxu0 0
        %2310 = vmatpush1.bf16.msra.mxu0 0
        %2311 = vmatprep.subr.bf16.mxu0 0
        %2312 = vmatpush1.bf16.msra.mxu0 0
        %2313 = vmatprep.subr.bf16.mxu0 0
        %2314 = vmatpush1.bf16.msra.mxu0 0
        %2315 = vmatprep.subr.bf16.mxu0 0
        %2316 = vmatpush1.bf16.msra.mxu0 0
        %2317 = vmatprep.subr.bf16.mxu0 0
        %2318 = vmatpush1.bf16.msra.mxu0 0
        %2319 = vmatprep.subr.bf16.mxu0 0
        %2320 = vmatpush1.bf16.msra.mxu0 0
        %2321 = vmatprep.subr.bf16.mxu0 0
        %2322 = vmatpush1.bf16.msra.mxu0 0
        %2323 = vmatprep.subr.bf16.mxu0 0
        %2324 = vmatpush1.bf16.msra.mxu0 0
        %2325 = vmatprep.subr.bf16.mxu0 0
        %2326 = vmatpush1.bf16.msra.mxu0 0
        %2327 = vmatprep.subr.bf16.mxu0 0
        %2328 = vmatpush1.bf16.msra.mxu0 0
        %2329 = vmatprep.subr.bf16.mxu0 0
        %2330 = vmatpush1.bf16.msra.mxu0 0
        %2331 = vmatprep.subr.bf16.mxu0 0
        %2332 = vmatpush1.bf16.msra.mxu0 0
        %2333 = vmatprep.subr.bf16.mxu0 0
        %2334 = vmatpush1.bf16.msra.mxu0 0
        %2335 = vmatprep.subr.bf16.mxu0 0
        %2336 = vmatpush1.bf16.msra.mxu0 0
        %2337 = vmatprep.subr.bf16.mxu0 0
        %2338 = vmatpush1.bf16.msra.mxu0 0
        %2339 = vmatprep.mubr.bf16.mxu0 0
        %2340 = vmatmul.mubr.bf16.gmra.mrb[0].mxu0 %v713
        %v2341 = vpop.f32.mrb[0].mxu0
        %v2342 = vadd.f32 0.0, %v2341
        %v2343 = vpop.f32.mrb[0].mxu0
        %v2344 = vpop.f32.mrb[0].mxu0
        %v2345 = vadd.f32 0.0, %v2344
        %v2346 = vpop.f32.mrb[0].mxu0
        %2347 = vmatprep.mubr.bf16.mxu0 0
        %2348 = vmatmul.mubr.bf16.gmra.mrb[0].mxu0 %v716
        %v2349 = vpop.f32.mrb[0].mxu0
        %v2350 = vadd.f32 0.0, %v2349
        %v2351 = vpop.f32.mrb[0].mxu0
        %v2352 = vpop.f32.mrb[0].mxu0
        %v2353 = vadd.f32 0.0, %v2352
        %v2354 = vpop.f32.mrb[0].mxu0
        %2355 = vmatprep.mubr.bf16.mxu0 0
        %2356 = vmatmul.mubr.bf16.gmra.mrb[0].mxu0 %v719
        %v2357 = vpop.f32.mrb[0].mxu0
        %v2358 = vadd.f32 0.0, %v2357
        %v2359 = vpop.f32.mrb[0].mxu0
        %v2360 = vpop.f32.mrb[0].mxu0
        %v2361 = vadd.f32 0.0, %v2360
        %v2362 = vpop.f32.mrb[0].mxu0
        %2363 = vmatprep.mubr.bf16.mxu0 0
        %2364 = vmatmul.mubr.bf16.gmra.mrb[0].mxu0 %v722
        %v2365 = vpop.f32.mrb[0].mxu0
        %v2366 = vadd.f32 0.0, %v2365
        %v2367 = vpop.f32.mrb[0].mxu0
        %v2368 = vpop.f32.mrb[0].mxu0
        %v2369 = vadd.f32 0.0, %v2368
        %v2370 = vpop.f32.mrb[0].mxu0
        %2371 = vdwg.mxu0
        %2372 = vmatprep.subr.bf16.mxu0 0
        %2373 = vmatpush1.bf16.msra.mxu0 %v336
        %2374 = vmatprep.subr.bf16.mxu0 0
        %2375 = vmatpush1.bf16.msra.mxu0 0
        %2376 = vmatprep.subr.bf16.mxu0 0
        %2377 = vmatpush1.bf16.msra.mxu0 0
        %2378 = vmatprep.subr.bf16.mxu0 0
        %2379 = vmatpush1.bf16.msra.mxu0 0
        %2380 = vmatprep.subr.bf16.mxu0 0
        %2381 = vmatpush1.bf16.msra.mxu0 0
        %2382 = vmatprep.subr.bf16.mxu0 0
        %2383 = vmatpush1.bf16.msra.mxu0 0
        %2384 = vmatprep.subr.bf16.mxu0 0
        %2385 = vmatpush1.bf16.msra.mxu0 0
        %2386 = vmatprep.subr.bf16.mxu0 0
        %2387 = vmatpush1.bf16.msra.mxu0 0
        %2388 = vmatprep.subr.bf16.mxu0 0
        %2389 = vmatpush1.bf16.msra.mxu0 0
        %2390 = vmatprep.subr.bf16.mxu0 0
        %2391 = vmatpush1.bf16.msra.mxu0 0
        %2392 = vmatprep.subr.bf16.mxu0 0
        %2393 = vmatpush1.bf16.msra.mxu0 0
        %2394 = vmatprep.subr.bf16.mxu0 0
        %2395 = vmatpush1.bf16.msra.mxu0 0
        %2396 = vmatprep.subr.bf16.mxu0 0
        %2397 = vmatpush1.bf16.msra.mxu0 0
        %2398 = vmatprep.subr.bf16.mxu0 0
        %2399 = vmatpush1.bf16.msra.mxu0 0
        %2400 = vmatprep.subr.bf16.mxu0 0
        %2401 = vmatpush1.bf16.msra.mxu0 0
        %2402 = vmatprep.subr.bf16.mxu0 0
        %2403 = vmatpush1.bf16.msra.mxu0 0
        %2404 = vmatprep.mubr.bf16.mxu0 0
        %2405 = vmatmul.mubr.bf16.gmra.mrb[0].mxu0 %v602
        %v2406 = vpop.f32.mrb[0].mxu0
        %v2407 = vadd.f32 %v2342, %v2406
        %v2408 = vpop.f32.mrb[0].mxu0
        %v2409 = vpop.f32.mrb[0].mxu0
        %v2410 = vadd.f32 %v2345, %v2409
        %v2411 = vpop.f32.mrb[0].mxu0
        %2412 = vmatprep.mubr.bf16.mxu0 0
        %2413 = vmatmul.mubr.bf16.gmra.mrb[0].mxu0 %v605
        %v2414 = vpop.f32.mrb[0].mxu0
        %v2415 = vadd.f32 %v2350, %v2414
        %v2416 = vpop.f32.mrb[0].mxu0
        %v2417 = vpop.f32.mrb[0].mxu0
        %v2418 = vadd.f32 %v2353, %v2417
        %v2419 = vpop.f32.mrb[0].mxu0
        %2420 = vmatprep.mubr.bf16.mxu0 0
        %2421 = vmatmul.mubr.bf16.gmra.mrb[0].mxu0 %v608
        %v2422 = vpop.f32.mrb[0].mxu0
        %v2423 = vadd.f32 %v2358, %v2422
        %v2424 = vpop.f32.mrb[0].mxu0
        %v2425 = vpop.f32.mrb[0].mxu0
        %v2426 = vadd.f32 %v2361, %v2425
        %v2427 = vpop.f32.mrb[0].mxu0
        %2428 = vmatprep.mubr.bf16.mxu0 0
        %2429 = vmatmul.mubr.bf16.gmra.mrb[0].mxu0 %v611
        %v2430 = vpop.f32.mrb[0].mxu0
        %v2431 = vadd.f32 %v2366, %v2430
        %v2432 = vpop.f32.mrb[0].mxu0
        %v2433 = vpop.f32.mrb[0].mxu0
        %v2434 = vadd.f32 %v2369, %v2433
        %v2435 = vpop.f32.mrb[0].mxu0
        %2436 = vdwg.mxu0
        %2437 = vmatprep.subr.bf16.mxu0 0
        %2438 = vmatpush1.bf16.msra.mxu0 %v503
        %2439 = vmatprep.subr.bf16.mxu0 0
        %2440 = vmatpush1.bf16.msra.mxu0 0
        %2441 = vmatprep.subr.bf16.mxu0 0
        %2442 = vmatpush1.bf16.msra.mxu0 0
        %2443 = vmatprep.subr.bf16.mxu0 0
        %2444 = vmatpush1.bf16.msra.mxu0 0
        %2445 = vmatprep.subr.bf16.mxu0 0
        %2446 = vmatpush1.bf16.msra.mxu0 0
        %2447 = vmatprep.subr.bf16.mxu0 0
        %2448 = vmatpush1.bf16.msra.mxu0 0
        %2449 = vmatprep.subr.bf16.mxu0 0
        %2450 = vmatpush1.bf16.msra.mxu0 0
        %2451 = vmatprep.subr.bf16.mxu0 0
        %2452 = vmatpush1.bf16.msra.mxu0 0
        %2453 = vmatprep.subr.bf16.mxu0 0
        %2454 = vmatpush1.bf16.msra.mxu0 0
        %2455 = vmatprep.subr.bf16.mxu0 0
        %2456 = vmatpush1.bf16.msra.mxu0 0
        %2457 = vmatprep.subr.bf16.mxu0 0
        %2458 = vmatpush1.bf16.msra.mxu0 0
        %2459 = vmatprep.subr.bf16.mxu0 0
        %2460 = vmatpush1.bf16.msra.mxu0 0
        %2461 = vmatprep.subr.bf16.mxu0 0
        %2462 = vmatpush1.bf16.msra.mxu0 0
        %2463 = vmatprep.subr.bf16.mxu0 0
        %2464 = vmatpush1.bf16.msra.mxu0 0
        %2465 = vmatprep.subr.bf16.mxu0 0
        %2466 = vmatpush1.bf16.msra.mxu0 0
        %2467 = vmatprep.subr.bf16.mxu0 0
        %2468 = vmatpush1.bf16.msra.mxu0 0
        %2469 = vmatprep.mubr.bf16.mxu0 0
        %2470 = vmatmul.mubr.bf16.gmra.mrb[0].mxu0 %v887
        %v2471 = vpop.f32.mrb[0].mxu0
        %v2472 = vadd.f32 0.0, %v2471
        %v2473 = vpop.f32.mrb[0].mxu0
        %v2474 = vpop.f32.mrb[0].mxu0
        %v2475 = vadd.f32 0.0, %v2474
        %v2476 = vpop.f32.mrb[0].mxu0
        %2477 = vmatprep.mubr.bf16.mxu0 0
        %2478 = vmatmul.mubr.bf16.gmra.mrb[0].mxu0 %v890
        %v2479 = vpop.f32.mrb[0].mxu0
        %v2480 = vadd.f32 0.0, %v2479
        %v2481 = vpop.f32.mrb[0].mxu0
        %v2482 = vpop.f32.mrb[0].mxu0
        %v2483 = vadd.f32 0.0, %v2482
        %v2484 = vpop.f32.mrb[0].mxu0
        %2485 = vmatprep.mubr.bf16.mxu0 0
        %2486 = vmatmul.mubr.bf16.gmra.mrb[0].mxu0 %v893
        %v2487 = vpop.f32.mrb[0].mxu0
        %v2488 = vadd.f32 0.0, %v2487
        %v2489 = vpop.f32.mrb[0].mxu0
        %v2490 = vpop.f32.mrb[0].mxu0
        %v2491 = vadd.f32 0.0, %v2490
        %v2492 = vpop.f32.mrb[0].mxu0
        %2493 = vmatprep.mubr.bf16.mxu0 0
        %2494 = vmatmul.mubr.bf16.gmra.mrb[0].mxu0 %v896
        %v2495 = vpop.f32.mrb[0].mxu0
        %v2496 = vadd.f32 0.0, %v2495
        %v2497 = vpop.f32.mrb[0].mxu0
        %v2498 = vpop.f32.mrb[0].mxu0
        %v2499 = vadd.f32 0.0, %v2498
        %v2500 = vpop.f32.mrb[0].mxu0
        %2501 = vdwg.mxu0
        %v2502 = vadd.f32 %v2407, %v2472
        %v2503 = vadd.f32 %v2410, %v2475
        %v2504 = vadd.f32 %v2415, %v2480
        %v2505 = vadd.f32 %v2418, %v2483
        %v2506 = vadd.f32 %v2423, %v2488
        %v2507 = vadd.f32 %v2426, %v2491
        %v2508 = vadd.f32 %v2431, %v2496
        %v2509 = vadd.f32 %v2434, %v2499
        %2510 = vmatprep.subr.bf16.mxu0 0
        %2511 = vmatpush1.bf16.msra.mxu0 %v614
        %2512 = vmatprep.subr.bf16.mxu0 0
        %2513 = vmatpush1.bf16.msra.mxu0 0
        %2514 = vmatprep.subr.bf16.mxu0 0
        %2515 = vmatpush1.bf16.msra.mxu0 0
        %2516 = vmatprep.subr.bf16.mxu0 0
        %2517 = vmatpush1.bf16.msra.mxu0 0
        %2518 = vmatprep.subr.bf16.mxu0 0
        %2519 = vmatpush1.bf16.msra.mxu0 0
        %2520 = vmatprep.subr.bf16.mxu0 0
        %2521 = vmatpush1.bf16.msra.mxu0 0
        %2522 = vmatprep.subr.bf16.mxu0 0
        %2523 = vmatpush1.bf16.msra.mxu0 0
        %2524 = vmatprep.subr.bf16.mxu0 0
        %2525 = vmatpush1.bf16.msra.mxu0 0
        %2526 = vmatprep.subr.bf16.mxu0 0
        %2527 = vmatpush1.bf16.msra.mxu0 0
        %2528 = vmatprep.subr.bf16.mxu0 0
        %2529 = vmatpush1.bf16.msra.mxu0 0
        %2530 = vmatprep.subr.bf16.mxu0 0
        %2531 = vmatpush1.bf16.msra.mxu0 0
        %2532 = vmatprep.subr.bf16.mxu0 0
        %2533 = vmatpush1.bf16.msra.mxu0 0
        %2534 = vmatprep.subr.bf16.mxu0 0
        %2535 = vmatpush1.bf16.msra.mxu0 0
        %2536 = vmatprep.subr.bf16.mxu0 0
        %2537 = vmatpush1.bf16.msra.mxu0 0
        %2538 = vmatprep.subr.bf16.mxu0 0
        %2539 = vmatpush1.bf16.msra.mxu0 0
        %2540 = vmatprep.subr.bf16.mxu0 0
        %2541 = vmatpush1.bf16.msra.mxu0 0
        %2542 = vmatprep.mubr.bf16.mxu0 0
        %2543 = vmatmul.mubr.bf16.gmra.mrb[0].mxu0 %v998
        %v2544 = vpop.f32.mrb[0].mxu0
        %v2545 = vadd.f32 0.0, %v2544
        %v2546 = vpop.f32.mrb[0].mxu0
        %v2547 = vpop.f32.mrb[0].mxu0
        %v2548 = vadd.f32 0.0, %v2547
        %v2549 = vpop.f32.mrb[0].mxu0
        %2550 = vmatprep.mubr.bf16.mxu0 0
        %2551 = vmatmul.mubr.bf16.gmra.mrb[0].mxu0 %v1001
        %v2552 = vpop.f32.mrb[0].mxu0
        %v2553 = vadd.f32 0.0, %v2552
        %v2554 = vpop.f32.mrb[0].mxu0
        %v2555 = vpop.f32.mrb[0].mxu0
        %v2556 = vadd.f32 0.0, %v2555
        %v2557 = vpop.f32.mrb[0].mxu0
        %2558 = vmatprep.mubr.bf16.mxu0 0
        %2559 = vmatmul.mubr.bf16.gmra.mrb[0].mxu0 %v1004
        %v2560 = vpop.f32.mrb[0].mxu0
        %v2561 = vadd.f32 0.0, %v2560
        %v2562 = vpop.f32.mrb[0].mxu0
        %v2563 = vpop.f32.mrb[0].mxu0
        %v2564 = vadd.f32 0.0, %v2563
        %v2565 = vpop.f32.mrb[0].mxu0
        %2566 = vmatprep.mubr.bf16.mxu0 0
        %2567 = vmatmul.mubr.bf16.gmra.mrb[0].mxu0 %v1007
        %v2568 = vpop.f32.mrb[0].mxu0
        %v2569 = vadd.f32 0.0, %v2568
        %v2570 = vpop.f32.mrb[0].mxu0
        %v2571 = vpop.f32.mrb[0].mxu0
        %v2572 = vadd.f32 0.0, %v2571
        %v2573 = vpop.f32.mrb[0].mxu0
        %2574 = vdwg.mxu0
        %v2575 = vadd.f32 %v2502, %v2545
        %v2576 = vadd.f32 %v2503, %v2548
        %v2577 = vadd.f32 %v2504, %v2553
        %v2578 = vadd.f32 %v2505, %v2556
        %v2579 = vadd.f32 %v2506, %v2561
        %v2580 = vadd.f32 %v2507, %v2564
        %v2581 = vadd.f32 %v2508, %v2569
        %v2582 = vadd.f32 %v2509, %v2572
        %2583 = vmatprep.subr.bf16.mxu0 0
        %2584 = vmatpush1.bf16.msra.mxu0 %v725
        %2585 = vmatprep.subr.bf16.mxu0 0
        %2586 = vmatpush1.bf16.msra.mxu0 0
        %2587 = vmatprep.subr.bf16.mxu0 0
        %2588 = vmatpush1.bf16.msra.mxu0 0
        %2589 = vmatprep.subr.bf16.mxu0 0
        %2590 = vmatpush1.bf16.msra.mxu0 0
        %2591 = vmatprep.subr.bf16.mxu0 0
        %2592 = vmatpush1.bf16.msra.mxu0 0
        %2593 = vmatprep.subr.bf16.mxu0 0
        %2594 = vmatpush1.bf16.msra.mxu0 0
        %2595 = vmatprep.subr.bf16.mxu0 0
        %2596 = vmatpush1.bf16.msra.mxu0 0
        %2597 = vmatprep.subr.bf16.mxu0 0
        %2598 = vmatpush1.bf16.msra.mxu0 0
        %2599 = vmatprep.subr.bf16.mxu0 0
        %2600 = vmatpush1.bf16.msra.mxu0 0
        %2601 = vmatprep.subr.bf16.mxu0 0
        %2602 = vmatpush1.bf16.msra.mxu0 0
        %2603 = vmatprep.subr.bf16.mxu0 0
        %2604 = vmatpush1.bf16.msra.mxu0 0
        %2605 = vmatprep.subr.bf16.mxu0 0
        %2606 = vmatpush1.bf16.msra.mxu0 0
        %2607 = vmatprep.subr.bf16.mxu0 0
        %2608 = vmatpush1.bf16.msra.mxu0 0
        %2609 = vmatprep.subr.bf16.mxu0 0
        %2610 = vmatpush1.bf16.msra.mxu0 0
        %2611 = vmatprep.subr.bf16.mxu0 0
        %2612 = vmatpush1.bf16.msra.mxu0 0
        %2613 = vmatprep.subr.bf16.mxu0 0
        %2614 = vmatpush1.bf16.msra.mxu0 0
        %2615 = vmatprep.mubr.bf16.mxu0 0
        %2616 = vmatmul.mubr.bf16.gmra.mrb[0].mxu0 %v1109
        %v2617 = vpop.f32.mrb[0].mxu0
        %v2618 = vadd.f32 0.0, %v2617
        %v2619 = vpop.f32.mrb[0].mxu0
        %v2620 = vpop.f32.mrb[0].mxu0
        %v2621 = vadd.f32 0.0, %v2620
        %v2622 = vpop.f32.mrb[0].mxu0
        %2623 = vmatprep.mubr.bf16.mxu0 0
        %2624 = vmatmul.mubr.bf16.gmra.mrb[0].mxu0 %v1112
        %v2625 = vpop.f32.mrb[0].mxu0
        %v2626 = vadd.f32 0.0, %v2625
        %v2627 = vpop.f32.mrb[0].mxu0
        %v2628 = vpop.f32.mrb[0].mxu0
        %v2629 = vadd.f32 0.0, %v2628
        %v2630 = vpop.f32.mrb[0].mxu0
        %2631 = vmatprep.mubr.bf16.mxu0 0
        %2632 = vmatmul.mubr.bf16.gmra.mrb[0].mxu0 %v1115
        %v2633 = vpop.f32.mrb[0].mxu0
        %v2634 = vadd.f32 0.0, %v2633
        %v2635 = vpop.f32.mrb[0].mxu0
        %v2636 = vpop.f32.mrb[0].mxu0
        %v2637 = vadd.f32 0.0, %v2636
        %v2638 = vpop.f32.mrb[0].mxu0
        %2639 = vmatprep.mubr.bf16.mxu0 0
        %2640 = vmatmul.mubr.bf16.gmra.mrb[0].mxu0 %v1118
        %v2641 = vpop.f32.mrb[0].mxu0
        %v2642 = vadd.f32 0.0, %v2641
        %v2643 = vpop.f32.mrb[0].mxu0
        %v2644 = vpop.f32.mrb[0].mxu0
        %v2645 = vadd.f32 0.0, %v2644
        %v2646 = vpop.f32.mrb[0].mxu0
        %2647 = vdwg.mxu0
        %v2648 = vadd.f32 %v2575, %v2618
        %v2649 = vadd.f32 %v2576, %v2621
        %v2650 = vadd.f32 %v2577, %v2626
        %v2651 = vadd.f32 %v2578, %v2629
        %v2652 = vadd.f32 %v2579, %v2634
        %v2653 = vadd.f32 %v2580, %v2637
        %v2654 = vadd.f32 %v2581, %v2642
        %v2655 = vadd.f32 %v2582, %v2645
        %2656 = vmatprep.subr.bf16.mxu0 0
        %2657 = vmatpush1.bf16.msra.mxu0 %v899
        %2658 = vmatprep.subr.bf16.mxu0 0
        %2659 = vmatpush1.bf16.msra.mxu0 0
        %2660 = vmatprep.subr.bf16.mxu0 0
        %2661 = vmatpush1.bf16.msra.mxu0 0
        %2662 = vmatprep.subr.bf16.mxu0 0
        %2663 = vmatpush1.bf16.msra.mxu0 0
        %2664 = vmatprep.subr.bf16.mxu0 0
        %2665 = vmatpush1.bf16.msra.mxu0 0
        %2666 = vmatprep.subr.bf16.mxu0 0
        %2667 = vmatpush1.bf16.msra.mxu0 0
        %2668 = vmatprep.subr.bf16.mxu0 0
        %2669 = vmatpush1.bf16.msra.mxu0 0
        %2670 = vmatprep.subr.bf16.mxu0 0
        %2671 = vmatpush1.bf16.msra.mxu0 0
        %2672 = vmatprep.subr.bf16.mxu0 0
        %2673 = vmatpush1.bf16.msra.mxu0 0
        %2674 = vmatprep.subr.bf16.mxu0 0
        %2675 = vmatpush1.bf16.msra.mxu0 0
        %2676 = vmatprep.subr.bf16.mxu0 0
        %2677 = vmatpush1.bf16.msra.mxu0 0
        %2678 = vmatprep.subr.bf16.mxu0 0
        %2679 = vmatpush1.bf16.msra.mxu0 0
        %2680 = vmatprep.subr.bf16.mxu0 0
        %2681 = vmatpush1.bf16.msra.mxu0 0
        %2682 = vmatprep.subr.bf16.mxu0 0
        %2683 = vmatpush1.bf16.msra.mxu0 0
        %2684 = vmatprep.subr.bf16.mxu0 0
        %2685 = vmatpush1.bf16.msra.mxu0 0
        %2686 = vmatprep.subr.bf16.mxu0 0
        %2687 = vmatpush1.bf16.msra.mxu0 0
        %2688 = vmatprep.mubr.bf16.mxu0 0
        %2689 = vmatmul.mubr.bf16.gmra.mrb[0].mxu0 %v1283
        %v2690 = vpop.f32.mrb[0].mxu0
        %v2691 = vadd.f32 0.0, %v2690
        %v2692 = vpop.f32.mrb[0].mxu0
        %v2693 = vpop.f32.mrb[0].mxu0
        %v2694 = vadd.f32 0.0, %v2693
        %v2695 = vpop.f32.mrb[0].mxu0
        %2696 = vmatprep.mubr.bf16.mxu0 0
        %2697 = vmatmul.mubr.bf16.gmra.mrb[0].mxu0 %v1286
        %v2698 = vpop.f32.mrb[0].mxu0
        %v2699 = vadd.f32 0.0, %v2698
        %v2700 = vpop.f32.mrb[0].mxu0
        %v2701 = vpop.f32.mrb[0].mxu0
        %v2702 = vadd.f32 0.0, %v2701
        %v2703 = vpop.f32.mrb[0].mxu0
        %2704 = vmatprep.mubr.bf16.mxu0 0
        %2705 = vmatmul.mubr.bf16.gmra.mrb[0].mxu0 %v1289
        %v2706 = vpop.f32.mrb[0].mxu0
        %v2707 = vadd.f32 0.0, %v2706
        %v2708 = vpop.f32.mrb[0].mxu0
        %v2709 = vpop.f32.mrb[0].mxu0
        %v2710 = vadd.f32 0.0, %v2709
        %v2711 = vpop.f32.mrb[0].mxu0
        %2712 = vmatprep.mubr.bf16.mxu0 0
        %2713 = vmatmul.mubr.bf16.gmra.mrb[0].mxu0 %v1292
        %v2714 = vpop.f32.mrb[0].mxu0
        %v2715 = vadd.f32 0.0, %v2714
        %v2716 = vpop.f32.mrb[0].mxu0
        %v2717 = vpop.f32.mrb[0].mxu0
        %v2718 = vadd.f32 0.0, %v2717
        %v2719 = vpop.f32.mrb[0].mxu0
        %2720 = vdwg.mxu0
        %v2721 = vadd.f32 %v2648, %v2691
        %v2722 = vadd.f32 %v2649, %v2694
        %v2723 = vadd.f32 %v2650, %v2699
        %v2724 = vadd.f32 %v2651, %v2702
        %v2725 = vadd.f32 %v2652, %v2707
        %v2726 = vadd.f32 %v2653, %v2710
        %v2727 = vadd.f32 %v2654, %v2715
        %v2728 = vadd.f32 %v2655, %v2718
        %s2729 = scalar_lea.vmem %s195, 152
        %v2730 = vld [vmem:[%s2729] sm:$0xf]
        %v2731 = vld [vmem:[%s2729 + $0x8] sm:$0xf]
        %v2732 = vld [vmem:[%s2729 + $0x10] sm:$0xf]
        %v2733 = vld [vmem:[%s2729 + $0x18] sm:$0xf]
        %v2734 = vld [vmem:[%s2729 + $0x20] sm:$0xf]
        %v2735 = vld [vmem:[%s2729 + $0x28] sm:$0xf]
        %v2736 = vld [vmem:[%s2729 + $0x30] sm:$0xf]
        %v2737 = vld [vmem:[%s2729 + $0x38] sm:$0xf]
        %v2738 = vunpack.c.l.bf16 %v2730
        %v2739 = vunpack.c.l.bf16 %v2731
        %v2740 = vunpack.c.l.bf16 %v2732
        %v2741 = vunpack.c.l.bf16 %v2733
        %v2742 = vunpack.c.l.bf16 %v2734
        %v2743 = vunpack.c.l.bf16 %v2735
        %v2744 = vunpack.c.l.bf16 %v2736
        %v2745 = vunpack.c.l.bf16 %v2737
        %v2746 = vpack.c.bf16 %v2739, %v2738
        %v2747 = vpack.c.bf16 %v2741, %v2740
        %v2748 = vpack.c.bf16 %v2743, %v2742
        %v2749 = vpack.c.bf16 %v2745, %v2744
        %v2751 = vsel %vm241, %v2746, 0
        %v2754 = vsel %vm241, %v2747, 0
        %v2757 = vsel %vm241, %v2748, 0
        %v2760 = vsel %vm241, %v2749, 0
        %2762 = vmatprep.subr.bf16.mxu0 0
        %2763 = vmatpush1.bf16.msra.mxu0 %v1010
        %2764 = vmatprep.subr.bf16.mxu0 0
        %2765 = vmatpush1.bf16.msra.mxu0 0
        %2766 = vmatprep.subr.bf16.mxu0 0
        %2767 = vmatpush1.bf16.msra.mxu0 0
        %2768 = vmatprep.subr.bf16.mxu0 0
        %2769 = vmatpush1.bf16.msra.mxu0 0
        %2770 = vmatprep.subr.bf16.mxu0 0
        %2771 = vmatpush1.bf16.msra.mxu0 0
        %2772 = vmatprep.subr.bf16.mxu0 0
        %2773 = vmatpush1.bf16.msra.mxu0 0
        %2774 = vmatprep.subr.bf16.mxu0 0
        %2775 = vmatpush1.bf16.msra.mxu0 0
        %2776 = vmatprep.subr.bf16.mxu0 0
        %2777 = vmatpush1.bf16.msra.mxu0 0
        %2778 = vmatprep.subr.bf16.mxu0 0
        %2779 = vmatpush1.bf16.msra.mxu0 0
        %2780 = vmatprep.subr.bf16.mxu0 0
        %2781 = vmatpush1.bf16.msra.mxu0 0
        %2782 = vmatprep.subr.bf16.mxu0 0
        %2783 = vmatpush1.bf16.msra.mxu0 0
        %2784 = vmatprep.subr.bf16.mxu0 0
        %2785 = vmatpush1.bf16.msra.mxu0 0
        %2786 = vmatprep.subr.bf16.mxu0 0
        %2787 = vmatpush1.bf16.msra.mxu0 0
        %2788 = vmatprep.subr.bf16.mxu0 0
        %2789 = vmatpush1.bf16.msra.mxu0 0
        %2790 = vmatprep.subr.bf16.mxu0 0
        %2791 = vmatpush1.bf16.msra.mxu0 0
        %2792 = vmatprep.subr.bf16.mxu0 0
        %2793 = vmatpush1.bf16.msra.mxu0 0
        %2794 = vmatprep.mubr.bf16.mxu0 0
        %2795 = vmatmul.mubr.bf16.gmra.mrb[0].mxu0 %v2751
        %v2796 = vpop.f32.mrb[0].mxu0
        %v2797 = vadd.f32 0.0, %v2796
        %v2798 = vpop.f32.mrb[0].mxu0
        %v2799 = vpop.f32.mrb[0].mxu0
        %v2800 = vadd.f32 0.0, %v2799
        %v2801 = vpop.f32.mrb[0].mxu0
        %2802 = vmatprep.mubr.bf16.mxu0 0
        %2803 = vmatmul.mubr.bf16.gmra.mrb[0].mxu0 %v2754
        %v2804 = vpop.f32.mrb[0].mxu0
        %v2805 = vadd.f32 0.0, %v2804
        %v2806 = vpop.f32.mrb[0].mxu0
        %v2807 = vpop.f32.mrb[0].mxu0
        %v2808 = vadd.f32 0.0, %v2807
        %v2809 = vpop.f32.mrb[0].mxu0
        %2810 = vmatprep.mubr.bf16.mxu0 0
        %2811 = vmatmul.mubr.bf16.gmra.mrb[0].mxu0 %v2757
        %v2812 = vpop.f32.mrb[0].mxu0
        %v2813 = vadd.f32 0.0, %v2812
        %v2814 = vpop.f32.mrb[0].mxu0
        %v2815 = vpop.f32.mrb[0].mxu0
        %v2816 = vadd.f32 0.0, %v2815
        %v2817 = vpop.f32.mrb[0].mxu0
        %2818 = vmatprep.mubr.bf16.mxu0 0
        %2819 = vmatmul.mubr.bf16.gmra.mrb[0].mxu0 %v2760
        %v2820 = vpop.f32.mrb[0].mxu0
        %v2821 = vadd.f32 0.0, %v2820
        %v2822 = vpop.f32.mrb[0].mxu0
        %v2823 = vpop.f32.mrb[0].mxu0
        %v2824 = vadd.f32 0.0, %v2823
        %v2825 = vpop.f32.mrb[0].mxu0
        %2826 = vdwg.mxu0
        %v2827 = vadd.f32 %v2721, %v2797
        %v2828 = vadd.f32 %v2722, %v2800
        %v2829 = vadd.f32 %v2723, %v2805
        %v2830 = vadd.f32 %v2724, %v2808
        %v2831 = vadd.f32 %v2725, %v2813
        %v2832 = vadd.f32 %v2726, %v2816
        %v2833 = vadd.f32 %v2727, %v2821
        %v2834 = vadd.f32 %v2728, %v2824
        %s2835 = scalar_lea.vmem %s195, 224
        %v2836 = vld [vmem:[%s2835] sm:$0xf]
        %v2837 = vld [vmem:[%s2835 + $0x8] sm:$0xf]
        %v2838 = vld [vmem:[%s2835 + $0x10] sm:$0xf]
        %v2839 = vld [vmem:[%s2835 + $0x18] sm:$0xf]
        %v2840 = vld [vmem:[%s2835 + $0x20] sm:$0xf]
        %v2841 = vld [vmem:[%s2835 + $0x28] sm:$0xf]
        %v2842 = vld [vmem:[%s2835 + $0x30] sm:$0xf]
        %v2843 = vld [vmem:[%s2835 + $0x38] sm:$0xf]
        %v2844 = vunpack.c.l.bf16 %v2836
        %v2845 = vunpack.c.l.bf16 %v2837
        %v2846 = vunpack.c.l.bf16 %v2838
        %v2847 = vunpack.c.l.bf16 %v2839
        %v2848 = vunpack.c.l.bf16 %v2840
        %v2849 = vunpack.c.l.bf16 %v2841
        %v2850 = vunpack.c.l.bf16 %v2842
        %v2851 = vunpack.c.l.bf16 %v2843
        %v2852 = vpack.c.bf16 %v2845, %v2844
        %v2853 = vpack.c.bf16 %v2847, %v2846
        %v2854 = vpack.c.bf16 %v2849, %v2848
        %v2855 = vpack.c.bf16 %v2851, %v2850
        %v2857 = vsel %vm241, %v2852, 0
        %v2860 = vsel %vm241, %v2853, 0
        %v2863 = vsel %vm241, %v2854, 0
        %v2866 = vsel %vm241, %v2855, 0
        %2868 = vmatprep.subr.bf16.mxu0 0
        %2869 = vmatpush1.bf16.msra.mxu0 %v1121
        %2870 = vmatprep.subr.bf16.mxu0 0
        %2871 = vmatpush1.bf16.msra.mxu0 0
        %2872 = vmatprep.subr.bf16.mxu0 0
        %2873 = vmatpush1.bf16.msra.mxu0 0
        %2874 = vmatprep.subr.bf16.mxu0 0
        %2875 = vmatpush1.bf16.msra.mxu0 0
        %2876 = vmatprep.subr.bf16.mxu0 0
        %2877 = vmatpush1.bf16.msra.mxu0 0
        %2878 = vmatprep.subr.bf16.mxu0 0
        %2879 = vmatpush1.bf16.msra.mxu0 0
        %2880 = vmatprep.subr.bf16.mxu0 0
        %2881 = vmatpush1.bf16.msra.mxu0 0
        %2882 = vmatprep.subr.bf16.mxu0 0
        %2883 = vmatpush1.bf16.msra.mxu0 0
        %2884 = vmatprep.subr.bf16.mxu0 0
        %2885 = vmatpush1.bf16.msra.mxu0 0
        %2886 = vmatprep.subr.bf16.mxu0 0
        %2887 = vmatpush1.bf16.msra.mxu0 0
        %2888 = vmatprep.subr.bf16.mxu0 0
        %2889 = vmatpush1.bf16.msra.mxu0 0
        %2890 = vmatprep.subr.bf16.mxu0 0
        %2891 = vmatpush1.bf16.msra.mxu0 0
        %2892 = vmatprep.subr.bf16.mxu0 0
        %2893 = vmatpush1.bf16.msra.mxu0 0
        %2894 = vmatprep.subr.bf16.mxu0 0
        %2895 = vmatpush1.bf16.msra.mxu0 0
        %2896 = vmatprep.subr.bf16.mxu0 0
        %2897 = vmatpush1.bf16.msra.mxu0 0
        %2898 = vmatprep.subr.bf16.mxu0 0
        %2899 = vmatpush1.bf16.msra.mxu0 0
        %2900 = vmatprep.mubr.bf16.mxu0 0
        %2901 = vmatmul.mubr.bf16.gmra.mrb[0].mxu0 %v2857
        %v2902 = vpop.f32.mrb[0].mxu0
        %v2903 = vadd.f32 0.0, %v2902
        %v2904 = vpop.f32.mrb[0].mxu0
        %v2905 = vpop.f32.mrb[0].mxu0
        %v2906 = vadd.f32 0.0, %v2905
        %v2907 = vpop.f32.mrb[0].mxu0
        %2908 = vmatprep.mubr.bf16.mxu0 0
        %2909 = vmatmul.mubr.bf16.gmra.mrb[0].mxu0 %v2860
        %v2910 = vpop.f32.mrb[0].mxu0
        %v2911 = vadd.f32 0.0, %v2910
        %v2912 = vpop.f32.mrb[0].mxu0
        %v2913 = vpop.f32.mrb[0].mxu0
        %v2914 = vadd.f32 0.0, %v2913
        %v2915 = vpop.f32.mrb[0].mxu0
        %2916 = vmatprep.mubr.bf16.mxu0 0
        %2917 = vmatmul.mubr.bf16.gmra.mrb[0].mxu0 %v2863
        %v2918 = vpop.f32.mrb[0].mxu0
        %v2919 = vadd.f32 0.0, %v2918
        %v2920 = vpop.f32.mrb[0].mxu0
        %v2921 = vpop.f32.mrb[0].mxu0
        %v2922 = vadd.f32 0.0, %v2921
        %v2923 = vpop.f32.mrb[0].mxu0
        %2924 = vmatprep.mubr.bf16.mxu0 0
        %2925 = vmatmul.mubr.bf16.gmra.mrb[0].mxu0 %v2866
        %v2926 = vpop.f32.mrb[0].mxu0
        %v2927 = vadd.f32 0.0, %v2926
        %v2928 = vpop.f32.mrb[0].mxu0
        %v2929 = vpop.f32.mrb[0].mxu0
        %v2930 = vadd.f32 0.0, %v2929
        %v2931 = vpop.f32.mrb[0].mxu0
        %2932 = vdwg.mxu0
        %v2933 = vadd.f32 %v2827, %v2903
        %v2934 = vadd.f32 %v2828, %v2906
        %v2935 = vadd.f32 %v2829, %v2911
        %v2936 = vadd.f32 %v2830, %v2914
        %v2937 = vadd.f32 %v2831, %v2919
        %v2938 = vadd.f32 %v2832, %v2922
        %v2939 = vadd.f32 %v2833, %v2927
        %v2940 = vadd.f32 %v2834, %v2930
        %v2941 = vld [vmem:[%s2729] sm:$0xf]
        %v2942 = vld [vmem:[%s2729 + $0x4] sm:$0x1]
        %v2943 = vld [vmem:[%s2729 + $0x8] sm:$0xf]
        %v2944 = vld [vmem:[%s2729 + $0xc] sm:$0x1]
        %v2945 = vld [vmem:[%s2729 + $0x10] sm:$0xf]
        %v2946 = vld [vmem:[%s2729 + $0x14] sm:$0x1]
        %v2947 = vld [vmem:[%s2729 + $0x18] sm:$0xf]
        %v2948 = vld [vmem:[%s2729 + $0x1c] sm:$0x1]
        %v2949 = vld [vmem:[%s2729 + $0x20] sm:$0xf]
        %v2950 = vld [vmem:[%s2729 + $0x24] sm:$0x1]
        %v2951 = vld [vmem:[%s2729 + $0x28] sm:$0xf]
        %v2952 = vld [vmem:[%s2729 + $0x2c] sm:$0x1]
        %v2953 = vld [vmem:[%s2729 + $0x30] sm:$0xf]
        %v2954 = vld [vmem:[%s2729 + $0x34] sm:$0x1]
        %v2955 = vld [vmem:[%s2729 + $0x38] sm:$0xf]
        %v2956 = vld [vmem:[%s2729 + $0x3c] sm:$0x1]
        %v2957 = vunpack.c.l.bf16 %v2941
        %v2958 = vunpack.c.l.bf16 %v2942
        %v2959 = vunpack.c.l.bf16 %v2943
        %v2960 = vunpack.c.l.bf16 %v2944
        %v2961 = vunpack.c.l.bf16 %v2945
        %v2962 = vunpack.c.l.bf16 %v2946
        %v2963 = vunpack.c.l.bf16 %v2947
        %v2964 = vunpack.c.l.bf16 %v2948
        %v2965 = vunpack.c.l.bf16 %v2949
        %v2966 = vunpack.c.l.bf16 %v2950
        %v2967 = vunpack.c.l.bf16 %v2951
        %v2968 = vunpack.c.l.bf16 %v2952
        %v2969 = vunpack.c.l.bf16 %v2953
        %v2970 = vunpack.c.l.bf16 %v2954
        %v2971 = vunpack.c.l.bf16 %v2955
        %v2972 = vunpack.c.l.bf16 %v2956
        %v2989 = vrot.slane %v2957, 1
        %v2990 = vrot.slane %v2958, 1
        %v2991 = vsel %vm451, %v2989, %v2990
        %v2992 = vrot.slane %v2959, 1
        %v2993 = vrot.slane %v2960, 1
        %v2994 = vsel %vm451, %v2992, %v2993
        %v2995 = vrot.slane %v2961, 1
        %v2996 = vrot.slane %v2962, 1
        %v2997 = vsel %vm451, %v2995, %v2996
        %v2998 = vrot.slane %v2963, 1
        %v2999 = vrot.slane %v2964, 1
        %v3000 = vsel %vm451, %v2998, %v2999
        %v3001 = vrot.slane %v2965, 1
        %v3002 = vrot.slane %v2966, 1
        %v3003 = vsel %vm451, %v3001, %v3002
        %v3004 = vrot.slane %v2967, 1
        %v3005 = vrot.slane %v2968, 1
        %v3006 = vsel %vm451, %v3004, %v3005
        %v3007 = vrot.slane %v2969, 1
        %v3008 = vrot.slane %v2970, 1
        %v3009 = vsel %vm451, %v3007, %v3008
        %v3010 = vrot.slane %v2971, 1
        %v3011 = vrot.slane %v2972, 1
        %v3012 = vsel %vm451, %v3010, %v3011
        %v3021 = vpack.c.bf16 %v2994, %v2991
        %v3022 = vpack.c.bf16 %v3000, %v2997
        %v3023 = vpack.c.bf16 %v3006, %v3003
        %v3024 = vpack.c.bf16 %v3012, %v3009
        %v3026 = vsel %vm241, %v3021, 0
        %v3029 = vsel %vm241, %v3022, 0
        %v3032 = vsel %vm241, %v3023, 0
        %v3035 = vsel %vm241, %v3024, 0
        %3037 = vmatprep.subr.bf16.mxu0 0
        %3038 = vmatpush1.bf16.msra.mxu0 %v1295
        %3039 = vmatprep.subr.bf16.mxu0 0
        %3040 = vmatpush1.bf16.msra.mxu0 0
        %3041 = vmatprep.subr.bf16.mxu0 0
        %3042 = vmatpush1.bf16.msra.mxu0 0
        %3043 = vmatprep.subr.bf16.mxu0 0
        %3044 = vmatpush1.bf16.msra.mxu0 0
        %3045 = vmatprep.subr.bf16.mxu0 0
        %3046 = vmatpush1.bf16.msra.mxu0 0
        %3047 = vmatprep.subr.bf16.mxu0 0
        %3048 = vmatpush1.bf16.msra.mxu0 0
        %3049 = vmatprep.subr.bf16.mxu0 0
        %3050 = vmatpush1.bf16.msra.mxu0 0
        %3051 = vmatprep.subr.bf16.mxu0 0
        %3052 = vmatpush1.bf16.msra.mxu0 0
        %3053 = vmatprep.subr.bf16.mxu0 0
        %3054 = vmatpush1.bf16.msra.mxu0 0
        %3055 = vmatprep.subr.bf16.mxu0 0
        %3056 = vmatpush1.bf16.msra.mxu0 0
        %3057 = vmatprep.subr.bf16.mxu0 0
        %3058 = vmatpush1.bf16.msra.mxu0 0
        %3059 = vmatprep.subr.bf16.mxu0 0
        %3060 = vmatpush1.bf16.msra.mxu0 0
        %3061 = vmatprep.subr.bf16.mxu0 0
        %3062 = vmatpush1.bf16.msra.mxu0 0
        %3063 = vmatprep.subr.bf16.mxu0 0
        %3064 = vmatpush1.bf16.msra.mxu0 0
        %3065 = vmatprep.subr.bf16.mxu0 0
        %3066 = vmatpush1.bf16.msra.mxu0 0
        %3067 = vmatprep.subr.bf16.mxu0 0
        %3068 = vmatpush1.bf16.msra.mxu0 0
        %3069 = vmatprep.mubr.bf16.mxu0 0
        %3070 = vmatmul.mubr.bf16.gmra.mrb[0].mxu0 %v3026
        %v3071 = vpop.f32.mrb[0].mxu0
        %v3072 = vadd.f32 0.0, %v3071
        %v3073 = vpop.f32.mrb[0].mxu0
        %v3074 = vpop.f32.mrb[0].mxu0
        %v3075 = vadd.f32 0.0, %v3074
        %v3076 = vpop.f32.mrb[0].mxu0
        %3077 = vmatprep.mubr.bf16.mxu0 0
        %3078 = vmatmul.mubr.bf16.gmra.mrb[0].mxu0 %v3029
        %v3079 = vpop.f32.mrb[0].mxu0
        %v3080 = vadd.f32 0.0, %v3079
        %v3081 = vpop.f32.mrb[0].mxu0
        %v3082 = vpop.f32.mrb[0].mxu0
        %v3083 = vadd.f32 0.0, %v3082
        %v3084 = vpop.f32.mrb[0].mxu0
        %3085 = vmatprep.mubr.bf16.mxu0 0
        %3086 = vmatmul.mubr.bf16.gmra.mrb[0].mxu0 %v3032
        %v3087 = vpop.f32.mrb[0].mxu0
        %v3088 = vadd.f32 0.0, %v3087
        %v3089 = vpop.f32.mrb[0].mxu0
        %v3090 = vpop.f32.mrb[0].mxu0
        %v3091 = vadd.f32 0.0, %v3090
        %v3092 = vpop.f32.mrb[0].mxu0
        %3093 = vmatprep.mubr.bf16.mxu0 0
        %3094 = vmatmul.mubr.bf16.gmra.mrb[0].mxu0 %v3035
        %v3095 = vpop.f32.mrb[0].mxu0
        %v3096 = vadd.f32 0.0, %v3095
        %v3097 = vpop.f32.mrb[0].mxu0
        %v3098 = vpop.f32.mrb[0].mxu0
        %v3099 = vadd.f32 0.0, %v3098
        %v3100 = vpop.f32.mrb[0].mxu0
        %3101 = vdwg.mxu0
        %v3102 = vadd.f32 %v2933, %v3072
        %v3103 = vadd.f32 %v2934, %v3075
        %v3104 = vadd.f32 %v2935, %v3080
        %v3105 = vadd.f32 %v2936, %v3083
        %v3106 = vadd.f32 %v2937, %v3088
        %v3107 = vadd.f32 %v2938, %v3091
        %v3108 = vadd.f32 %v2939, %v3096
        %v3109 = vadd.f32 %v2940, %v3099
        %v3110 = vadd.f32 %v2299, %v3102
        %v3111 = vadd.f32 %v2300, %v3103
        %v3112 = vadd.f32 %v2301, %v3104
        %v3113 = vadd.f32 %v2302, %v3105
        %v3114 = vadd.f32 %v2303, %v3106
        %v3115 = vadd.f32 %v2304, %v3107
        %v3116 = vadd.f32 %v2305, %v3108
        %v3117 = vadd.f32 %v2306, %v3109
        %3118 = vmatprep.subr.bf16.mxu0 0
        %3119 = vmatpush1.bf16.msra.mxu0 %v256
        %3120 = vmatprep.subr.bf16.mxu0 0
        %3121 = vmatpush1.bf16.msra.mxu0 0
        %3122 = vmatprep.subr.bf16.mxu0 0
        %3123 = vmatpush1.bf16.msra.mxu0 0
        %3124 = vmatprep.subr.bf16.mxu0 0
        %3125 = vmatpush1.bf16.msra.mxu0 0
        %3126 = vmatprep.subr.bf16.mxu0 0
        %3127 = vmatpush1.bf16.msra.mxu0 0
        %3128 = vmatprep.subr.bf16.mxu0 0
        %3129 = vmatpush1.bf16.msra.mxu0 0
        %3130 = vmatprep.subr.bf16.mxu0 0
        %3131 = vmatpush1.bf16.msra.mxu0 0
        %3132 = vmatprep.subr.bf16.mxu0 0
        %3133 = vmatpush1.bf16.msra.mxu0 0
        %3134 = vmatprep.subr.bf16.mxu0 0
        %3135 = vmatpush1.bf16.msra.mxu0 0
        %3136 = vmatprep.subr.bf16.mxu0 0
        %3137 = vmatpush1.bf16.msra.mxu0 0
        %3138 = vmatprep.subr.bf16.mxu0 0
        %3139 = vmatpush1.bf16.msra.mxu0 0
        %3140 = vmatprep.subr.bf16.mxu0 0
        %3141 = vmatpush1.bf16.msra.mxu0 0
        %3142 = vmatprep.subr.bf16.mxu0 0
        %3143 = vmatpush1.bf16.msra.mxu0 0
        %3144 = vmatprep.subr.bf16.mxu0 0
        %3145 = vmatpush1.bf16.msra.mxu0 0
        %3146 = vmatprep.subr.bf16.mxu0 0
        %3147 = vmatpush1.bf16.msra.mxu0 0
        %3148 = vmatprep.subr.bf16.mxu0 0
        %3149 = vmatpush1.bf16.msra.mxu0 0
        %3150 = vmatprep.mubr.bf16.mxu0 0
        %3151 = vmatmul.mubr.bf16.gmra.mrb[0].mxu0 %v887
        %v3152 = vpop.f32.mrb[0].mxu0
        %v3153 = vadd.f32 0.0, %v3152
        %v3154 = vpop.f32.mrb[0].mxu0
        %v3155 = vpop.f32.mrb[0].mxu0
        %v3156 = vadd.f32 0.0, %v3155
        %v3157 = vpop.f32.mrb[0].mxu0
        %3158 = vmatprep.mubr.bf16.mxu0 0
        %3159 = vmatmul.mubr.bf16.gmra.mrb[0].mxu0 %v890
        %v3160 = vpop.f32.mrb[0].mxu0
        %v3161 = vadd.f32 0.0, %v3160
        %v3162 = vpop.f32.mrb[0].mxu0
        %v3163 = vpop.f32.mrb[0].mxu0
        %v3164 = vadd.f32 0.0, %v3163
        %v3165 = vpop.f32.mrb[0].mxu0
        %3166 = vmatprep.mubr.bf16.mxu0 0
        %3167 = vmatmul.mubr.bf16.gmra.mrb[0].mxu0 %v893
        %v3168 = vpop.f32.mrb[0].mxu0
        %v3169 = vadd.f32 0.0, %v3168
        %v3170 = vpop.f32.mrb[0].mxu0
        %v3171 = vpop.f32.mrb[0].mxu0
        %v3172 = vadd.f32 0.0, %v3171
        %v3173 = vpop.f32.mrb[0].mxu0
        %3174 = vmatprep.mubr.bf16.mxu0 0
        %3175 = vmatmul.mubr.bf16.gmra.mrb[0].mxu0 %v896
        %v3176 = vpop.f32.mrb[0].mxu0
        %v3177 = vadd.f32 0.0, %v3176
        %v3178 = vpop.f32.mrb[0].mxu0
        %v3179 = vpop.f32.mrb[0].mxu0
        %v3180 = vadd.f32 0.0, %v3179
        %v3181 = vpop.f32.mrb[0].mxu0
        %3182 = vdwg.mxu0
        %3183 = vmatprep.subr.bf16.mxu0 0
        %3184 = vmatpush1.bf16.msra.mxu0 %v336
        %3185 = vmatprep.subr.bf16.mxu0 0
        %3186 = vmatpush1.bf16.msra.mxu0 0
        %3187 = vmatprep.subr.bf16.mxu0 0
        %3188 = vmatpush1.bf16.msra.mxu0 0
        %3189 = vmatprep.subr.bf16.mxu0 0
        %3190 = vmatpush1.bf16.msra.mxu0 0
        %3191 = vmatprep.subr.bf16.mxu0 0
        %3192 = vmatpush1.bf16.msra.mxu0 0
        %3193 = vmatprep.subr.bf16.mxu0 0
        %3194 = vmatpush1.bf16.msra.mxu0 0
        %3195 = vmatprep.subr.bf16.mxu0 0
        %3196 = vmatpush1.bf16.msra.mxu0 0
        %3197 = vmatprep.subr.bf16.mxu0 0
        %3198 = vmatpush1.bf16.msra.mxu0 0
        %3199 = vmatprep.subr.bf16.mxu0 0
        %3200 = vmatpush1.bf16.msra.mxu0 0
        %3201 = vmatprep.subr.bf16.mxu0 0
        %3202 = vmatpush1.bf16.msra.mxu0 0
        %3203 = vmatprep.subr.bf16.mxu0 0
        %3204 = vmatpush1.bf16.msra.mxu0 0
        %3205 = vmatprep.subr.bf16.mxu0 0
        %3206 = vmatpush1.bf16.msra.mxu0 0
        %3207 = vmatprep.subr.bf16.mxu0 0
        %3208 = vmatpush1.bf16.msra.mxu0 0
        %3209 = vmatprep.subr.bf16.mxu0 0
        %3210 = vmatpush1.bf16.msra.mxu0 0
        %3211 = vmatprep.subr.bf16.mxu0 0
        %3212 = vmatpush1.bf16.msra.mxu0 0
        %3213 = vmatprep.subr.bf16.mxu0 0
        %3214 = vmatpush1.bf16.msra.mxu0 0
        %3215 = vmatprep.mubr.bf16.mxu0 0
        %3216 = vmatmul.mubr.bf16.gmra.mrb[0].mxu0 %v713
        %v3217 = vpop.f32.mrb[0].mxu0
        %v3218 = vadd.f32 %v3153, %v3217
        %v3219 = vpop.f32.mrb[0].mxu0
        %v3220 = vpop.f32.mrb[0].mxu0
        %v3221 = vadd.f32 %v3156, %v3220
        %v3222 = vpop.f32.mrb[0].mxu0
        %3223 = vmatprep.mubr.bf16.mxu0 0
        %3224 = vmatmul.mubr.bf16.gmra.mrb[0].mxu0 %v716
        %v3225 = vpop.f32.mrb[0].mxu0
        %v3226 = vadd.f32 %v3161, %v3225
        %v3227 = vpop.f32.mrb[0].mxu0
        %v3228 = vpop.f32.mrb[0].mxu0
        %v3229 = vadd.f32 %v3164, %v3228
        %v3230 = vpop.f32.mrb[0].mxu0
        %3231 = vmatprep.mubr.bf16.mxu0 0
        %3232 = vmatmul.mubr.bf16.gmra.mrb[0].mxu0 %v719
        %v3233 = vpop.f32.mrb[0].mxu0
        %v3234 = vadd.f32 %v3169, %v3233
        %v3235 = vpop.f32.mrb[0].mxu0
        %v3236 = vpop.f32.mrb[0].mxu0
        %v3237 = vadd.f32 %v3172, %v3236
        %v3238 = vpop.f32.mrb[0].mxu0
        %3239 = vmatprep.mubr.bf16.mxu0 0
        %3240 = vmatmul.mubr.bf16.gmra.mrb[0].mxu0 %v722
        %v3241 = vpop.f32.mrb[0].mxu0
        %v3242 = vadd.f32 %v3177, %v3241
        %v3243 = vpop.f32.mrb[0].mxu0
        %v3244 = vpop.f32.mrb[0].mxu0
        %v3245 = vadd.f32 %v3180, %v3244
        %v3246 = vpop.f32.mrb[0].mxu0
        %3247 = vdwg.mxu0
        %3248 = vmatprep.subr.bf16.mxu0 0
        %3249 = vmatpush1.bf16.msra.mxu0 %v503
        %3250 = vmatprep.subr.bf16.mxu0 0
        %3251 = vmatpush1.bf16.msra.mxu0 0
        %3252 = vmatprep.subr.bf16.mxu0 0
        %3253 = vmatpush1.bf16.msra.mxu0 0
        %3254 = vmatprep.subr.bf16.mxu0 0
        %3255 = vmatpush1.bf16.msra.mxu0 0
        %3256 = vmatprep.subr.bf16.mxu0 0
        %3257 = vmatpush1.bf16.msra.mxu0 0
        %3258 = vmatprep.subr.bf16.mxu0 0
        %3259 = vmatpush1.bf16.msra.mxu0 0
        %3260 = vmatprep.subr.bf16.mxu0 0
        %3261 = vmatpush1.bf16.msra.mxu0 0
        %3262 = vmatprep.subr.bf16.mxu0 0
        %3263 = vmatpush1.bf16.msra.mxu0 0
        %3264 = vmatprep.subr.bf16.mxu0 0
        %3265 = vmatpush1.bf16.msra.mxu0 0
        %3266 = vmatprep.subr.bf16.mxu0 0
        %3267 = vmatpush1.bf16.msra.mxu0 0
        %3268 = vmatprep.subr.bf16.mxu0 0
        %3269 = vmatpush1.bf16.msra.mxu0 0
        %3270 = vmatprep.subr.bf16.mxu0 0
        %3271 = vmatpush1.bf16.msra.mxu0 0
        %3272 = vmatprep.subr.bf16.mxu0 0
        %3273 = vmatpush1.bf16.msra.mxu0 0
        %3274 = vmatprep.subr.bf16.mxu0 0
        %3275 = vmatpush1.bf16.msra.mxu0 0
        %3276 = vmatprep.subr.bf16.mxu0 0
        %3277 = vmatpush1.bf16.msra.mxu0 0
        %3278 = vmatprep.subr.bf16.mxu0 0
        %3279 = vmatpush1.bf16.msra.mxu0 0
        %3280 = vmatprep.mubr.bf16.mxu0 0
        %3281 = vmatmul.mubr.bf16.gmra.mrb[0].mxu0 %v1900
        %v3282 = vpop.f32.mrb[0].mxu0
        %v3283 = vadd.f32 0.0, %v3282
        %v3284 = vpop.f32.mrb[0].mxu0
        %v3285 = vpop.f32.mrb[0].mxu0
        %v3286 = vadd.f32 0.0, %v3285
        %v3287 = vpop.f32.mrb[0].mxu0
        %3288 = vmatprep.mubr.bf16.mxu0 0
        %3289 = vmatmul.mubr.bf16.gmra.mrb[0].mxu0 %v1903
        %v3290 = vpop.f32.mrb[0].mxu0
        %v3291 = vadd.f32 0.0, %v3290
        %v3292 = vpop.f32.mrb[0].mxu0
        %v3293 = vpop.f32.mrb[0].mxu0
        %v3294 = vadd.f32 0.0, %v3293
        %v3295 = vpop.f32.mrb[0].mxu0
        %3296 = vmatprep.mubr.bf16.mxu0 0
        %3297 = vmatmul.mubr.bf16.gmra.mrb[0].mxu0 %v1906
        %v3298 = vpop.f32.mrb[0].mxu0
        %v3299 = vadd.f32 0.0, %v3298
        %v3300 = vpop.f32.mrb[0].mxu0
        %v3301 = vpop.f32.mrb[0].mxu0
        %v3302 = vadd.f32 0.0, %v3301
        %v3303 = vpop.f32.mrb[0].mxu0
        %3304 = vmatprep.mubr.bf16.mxu0 0
        %3305 = vmatmul.mubr.bf16.gmra.mrb[0].mxu0 %v1909
        %v3306 = vpop.f32.mrb[0].mxu0
        %v3307 = vadd.f32 0.0, %v3306
        %v3308 = vpop.f32.mrb[0].mxu0
        %v3309 = vpop.f32.mrb[0].mxu0
        %v3310 = vadd.f32 0.0, %v3309
        %v3311 = vpop.f32.mrb[0].mxu0
        %3312 = vdwg.mxu0
        %v3313 = vadd.f32 %v3218, %v3283
        %v3314 = vadd.f32 %v3221, %v3286
        %v3315 = vadd.f32 %v3226, %v3291
        %v3316 = vadd.f32 %v3229, %v3294
        %v3317 = vadd.f32 %v3234, %v3299
        %v3318 = vadd.f32 %v3237, %v3302
        %v3319 = vadd.f32 %v3242, %v3307
        %v3320 = vadd.f32 %v3245, %v3310
        %3321 = vmatprep.subr.bf16.mxu0 0
        %3322 = vmatpush1.bf16.msra.mxu0 %v614
        %3323 = vmatprep.subr.bf16.mxu0 0
        %3324 = vmatpush1.bf16.msra.mxu0 0
        %3325 = vmatprep.subr.bf16.mxu0 0
        %3326 = vmatpush1.bf16.msra.mxu0 0
        %3327 = vmatprep.subr.bf16.mxu0 0
        %3328 = vmatpush1.bf16.msra.mxu0 0
        %3329 = vmatprep.subr.bf16.mxu0 0
        %3330 = vmatpush1.bf16.msra.mxu0 0
        %3331 = vmatprep.subr.bf16.mxu0 0
        %3332 = vmatpush1.bf16.msra.mxu0 0
        %3333 = vmatprep.subr.bf16.mxu0 0
        %3334 = vmatpush1.bf16.msra.mxu0 0
        %3335 = vmatprep.subr.bf16.mxu0 0
        %3336 = vmatpush1.bf16.msra.mxu0 0
        %3337 = vmatprep.subr.bf16.mxu0 0
        %3338 = vmatpush1.bf16.msra.mxu0 0
        %3339 = vmatprep.subr.bf16.mxu0 0
        %3340 = vmatpush1.bf16.msra.mxu0 0
        %3341 = vmatprep.subr.bf16.mxu0 0
        %3342 = vmatpush1.bf16.msra.mxu0 0
        %3343 = vmatprep.subr.bf16.mxu0 0
        %3344 = vmatpush1.bf16.msra.mxu0 0
        %3345 = vmatprep.subr.bf16.mxu0 0
        %3346 = vmatpush1.bf16.msra.mxu0 0
        %3347 = vmatprep.subr.bf16.mxu0 0
        %3348 = vmatpush1.bf16.msra.mxu0 0
        %3349 = vmatprep.subr.bf16.mxu0 0
        %3350 = vmatpush1.bf16.msra.mxu0 0
        %3351 = vmatprep.subr.bf16.mxu0 0
        %3352 = vmatpush1.bf16.msra.mxu0 0
        %3353 = vmatprep.mubr.bf16.mxu0 0
        %3354 = vmatmul.mubr.bf16.gmra.mrb[0].mxu0 %v1109
        %v3355 = vpop.f32.mrb[0].mxu0
        %v3356 = vadd.f32 0.0, %v3355
        %v3357 = vpop.f32.mrb[0].mxu0
        %v3358 = vpop.f32.mrb[0].mxu0
        %v3359 = vadd.f32 0.0, %v3358
        %v3360 = vpop.f32.mrb[0].mxu0
        %3361 = vmatprep.mubr.bf16.mxu0 0
        %3362 = vmatmul.mubr.bf16.gmra.mrb[0].mxu0 %v1112
        %v3363 = vpop.f32.mrb[0].mxu0
        %v3364 = vadd.f32 0.0, %v3363
        %v3365 = vpop.f32.mrb[0].mxu0
        %v3366 = vpop.f32.mrb[0].mxu0
        %v3367 = vadd.f32 0.0, %v3366
        %v3368 = vpop.f32.mrb[0].mxu0
        %3369 = vmatprep.mubr.bf16.mxu0 0
        %3370 = vmatmul.mubr.bf16.gmra.mrb[0].mxu0 %v1115
        %v3371 = vpop.f32.mrb[0].mxu0
        %v3372 = vadd.f32 0.0, %v3371
        %v3373 = vpop.f32.mrb[0].mxu0
        %v3374 = vpop.f32.mrb[0].mxu0
        %v3375 = vadd.f32 0.0, %v3374
        %v3376 = vpop.f32.mrb[0].mxu0
        %3377 = vmatprep.mubr.bf16.mxu0 0
        %3378 = vmatmul.mubr.bf16.gmra.mrb[0].mxu0 %v1118
        %v3379 = vpop.f32.mrb[0].mxu0
        %v3380 = vadd.f32 0.0, %v3379
        %v3381 = vpop.f32.mrb[0].mxu0
        %v3382 = vpop.f32.mrb[0].mxu0
        %v3383 = vadd.f32 0.0, %v3382
        %v3384 = vpop.f32.mrb[0].mxu0
        %3385 = vdwg.mxu0
        %v3386 = vadd.f32 %v3313, %v3356
        %v3387 = vadd.f32 %v3314, %v3359
        %v3388 = vadd.f32 %v3315, %v3364
        %v3389 = vadd.f32 %v3316, %v3367
        %v3390 = vadd.f32 %v3317, %v3372
        %v3391 = vadd.f32 %v3318, %v3375
        %v3392 = vadd.f32 %v3319, %v3380
        %v3393 = vadd.f32 %v3320, %v3383
        %3394 = vmatprep.subr.bf16.mxu0 0
        %3395 = vmatpush1.bf16.msra.mxu0 %v725
        %3396 = vmatprep.subr.bf16.mxu0 0
        %3397 = vmatpush1.bf16.msra.mxu0 0
        %3398 = vmatprep.subr.bf16.mxu0 0
        %3399 = vmatpush1.bf16.msra.mxu0 0
        %3400 = vmatprep.subr.bf16.mxu0 0
        %3401 = vmatpush1.bf16.msra.mxu0 0
        %3402 = vmatprep.subr.bf16.mxu0 0
        %3403 = vmatpush1.bf16.msra.mxu0 0
        %3404 = vmatprep.subr.bf16.mxu0 0
        %3405 = vmatpush1.bf16.msra.mxu0 0
        %3406 = vmatprep.subr.bf16.mxu0 0
        %3407 = vmatpush1.bf16.msra.mxu0 0
        %3408 = vmatprep.subr.bf16.mxu0 0
        %3409 = vmatpush1.bf16.msra.mxu0 0
        %3410 = vmatprep.subr.bf16.mxu0 0
        %3411 = vmatpush1.bf16.msra.mxu0 0
        %3412 = vmatprep.subr.bf16.mxu0 0
        %3413 = vmatpush1.bf16.msra.mxu0 0
        %3414 = vmatprep.subr.bf16.mxu0 0
        %3415 = vmatpush1.bf16.msra.mxu0 0
        %3416 = vmatprep.subr.bf16.mxu0 0
        %3417 = vmatpush1.bf16.msra.mxu0 0
        %3418 = vmatprep.subr.bf16.mxu0 0
        %3419 = vmatpush1.bf16.msra.mxu0 0
        %3420 = vmatprep.subr.bf16.mxu0 0
        %3421 = vmatpush1.bf16.msra.mxu0 0
        %3422 = vmatprep.subr.bf16.mxu0 0
        %3423 = vmatpush1.bf16.msra.mxu0 0
        %3424 = vmatprep.subr.bf16.mxu0 0
        %3425 = vmatpush1.bf16.msra.mxu0 0
        %3426 = vmatprep.mubr.bf16.mxu0 0
        %3427 = vmatmul.mubr.bf16.gmra.mrb[0].mxu0 %v1283
        %v3428 = vpop.f32.mrb[0].mxu0
        %v3429 = vadd.f32 0.0, %v3428
        %v3430 = vpop.f32.mrb[0].mxu0
        %v3431 = vpop.f32.mrb[0].mxu0
        %v3432 = vadd.f32 0.0, %v3431
        %v3433 = vpop.f32.mrb[0].mxu0
        %3434 = vmatprep.mubr.bf16.mxu0 0
        %3435 = vmatmul.mubr.bf16.gmra.mrb[0].mxu0 %v1286
        %v3436 = vpop.f32.mrb[0].mxu0
        %v3437 = vadd.f32 0.0, %v3436
        %v3438 = vpop.f32.mrb[0].mxu0
        %v3439 = vpop.f32.mrb[0].mxu0
        %v3440 = vadd.f32 0.0, %v3439
        %v3441 = vpop.f32.mrb[0].mxu0
        %3442 = vmatprep.mubr.bf16.mxu0 0
        %3443 = vmatmul.mubr.bf16.gmra.mrb[0].mxu0 %v1289
        %v3444 = vpop.f32.mrb[0].mxu0
        %v3445 = vadd.f32 0.0, %v3444
        %v3446 = vpop.f32.mrb[0].mxu0
        %v3447 = vpop.f32.mrb[0].mxu0
        %v3448 = vadd.f32 0.0, %v3447
        %v3449 = vpop.f32.mrb[0].mxu0
        %3450 = vmatprep.mubr.bf16.mxu0 0
        %3451 = vmatmul.mubr.bf16.gmra.mrb[0].mxu0 %v1292
        %v3452 = vpop.f32.mrb[0].mxu0
        %v3453 = vadd.f32 0.0, %v3452
        %v3454 = vpop.f32.mrb[0].mxu0
        %v3455 = vpop.f32.mrb[0].mxu0
        %v3456 = vadd.f32 0.0, %v3455
        %v3457 = vpop.f32.mrb[0].mxu0
        %3458 = vdwg.mxu0
        %v3459 = vadd.f32 %v3386, %v3429
        %v3460 = vadd.f32 %v3387, %v3432
        %v3461 = vadd.f32 %v3388, %v3437
        %v3462 = vadd.f32 %v3389, %v3440
        %v3463 = vadd.f32 %v3390, %v3445
        %v3464 = vadd.f32 %v3391, %v3448
        %v3465 = vadd.f32 %v3392, %v3453
        %v3466 = vadd.f32 %v3393, %v3456
        %3467 = vmatprep.subr.bf16.mxu0 0
        %3468 = vmatpush1.bf16.msra.mxu0 %v899
        %3469 = vmatprep.subr.bf16.mxu0 0
        %3470 = vmatpush1.bf16.msra.mxu0 0
        %3471 = vmatprep.subr.bf16.mxu0 0
        %3472 = vmatpush1.bf16.msra.mxu0 0
        %3473 = vmatprep.subr.bf16.mxu0 0
        %3474 = vmatpush1.bf16.msra.mxu0 0
        %3475 = vmatprep.subr.bf16.mxu0 0
        %3476 = vmatpush1.bf16.msra.mxu0 0
        %3477 = vmatprep.subr.bf16.mxu0 0
        %3478 = vmatpush1.bf16.msra.mxu0 0
        %3479 = vmatprep.subr.bf16.mxu0 0
        %3480 = vmatpush1.bf16.msra.mxu0 0
        %3481 = vmatprep.subr.bf16.mxu0 0
        %3482 = vmatpush1.bf16.msra.mxu0 0
        %3483 = vmatprep.subr.bf16.mxu0 0
        %3484 = vmatpush1.bf16.msra.mxu0 0
        %3485 = vmatprep.subr.bf16.mxu0 0
        %3486 = vmatpush1.bf16.msra.mxu0 0
        %3487 = vmatprep.subr.bf16.mxu0 0
        %3488 = vmatpush1.bf16.msra.mxu0 0
        %3489 = vmatprep.subr.bf16.mxu0 0
        %3490 = vmatpush1.bf16.msra.mxu0 0
        %3491 = vmatprep.subr.bf16.mxu0 0
        %3492 = vmatpush1.bf16.msra.mxu0 0
        %3493 = vmatprep.subr.bf16.mxu0 0
        %3494 = vmatpush1.bf16.msra.mxu0 0
        %3495 = vmatprep.subr.bf16.mxu0 0
        %3496 = vmatpush1.bf16.msra.mxu0 0
        %3497 = vmatprep.subr.bf16.mxu0 0
        %3498 = vmatpush1.bf16.msra.mxu0 0
        %3499 = vmatprep.mubr.bf16.mxu0 0
        %3500 = vmatmul.mubr.bf16.gmra.mrb[0].mxu0 %v2215
        %v3501 = vpop.f32.mrb[0].mxu0
        %v3502 = vadd.f32 0.0, %v3501
        %v3503 = vpop.f32.mrb[0].mxu0
        %v3504 = vpop.f32.mrb[0].mxu0
        %v3505 = vadd.f32 0.0, %v3504
        %v3506 = vpop.f32.mrb[0].mxu0
        %3507 = vmatprep.mubr.bf16.mxu0 0
        %3508 = vmatmul.mubr.bf16.gmra.mrb[0].mxu0 %v2218
        %v3509 = vpop.f32.mrb[0].mxu0
        %v3510 = vadd.f32 0.0, %v3509
        %v3511 = vpop.f32.mrb[0].mxu0
        %v3512 = vpop.f32.mrb[0].mxu0
        %v3513 = vadd.f32 0.0, %v3512
        %v3514 = vpop.f32.mrb[0].mxu0
        %3515 = vmatprep.mubr.bf16.mxu0 0
        %3516 = vmatmul.mubr.bf16.gmra.mrb[0].mxu0 %v2221
        %v3517 = vpop.f32.mrb[0].mxu0
        %v3518 = vadd.f32 0.0, %v3517
        %v3519 = vpop.f32.mrb[0].mxu0
        %v3520 = vpop.f32.mrb[0].mxu0
        %v3521 = vadd.f32 0.0, %v3520
        %v3522 = vpop.f32.mrb[0].mxu0
        %3523 = vmatprep.mubr.bf16.mxu0 0
        %3524 = vmatmul.mubr.bf16.gmra.mrb[0].mxu0 %v2224
        %v3525 = vpop.f32.mrb[0].mxu0
        %v3526 = vadd.f32 0.0, %v3525
        %v3527 = vpop.f32.mrb[0].mxu0
        %v3528 = vpop.f32.mrb[0].mxu0
        %v3529 = vadd.f32 0.0, %v3528
        %v3530 = vpop.f32.mrb[0].mxu0
        %3531 = vdwg.mxu0
        %v3532 = vadd.f32 %v3459, %v3502
        %v3533 = vadd.f32 %v3460, %v3505
        %v3534 = vadd.f32 %v3461, %v3510
        %v3535 = vadd.f32 %v3462, %v3513
        %v3536 = vadd.f32 %v3463, %v3518
        %v3537 = vadd.f32 %v3464, %v3521
        %v3538 = vadd.f32 %v3465, %v3526
        %v3539 = vadd.f32 %v3466, %v3529
        %3540 = vmatprep.subr.bf16.mxu0 0
        %3541 = vmatpush1.bf16.msra.mxu0 %v1010
        %3542 = vmatprep.subr.bf16.mxu0 0
        %3543 = vmatpush1.bf16.msra.mxu0 0
        %3544 = vmatprep.subr.bf16.mxu0 0
        %3545 = vmatpush1.bf16.msra.mxu0 0
        %3546 = vmatprep.subr.bf16.mxu0 0
        %3547 = vmatpush1.bf16.msra.mxu0 0
        %3548 = vmatprep.subr.bf16.mxu0 0
        %3549 = vmatpush1.bf16.msra.mxu0 0
        %3550 = vmatprep.subr.bf16.mxu0 0
        %3551 = vmatpush1.bf16.msra.mxu0 0
        %3552 = vmatprep.subr.bf16.mxu0 0
        %3553 = vmatpush1.bf16.msra.mxu0 0
        %3554 = vmatprep.subr.bf16.mxu0 0
        %3555 = vmatpush1.bf16.msra.mxu0 0
        %3556 = vmatprep.subr.bf16.mxu0 0
        %3557 = vmatpush1.bf16.msra.mxu0 0
        %3558 = vmatprep.subr.bf16.mxu0 0
        %3559 = vmatpush1.bf16.msra.mxu0 0
        %3560 = vmatprep.subr.bf16.mxu0 0
        %3561 = vmatpush1.bf16.msra.mxu0 0
        %3562 = vmatprep.subr.bf16.mxu0 0
        %3563 = vmatpush1.bf16.msra.mxu0 0
        %3564 = vmatprep.subr.bf16.mxu0 0
        %3565 = vmatpush1.bf16.msra.mxu0 0
        %3566 = vmatprep.subr.bf16.mxu0 0
        %3567 = vmatpush1.bf16.msra.mxu0 0
        %3568 = vmatprep.subr.bf16.mxu0 0
        %3569 = vmatpush1.bf16.msra.mxu0 0
        %3570 = vmatprep.subr.bf16.mxu0 0
        %3571 = vmatpush1.bf16.msra.mxu0 0
        %3572 = vmatprep.mubr.bf16.mxu0 0
        %3573 = vmatmul.mubr.bf16.gmra.mrb[0].mxu0 %v2857
        %v3574 = vpop.f32.mrb[0].mxu0
        %v3575 = vadd.f32 0.0, %v3574
        %v3576 = vpop.f32.mrb[0].mxu0
        %v3577 = vpop.f32.mrb[0].mxu0
        %v3578 = vadd.f32 0.0, %v3577
        %v3579 = vpop.f32.mrb[0].mxu0
        %3580 = vmatprep.mubr.bf16.mxu0 0
        %3581 = vmatmul.mubr.bf16.gmra.mrb[0].mxu0 %v2860
        %v3582 = vpop.f32.mrb[0].mxu0
        %v3583 = vadd.f32 0.0, %v3582
        %v3584 = vpop.f32.mrb[0].mxu0
        %v3585 = vpop.f32.mrb[0].mxu0
        %v3586 = vadd.f32 0.0, %v3585
        %v3587 = vpop.f32.mrb[0].mxu0
        %3588 = vmatprep.mubr.bf16.mxu0 0
        %3589 = vmatmul.mubr.bf16.gmra.mrb[0].mxu0 %v2863
        %v3590 = vpop.f32.mrb[0].mxu0
        %v3591 = vadd.f32 0.0, %v3590
        %v3592 = vpop.f32.mrb[0].mxu0
        %v3593 = vpop.f32.mrb[0].mxu0
        %v3594 = vadd.f32 0.0, %v3593
        %v3595 = vpop.f32.mrb[0].mxu0
        %3596 = vmatprep.mubr.bf16.mxu0 0
        %3597 = vmatmul.mubr.bf16.gmra.mrb[0].mxu0 %v2866
        %v3598 = vpop.f32.mrb[0].mxu0
        %v3599 = vadd.f32 0.0, %v3598
        %v3600 = vpop.f32.mrb[0].mxu0
        %v3601 = vpop.f32.mrb[0].mxu0
        %v3602 = vadd.f32 0.0, %v3601
        %v3603 = vpop.f32.mrb[0].mxu0
        %3604 = vdwg.mxu0
        %v3605 = vadd.f32 %v3532, %v3575
        %v3606 = vadd.f32 %v3533, %v3578
        %v3607 = vadd.f32 %v3534, %v3583
        %v3608 = vadd.f32 %v3535, %v3586
        %v3609 = vadd.f32 %v3536, %v3591
        %v3610 = vadd.f32 %v3537, %v3594
        %v3611 = vadd.f32 %v3538, %v3599
        %v3612 = vadd.f32 %v3539, %v3602
        %3613 = vmatprep.subr.bf16.mxu0 0
        %3614 = vmatpush1.bf16.msra.mxu0 %v1121
        %3615 = vmatprep.subr.bf16.mxu0 0
        %3616 = vmatpush1.bf16.msra.mxu0 0
        %3617 = vmatprep.subr.bf16.mxu0 0
        %3618 = vmatpush1.bf16.msra.mxu0 0
        %3619 = vmatprep.subr.bf16.mxu0 0
        %3620 = vmatpush1.bf16.msra.mxu0 0
        %3621 = vmatprep.subr.bf16.mxu0 0
        %3622 = vmatpush1.bf16.msra.mxu0 0
        %3623 = vmatprep.subr.bf16.mxu0 0
        %3624 = vmatpush1.bf16.msra.mxu0 0
        %3625 = vmatprep.subr.bf16.mxu0 0
        %3626 = vmatpush1.bf16.msra.mxu0 0
        %3627 = vmatprep.subr.bf16.mxu0 0
        %3628 = vmatpush1.bf16.msra.mxu0 0
        %3629 = vmatprep.subr.bf16.mxu0 0
        %3630 = vmatpush1.bf16.msra.mxu0 0
        %3631 = vmatprep.subr.bf16.mxu0 0
        %3632 = vmatpush1.bf16.msra.mxu0 0
        %3633 = vmatprep.subr.bf16.mxu0 0
        %3634 = vmatpush1.bf16.msra.mxu0 0
        %3635 = vmatprep.subr.bf16.mxu0 0
        %3636 = vmatpush1.bf16.msra.mxu0 0
        %3637 = vmatprep.subr.bf16.mxu0 0
        %3638 = vmatpush1.bf16.msra.mxu0 0
        %3639 = vmatprep.subr.bf16.mxu0 0
        %3640 = vmatpush1.bf16.msra.mxu0 0
        %3641 = vmatprep.subr.bf16.mxu0 0
        %3642 = vmatpush1.bf16.msra.mxu0 0
        %3643 = vmatprep.subr.bf16.mxu0 0
        %3644 = vmatpush1.bf16.msra.mxu0 0
        %3645 = vmatprep.mubr.bf16.mxu0 0
        %3646 = vmatmul.mubr.bf16.gmra.mrb[0].mxu0 %v3026
        %v3647 = vpop.f32.mrb[0].mxu0
        %v3648 = vadd.f32 0.0, %v3647
        %v3649 = vpop.f32.mrb[0].mxu0
        %v3650 = vpop.f32.mrb[0].mxu0
        %v3651 = vadd.f32 0.0, %v3650
        %v3652 = vpop.f32.mrb[0].mxu0
        %3653 = vmatprep.mubr.bf16.mxu0 0
        %3654 = vmatmul.mubr.bf16.gmra.mrb[0].mxu0 %v3029
        %v3655 = vpop.f32.mrb[0].mxu0
        %v3656 = vadd.f32 0.0, %v3655
        %v3657 = vpop.f32.mrb[0].mxu0
        %v3658 = vpop.f32.mrb[0].mxu0
        %v3659 = vadd.f32 0.0, %v3658
        %v3660 = vpop.f32.mrb[0].mxu0
        %3661 = vmatprep.mubr.bf16.mxu0 0
        %3662 = vmatmul.mubr.bf16.gmra.mrb[0].mxu0 %v3032
        %v3663 = vpop.f32.mrb[0].mxu0
        %v3664 = vadd.f32 0.0, %v3663
        %v3665 = vpop.f32.mrb[0].mxu0
        %v3666 = vpop.f32.mrb[0].mxu0
        %v3667 = vadd.f32 0.0, %v3666
        %v3668 = vpop.f32.mrb[0].mxu0
        %3669 = vmatprep.mubr.bf16.mxu0 0
        %3670 = vmatmul.mubr.bf16.gmra.mrb[0].mxu0 %v3035
        %v3671 = vpop.f32.mrb[0].mxu0
        %v3672 = vadd.f32 0.0, %v3671
        %v3673 = vpop.f32.mrb[0].mxu0
        %v3674 = vpop.f32.mrb[0].mxu0
        %v3675 = vadd.f32 0.0, %v3674
        %v3676 = vpop.f32.mrb[0].mxu0
        %3677 = vdwg.mxu0
        %v3678 = vadd.f32 %v3605, %v3648
        %v3679 = vadd.f32 %v3606, %v3651
        %v3680 = vadd.f32 %v3607, %v3656
        %v3681 = vadd.f32 %v3608, %v3659
        %v3682 = vadd.f32 %v3609, %v3664
        %v3683 = vadd.f32 %v3610, %v3667
        %v3684 = vadd.f32 %v3611, %v3672
        %v3685 = vadd.f32 %v3612, %v3675
        %v3686 = vld [vmem:[%s2835] sm:$0xf]
        %v3687 = vld [vmem:[%s2835 + $0x4] sm:$0x1]
        %v3688 = vld [vmem:[%s2835 + $0x8] sm:$0xf]
        %v3689 = vld [vmem:[%s2835 + $0xc] sm:$0x1]
        %v3690 = vld [vmem:[%s2835 + $0x10] sm:$0xf]
        %v3691 = vld [vmem:[%s2835 + $0x14] sm:$0x1]
        %v3692 = vld [vmem:[%s2835 + $0x18] sm:$0xf]
        %v3693 = vld [vmem:[%s2835 + $0x1c] sm:$0x1]
        %v3694 = vld [vmem:[%s2835 + $0x20] sm:$0xf]
        %v3695 = vld [vmem:[%s2835 + $0x24] sm:$0x1]
        %v3696 = vld [vmem:[%s2835 + $0x28] sm:$0xf]
        %v3697 = vld [vmem:[%s2835 + $0x2c] sm:$0x1]
        %v3698 = vld [vmem:[%s2835 + $0x30] sm:$0xf]
        %v3699 = vld [vmem:[%s2835 + $0x34] sm:$0x1]
        %v3700 = vld [vmem:[%s2835 + $0x38] sm:$0xf]
        %v3701 = vld [vmem:[%s2835 + $0x3c] sm:$0x1]
        %v3702 = vunpack.c.l.bf16 %v3686
        %v3703 = vunpack.c.l.bf16 %v3687
        %v3704 = vunpack.c.l.bf16 %v3688
        %v3705 = vunpack.c.l.bf16 %v3689
        %v3706 = vunpack.c.l.bf16 %v3690
        %v3707 = vunpack.c.l.bf16 %v3691
        %v3708 = vunpack.c.l.bf16 %v3692
        %v3709 = vunpack.c.l.bf16 %v3693
        %v3710 = vunpack.c.l.bf16 %v3694
        %v3711 = vunpack.c.l.bf16 %v3695
        %v3712 = vunpack.c.l.bf16 %v3696
        %v3713 = vunpack.c.l.bf16 %v3697
        %v3714 = vunpack.c.l.bf16 %v3698
        %v3715 = vunpack.c.l.bf16 %v3699
        %v3716 = vunpack.c.l.bf16 %v3700
        %v3717 = vunpack.c.l.bf16 %v3701
        %v3734 = vrot.slane %v3702, 1
        %v3735 = vrot.slane %v3703, 1
        %v3736 = vsel %vm451, %v3734, %v3735
        %v3737 = vrot.slane %v3704, 1
        %v3738 = vrot.slane %v3705, 1
        %v3739 = vsel %vm451, %v3737, %v3738
        %v3740 = vrot.slane %v3706, 1
        %v3741 = vrot.slane %v3707, 1
        %v3742 = vsel %vm451, %v3740, %v3741
        %v3743 = vrot.slane %v3708, 1
        %v3744 = vrot.slane %v3709, 1
        %v3745 = vsel %vm451, %v3743, %v3744
        %v3746 = vrot.slane %v3710, 1
        %v3747 = vrot.slane %v3711, 1
        %v3748 = vsel %vm451, %v3746, %v3747
        %v3749 = vrot.slane %v3712, 1
        %v3750 = vrot.slane %v3713, 1
        %v3751 = vsel %vm451, %v3749, %v3750
        %v3752 = vrot.slane %v3714, 1
        %v3753 = vrot.slane %v3715, 1
        %v3754 = vsel %vm451, %v3752, %v3753
        %v3755 = vrot.slane %v3716, 1
        %v3756 = vrot.slane %v3717, 1
        %v3757 = vsel %vm451, %v3755, %v3756
        %v3766 = vpack.c.bf16 %v3739, %v3736
        %v3767 = vpack.c.bf16 %v3745, %v3742
        %v3768 = vpack.c.bf16 %v3751, %v3748
        %v3769 = vpack.c.bf16 %v3757, %v3754
        %v3771 = vsel %vm241, %v3766, 0
        %v3774 = vsel %vm241, %v3767, 0
        %v3777 = vsel %vm241, %v3768, 0
        %v3780 = vsel %vm241, %v3769, 0
        %3782 = vmatprep.subr.bf16.mxu0 0
        %3783 = vmatpush1.bf16.msra.mxu0 %v1295
        %3784 = vmatprep.subr.bf16.mxu0 0
        %3785 = vmatpush1.bf16.msra.mxu0 0
        %3786 = vmatprep.subr.bf16.mxu0 0
        %3787 = vmatpush1.bf16.msra.mxu0 0
        %3788 = vmatprep.subr.bf16.mxu0 0
        %3789 = vmatpush1.bf16.msra.mxu0 0
        %3790 = vmatprep.subr.bf16.mxu0 0
        %3791 = vmatpush1.bf16.msra.mxu0 0
        %3792 = vmatprep.subr.bf16.mxu0 0
        %3793 = vmatpush1.bf16.msra.mxu0 0
        %3794 = vmatprep.subr.bf16.mxu0 0
        %3795 = vmatpush1.bf16.msra.mxu0 0
        %3796 = vmatprep.subr.bf16.mxu0 0
        %3797 = vmatpush1.bf16.msra.mxu0 0
        %3798 = vmatprep.subr.bf16.mxu0 0
        %3799 = vmatpush1.bf16.msra.mxu0 0
        %3800 = vmatprep.subr.bf16.mxu0 0
        %3801 = vmatpush1.bf16.msra.mxu0 0
        %3802 = vmatprep.subr.bf16.mxu0 0
        %3803 = vmatpush1.bf16.msra.mxu0 0
        %3804 = vmatprep.subr.bf16.mxu0 0
        %3805 = vmatpush1.bf16.msra.mxu0 0
        %3806 = vmatprep.subr.bf16.mxu0 0
        %3807 = vmatpush1.bf16.msra.mxu0 0
        %3808 = vmatprep.subr.bf16.mxu0 0
        %3809 = vmatpush1.bf16.msra.mxu0 0
        %3810 = vmatprep.subr.bf16.mxu0 0
        %3811 = vmatpush1.bf16.msra.mxu0 0
        %3812 = vmatprep.subr.bf16.mxu0 0
        %3813 = vmatpush1.bf16.msra.mxu0 0
        %3814 = vmatprep.mubr.bf16.mxu0 0
        %3815 = vmatmul.mubr.bf16.gmra.mrb[0].mxu0 %v3771
        %v3816 = vpop.f32.mrb[0].mxu0
        %v3817 = vadd.f32 0.0, %v3816
        %v3818 = vpop.f32.mrb[0].mxu0
        %v3819 = vpop.f32.mrb[0].mxu0
        %v3820 = vadd.f32 0.0, %v3819
        %v3821 = vpop.f32.mrb[0].mxu0
        %3822 = vmatprep.mubr.bf16.mxu0 0
        %3823 = vmatmul.mubr.bf16.gmra.mrb[0].mxu0 %v3774
        %v3824 = vpop.f32.mrb[0].mxu0
        %v3825 = vadd.f32 0.0, %v3824
        %v3826 = vpop.f32.mrb[0].mxu0
        %v3827 = vpop.f32.mrb[0].mxu0
        %v3828 = vadd.f32 0.0, %v3827
        %v3829 = vpop.f32.mrb[0].mxu0
        %3830 = vmatprep.mubr.bf16.mxu0 0
        %3831 = vmatmul.mubr.bf16.gmra.mrb[0].mxu0 %v3777
        %v3832 = vpop.f32.mrb[0].mxu0
        %v3833 = vadd.f32 0.0, %v3832
        %v3834 = vpop.f32.mrb[0].mxu0
        %v3835 = vpop.f32.mrb[0].mxu0
        %v3836 = vadd.f32 0.0, %v3835
        %v3837 = vpop.f32.mrb[0].mxu0
        %3838 = vmatprep.mubr.bf16.mxu0 0
        %3839 = vmatmul.mubr.bf16.gmra.mrb[0].mxu0 %v3780
        %v3840 = vpop.f32.mrb[0].mxu0
        %v3841 = vadd.f32 0.0, %v3840
        %v3842 = vpop.f32.mrb[0].mxu0
        %v3843 = vpop.f32.mrb[0].mxu0
        %v3844 = vadd.f32 0.0, %v3843
        %v3845 = vpop.f32.mrb[0].mxu0
        %3846 = vdwg.mxu0
        %v3847 = vadd.f32 %v3678, %v3817
        %v3848 = vadd.f32 %v3679, %v3820
        %v3849 = vadd.f32 %v3680, %v3825
        %v3850 = vadd.f32 %v3681, %v3828
        %v3851 = vadd.f32 %v3682, %v3833
        %v3852 = vadd.f32 %v3683, %v3836
        %v3853 = vadd.f32 %v3684, %v3841
        %v3854 = vadd.f32 %v3685, %v3844
        %v3855 = vadd.f32 %v3110, %v3847
        %v3856 = vadd.f32 %v3111, %v3848
        %v3857 = vadd.f32 %v3112, %v3849
        %v3858 = vadd.f32 %v3113, %v3850
        %v3859 = vadd.f32 %v3114, %v3851
        %v3860 = vadd.f32 %v3115, %v3852
        %v3861 = vadd.f32 %v3116, %v3853
        %v3862 = vadd.f32 %v3117, %v3854
        %v3863 = vmul.f32 %v3855, 0.25
        %v3864 = vmul.f32 %v3856, 0.25
        %v3865 = vmul.f32 %v3857, 0.25
        %v3866 = vmul.f32 %v3858, 0.25
        %v3867 = vmul.f32 %v3859, 0.25
        %v3868 = vmul.f32 %v3860, 0.25
        %v3869 = vmul.f32 %v3861, 0.25
        %v3870 = vmul.f32 %v3862, 0.25
        %v3871 = vld [vmem:[%s2] sm:$0x1]
        %v3873 = vlaneseq
        %v3874 = vshrl.u32 %v3873, 7
        %v3875 = vsub.s32 0, %v3874
        %v3876 = vrot.slane %v3871, %v3875
        %v3878 = vmul.f32 %v3863, %v3876
        %v3879 = vmul.f32 %v3864, %v3876
        %v3880 = vmul.f32 %v3865, %v3876
        %v3881 = vmul.f32 %v3866, %v3876
        %v3882 = vmul.f32 %v3867, %v3876
        %v3883 = vmul.f32 %v3868, %v3876
        %v3884 = vmul.f32 %v3869, %v3876
        %v3885 = vmul.f32 %v3870, %v3876
        %v3886 = vld [vmem:[%s3] sm:$0x1]
        %v3888 = vlaneseq
        %v3889 = vshrl.u32 %v3888, 7
        %v3890 = vsub.s32 0, %v3889
        %v3891 = vrot.slane %v3886, %v3890
        %v3893 = vadd.f32 %v3878, %v3891
        %v3894 = vadd.f32 %v3879, %v3891
        %v3895 = vadd.f32 %v3880, %v3891
        %v3896 = vadd.f32 %v3881, %v3891
        %v3897 = vadd.f32 %v3882, %v3891
        %v3898 = vadd.f32 %v3883, %v3891
        %v3899 = vadd.f32 %v3884, %v3891
        %v3900 = vadd.f32 %v3885, %v3891
        %vm3901 = vcmp.gt.f32.partialorder %v3893, 0.0
        %vm3902 = vcmp.gt.f32.partialorder %v3894, 0.0
        %vm3903 = vcmp.gt.f32.partialorder %v3895, 0.0
        %vm3904 = vcmp.gt.f32.partialorder %v3896, 0.0
        %vm3905 = vcmp.gt.f32.partialorder %v3897, 0.0
        %vm3906 = vcmp.gt.f32.partialorder %v3898, 0.0
        %vm3907 = vcmp.gt.f32.partialorder %v3899, 0.0
        %vm3908 = vcmp.gt.f32.partialorder %v3900, 0.0
        %v3909 = vmul.f32 %v3893, 1.442695
        %v3910 = vpow.pop %v3909
        %v3911 = vmul.f32 %v3894, 1.442695
        %v3912 = vpow.pop %v3911
        %v3913 = vmul.f32 %v3895, 1.442695
        %v3914 = vpow.pop %v3913
        %v3915 = vmul.f32 %v3896, 1.442695
        %v3916 = vpow.pop %v3915
        %v3917 = vmul.f32 %v3897, 1.442695
        %v3918 = vpow.pop %v3917
        %v3919 = vmul.f32 %v3898, 1.442695
        %v3920 = vpow.pop %v3919
        %v3921 = vmul.f32 %v3899, 1.442695
        %v3922 = vpow.pop %v3921
        %v3923 = vmul.f32 %v3900, 1.442695
        %v3924 = vpow.pop %v3923
        %v3925 = vsub.f32 %v3910, 1.0
        %v3926 = vsub.f32 %v3912, 1.0
        %v3927 = vsub.f32 %v3914, 1.0
        %v3928 = vsub.f32 %v3916, 1.0
        %v3929 = vsub.f32 %v3918, 1.0
        %v3930 = vsub.f32 %v3920, 1.0
        %v3931 = vsub.f32 %v3922, 1.0
        %v3932 = vsub.f32 %v3924, 1.0
        %v3933 = vsel %vm3901, %v3893, %v3925
        %v3934 = vsel %vm3902, %v3894, %v3926
        %v3935 = vsel %vm3903, %v3895, %v3927
        %v3936 = vsel %vm3904, %v3896, %v3928
        %v3937 = vsel %vm3905, %v3897, %v3929
        %v3938 = vsel %vm3906, %v3898, %v3930
        %v3939 = vsel %vm3907, %v3899, %v3931
        %v3940 = vsel %vm3908, %v3900, %v3932
        %3941 = vst [vmem:[%s190] sm:$0xff] %v3933
        %3942 = vst [vmem:[%s190 + $0x8] sm:$0xff] %v3934
        %3943 = vst [vmem:[%s190 + $0x10] sm:$0xff] %v3935
        %3944 = vst [vmem:[%s190 + $0x18] sm:$0xff] %v3936
        %3945 = vst [vmem:[%s190 + $0x20] sm:$0xff] %v3937
        %3946 = vst [vmem:[%s190 + $0x28] sm:$0xff] %v3938
        %3947 = vst [vmem:[%s190 + $0x30] sm:$0xff] %v3939
        %3948 = vst [vmem:[%s190 + $0x38] sm:$0xff] %v3940
        %s3949 = sand.u32 %s115, 1
        %s3950 = scalar_lea.sflag [#allocation3], %s3949
        %s3951 = sand.u32 %s115, 1
        %s3952 = smul.addr %s3951, 64
        %s3953 = scalar_lea.vmem [#allocation2], %s3952
        // Predicated region
        $region37: #{tpu_custom_call.1} parent=35 // pred_check
          %p3954 = pneg %p125
        $region38: #{tpu_custom_call.1} parent=35 // pred_check_branch
          %3956 = sbr.rel (%p3954) target = $region40
        $region39: #{tpu_custom_call.1} parent=35 // pred_region
          %s3958 = ssub.s32 1024, 1024
          %3959 = vsyncadd %s3950, %s3958
          %s3960 = smul.addr %s18, 8
          %s3961 = smul.addr %s3960, 128
          %s3962 = scalar_lea.hbm %s4, %s3961
          %s3963 = sshll.u32 %s3953, 4
          %s3964 = int_to_ptr.vmem [resolvable:$true] %s3963
          %3969 = dma.vmem_to_hbm [thread:$0]  %s3964, 1024, %s3962, %s3950, 128, 128, 8
        $region40: #{tpu_custom_call.1} parent=35 // pred_fallthru
          _
      $region36: #{tpu_custom_call.1} parent=5 // pred_fallthru
        _
      %p3970 = scmp.le.s32.totalorder 2, %s13
      // Predicated region
      $region41: #{tpu_custom_call.1} parent=5 // pred_check
        %p3971 = pneg %p3970
      $region42: #{tpu_custom_call.1} parent=5 // pred_check_branch
        %3973 = sbr.rel (%p3971) target = $region44
      $region43: #{tpu_custom_call.1} parent=5 // pred_region
        %s3974 = ssub.s32 %s13, 2
        // Predicated region
        $region45: #{tpu_custom_call.1} parent=43 // pred_check
          %p3975 = pneg %p131
        $region46: #{tpu_custom_call.1} parent=43 // pred_check_branch
          %3977 = sbr.rel (%p3975) target = $region48
        $region47: #{tpu_custom_call.1} parent=43 // pred_region
          %s3978 = sand.u32 %s116, 1
          %s3979 = scalar_lea.sflag [#allocation3], %s3978
          %s3980 = sand.u32 %s116, 1
          %s3981 = smul.addr %s3980, 64
          %s3982 = scalar_lea.vmem [#allocation2], %s3981
          %3983 = dma.done %s3979, 1024
        $region48: #{tpu_custom_call.1} parent=43 // pred_fallthru
          _
      $region44: #{tpu_custom_call.1} parent=5 // pred_fallthru
        _
    $region6: #{tpu_custom_call.1} parent=1 // loop_footer
      %s17 = sadd.s32 1, %s13
    $region7: #{tpu_custom_call.1} parent=1 // loop_footer_branch
      %12 = sbr.rel target = $region3
    $region8: #{tpu_custom_call.1} parent=1 // loop_exit
      _
    %3984 = vsyncpa [#allocation3], 1
    %s3985 = scalar_lea.sflag [#allocation3], 1
    %3986 = vsyncpa %s3985, 1

</llo_original>
